<compile_context>
chip_gen: v7x
topology: tpu7x:2x2x1
jax: 0.10.0
libtpu: 0.0.40
codegen_flags: <defaults>
</compile_context>

<pallas_src>
import functools

import jax
import jax.numpy as jnp
from jax.experimental import pallas as pl
from jax.experimental.pallas import tpu as pltpu


# ----------------------------------------------------------------------------
# Pallas kernels
# ----------------------------------------------------------------------------

def _res_lstm_chunk_kernel(same_size, time_chunk, hidden_size,
                           x_ref, wx_ref, wh_ref, wc_ref, b_ref,
                           out_ref, hx_ref, cx_ref):
    """One grid step == `time_chunk` ResLSTMCell timesteps (statically unrolled).

    x_ref:          (Tc, Bb, I)  input slab for this chunk / batch block
    wx_ref:         (I, Ng)      fused input-projection weights (ifo|cell0|res)
    wh_ref:         (H, Ng)      fused hx weights              (ifo|whh |0)
    wc_ref:         (H, Ng)      fused cx weights              (ifo|0   |0)
    b_ref:          (1, Ng)      fused bias
    out_ref:        (Tc, Bb, H)  hidden-state outputs
    hx_ref/cx_ref:  (Bb, H)      recurrent state, persists across time chunks
    """
    H = hidden_size

    # DRNN initializes hidden to zeros when hidden is None: re-init at the
    # first time chunk of every batch block.
    @pl.when(pl.program_id(1) == 0)
    def _():
        hx_ref[...] = jnp.zeros_like(hx_ref)
        cx_ref[...] = jnp.zeros_like(cx_ref)

    wx = wx_ref[...]
    wh = wh_ref[...]
    wc = wc_ref[...]
    b = b_ref[...]
    hx = hx_ref[...]
    cx = cx_ref[...]

    for t in range(time_chunk):               # static unroll (Tc is small)
        x = x_ref[t]                          # (Bb, I)
        # Input projection: independent of (hx, cx) -> off the serial chain,
        # the scheduler overlaps it with the recurrent matmuls of step t-1.
        gx = jnp.dot(x, wx, preferred_element_type=jnp.float32) + b
        g = (gx
             + jnp.dot(hx, wh, preferred_element_type=jnp.float32)
             + jnp.dot(cx, wc, preferred_element_type=jnp.float32))

        ingate = jax.nn.sigmoid(g[:, :H])
        forgetgate = jax.nn.sigmoid(g[:, H:2 * H])
        outgate = jax.nn.sigmoid(g[:, 2 * H:3 * H])
        cellgate = jnp.tanh(g[:, 3 * H:4 * H])

        cy = forgetgate * cx + ingate * cellgate
        ry = jnp.tanh(cy)
        if same_size:                         # static (trace-time) branch
            hy = outgate * (ry + x)
        else:
            hy = outgate * (ry + g[:, 4 * H:5 * H])   # x @ weight_ir.T (fused)

        out_ref[t] = hy
        hx = hy
        cx = cy

    # Write recurrent state back once per chunk.
    hx_ref[...] = hx
    cx_ref[...] = cx


def _fuse_res_lstm_weights(p, same_size):
    """Pre-transpose + pre-concat ResLSTMCell weights into per-source matrices.

    Column layout of each matrix: [ifo gates (3H) | cellgate (H) | residual (H)?]
      x  @ Wx = x  @ [w_ii.T | 0      | w_ir.T?]
      hx @ Wh = hx @ [w_ih.T | w_hh.T | 0      ]
      cx @ Wc = cx @ [w_ic.T | 0      | 0      ]
    bias = [b_ii+b_ih+b_ic | b_hh | 0?]
    """
    I = p["weight_ii"].shape[1]
    H = p["weight_hh"].shape[0]
    zI = jnp.zeros((I, H), jnp.float32)
    zH = jnp.zeros((H, H), jnp.float32)

    wx_cols = [p["weight_ii"].T, zI]
    wh_cols = [p["weight_ih"].T, p["weight_hh"].T]
    wc_cols = [p["weight_ic"].T, zH]
    bias = jnp.concatenate(
        [p["bias_ii"] + p["bias_ih"] + p["bias_ic"], p["bias_hh"]])
    if not same_size:
        wx_cols.append(p["weight_ir"].T)
        wh_cols.append(zH)
        wc_cols.append(zH)
        bias = jnp.concatenate([bias, jnp.zeros((H,), jnp.float32)])

    Wx = jnp.concatenate(wx_cols, axis=1)   # (I, Ng)
    Wh = jnp.concatenate(wh_cols, axis=1)   # (H, Ng)
    Wc = jnp.concatenate(wc_cols, axis=1)   # (H, Ng)
    return Wx, Wh, Wc, bias.reshape(1, -1)


def res_lstm_layer(inputs, p, *, time_chunk=8):
    """ResLSTMLayer over a (T, B, I) sequence with zero initial state -> (T, B, H)."""
    T, B, I = inputs.shape
    H = p["weight_hh"].shape[0]
    same_size = (I == H)

    Wx, Wh, Wc, bias = _fuse_res_lstm_weights(p, same_size)
    Ng = Wx.shape[1]

    # Block the time axis; pad to a multiple of the chunk (extra steps only
    # pollute state *after* the real timesteps, so results are unaffected).
    Tc = min(T, time_chunk)
    Tp = pl.cdiv(T, Tc) * Tc
    if Tp != T:
        inputs = jnp.concatenate(
            [inputs, jnp.zeros((Tp - T, B, I), inputs.dtype)], axis=0)
    n_chunks = Tp // Tc

    # Batch split across a leading "parallel" axis (dual-TensorCore chips) when
    # the batch is large enough to keep >=8 sublanes per block.
    nb = 2 if (B % 16 == 0) else 1
    Bb = B // nb

    kernel = functools.partial(_res_lstm_chunk_kernel, same_size, Tc, H)
    cost = pl.CostEstimate(
        flops=2 * Tp * B * (I + 2 * H) * Ng,
        transcendentals=Tp * B * 5 * H,
        bytes_accessed=4 * ((I + 2 * H + 1) * Ng + Tp * B * (I + H)))

    out = pl.pallas_call(
        kernel,
        out_shape=jax.ShapeDtypeStruct((Tp, B, H), jnp.float32),
        grid=(nb, n_chunks),
        in_specs=[
            pl.BlockSpec((Tc, Bb, I), lambda b, c: (c, b, 0)),   # input slab
            pl.BlockSpec((I, Ng), lambda b, c: (0, 0)),          # Wx
            pl.BlockSpec((H, Ng), lambda b, c: (0, 0)),          # Wh
            pl.BlockSpec((H, Ng), lambda b, c: (0, 0)),          # Wc
            pl.BlockSpec((1, Ng), lambda b, c: (0, 0)),          # fused bias
        ],
        out_specs=pl.BlockSpec((Tc, Bb, H), lambda b, c: (c, b, 0)),
        scratch_shapes=[pltpu.VMEM((Bb, H), jnp.float32),        # hx
                        pltpu.VMEM((Bb, H), jnp.float32)],       # cx
        compiler_params=pltpu.CompilerParams(
            dimension_semantics=("parallel", "arbitrary"),       # batch || time
            vmem_limit_bytes=32 * 1024 * 1024),
        cost_estimate=cost,
    )(inputs, Wx, Wh, Wc, bias)
    return out[:T]


def _head_kernel(add_nl, x_ref, *refs):
    """Fused MLPW (+tanh) + adapterW linear head over a row tile."""
    if add_nl:
        w1_ref, b1_ref, w2_ref, b2_ref, o_ref = refs
        h = jnp.tanh(jnp.dot(x_ref[...], w1_ref[...],
                             preferred_element_type=jnp.float32) + b1_ref[...])
    else:
        w2_ref, b2_ref, o_ref = refs
        h = x_ref[...]
    o_ref[...] = jnp.dot(h, w2_ref[...],
                         preferred_element_type=jnp.float32) + b2_ref[...]


def head_forward(flat, params, cfg, *, row_tile=256):
    """(N, H) -> (N, output_size): optional tanh(MLPW(x)) then adapterW, fused."""
    N, H = flat.shape
    out_size = cfg["output_size"]
    add_nl = cfg["add_nl_layer"]

    if N <= row_tile:
        tile_m, Np = N, N
    else:
        tile_m = row_tile
        Np = pl.cdiv(N, tile_m) * tile_m
        if Np != N:
            flat = jnp.concatenate(
                [flat, jnp.zeros((Np - N, H), flat.dtype)], axis=0)

    args = [flat]
    in_specs = [pl.BlockSpec((tile_m, H), lambda i: (i, 0))]
    if add_nl:
        args += [params["MLPW_w"].T, params["MLPW_b"].reshape(1, -1)]
        in_specs += [pl.BlockSpec((H, H), lambda i: (0, 0)),
                     pl.BlockSpec((1, H), lambda i: (0, 0))]
    args += [params["adapter_w"].T, params["adapter_b"].reshape(1, -1)]
    in_specs += [pl.BlockSpec((H, out_size), lambda i: (0, 0)),
                 pl.BlockSpec((1, out_size), lambda i: (0, 0))]

    out = pl.pallas_call(
        functools.partial(_head_kernel, add_nl),
        out_shape=jax.ShapeDtypeStruct((Np, out_size), jnp.float32),
        grid=(Np // tile_m,),
        in_specs=in_specs,
        out_specs=pl.BlockSpec((tile_m, out_size), lambda i: (i, 0)),
        compiler_params=pltpu.CompilerParams(
            dimension_semantics=("parallel",)),
    )(*args)
    return out[:N]


# ----------------------------------------------------------------------------
# DRNN glue (pure reshapes — element order is already contiguous)
# ----------------------------------------------------------------------------

def drnn_layer(cell_params, inputs, rate):
    n_steps, batch, feat = inputs.shape
    if n_steps % rate != 0:
        dsteps = n_steps // rate + 1
        pad = dsteps * rate - n_steps
        inputs = jnp.concatenate(
            [inputs, jnp.zeros((pad, batch, feat), inputs.dtype)], axis=0)
    else:
        dsteps = n_steps // rate
    # _prepare_inputs: cat([x[j::rate] for j], dim=1)  ==  reshape
    dilated_inputs = inputs.reshape(dsteps, rate * batch, feat)
    # _apply_cell (hidden=None -> zeros inside the kernel)
    dilated_outputs = res_lstm_layer(dilated_inputs, cell_params)
    # _split_outputs: stack/transpose/view  ==  inverse reshape
    H = dilated_outputs.shape[-1]
    outputs = dilated_outputs.reshape(dsteps * rate, batch, H)
    # _unpad_outputs
    return outputs[:n_steps]


def drnn_forward(cells, dilations, inputs):
    for cell_params, rate in zip(cells, dilations):
        inputs = drnn_layer(cell_params, inputs, rate)
    return inputs


# ----------------------------------------------------------------------------
# _RNN parameters + forward
# ----------------------------------------------------------------------------

def init_res_lstm_cell(key, input_size, hidden_size, scale=0.1):
    ks = jax.random.split(key, 9)
    return dict(
        weight_ii=jax.random.normal(ks[0], (3 * hidden_size, input_size)) * scale,
        weight_ic=jax.random.normal(ks[1], (3 * hidden_size, hidden_size)) * scale,
        weight_ih=jax.random.normal(ks[2], (3 * hidden_size, hidden_size)) * scale,
        bias_ii=jax.random.normal(ks[3], (3 * hidden_size,)) * scale,
        bias_ic=jax.random.normal(ks[4], (3 * hidden_size,)) * scale,
        bias_ih=jax.random.normal(ks[5], (3 * hidden_size,)) * scale,
        weight_hh=jax.random.normal(ks[6], (hidden_size, hidden_size)) * scale,
        bias_hh=jax.random.normal(ks[7], (hidden_size,)) * scale,
        weight_ir=jax.random.normal(ks[8], (hidden_size, input_size)) * scale,
    )


def init_rnn_params(key, cfg):
    n_groups = len(cfg["dilations"])
    keys = jax.random.split(key, n_groups + 3)
    stack = []
    for grp in range(n_groups):
        if grp == 0:
            in_sz = cfg["input_size"] + (cfg["input_size"] + cfg["output_size"]) * cfg["n_t"]
        else:
            in_sz = cfg["state_hsize"]
        cell_keys = jax.random.split(keys[grp], len(cfg["dilations"][grp]))
        cells = []
        for i, kc in enumerate(cell_keys):
            c_in = in_sz if i == 0 else cfg["state_hsize"]
            cells.append(init_res_lstm_cell(kc, c_in, cfg["state_hsize"]))
        stack.append(cells)
    params = {"rnn_stack": stack}
    if cfg["add_nl_layer"]:
        params["MLPW_w"] = jax.random.normal(
            keys[-3], (cfg["state_hsize"], cfg["state_hsize"])) * 0.1
        params["MLPW_b"] = jax.random.normal(keys[-2], (cfg["state_hsize"],)) * 0.1
    ka, kb = jax.random.split(keys[-1])
    params["adapter_w"] = jax.random.normal(
        ka, (cfg["output_size"], cfg["state_hsize"])) * 0.1
    params["adapter_b"] = jax.random.normal(kb, (cfg["output_size"],)) * 0.1
    return params


def rnn_forward(params, Y, X, cfg):
    # Y: (T, B, input_size); X: (T, B, (input_size+output_size)*n_t)
    if cfg["n_t"] > 0:
        input_data = jnp.concatenate((Y, X), axis=-1)
    else:
        input_data = Y
    for layer_num, (cells, dils) in enumerate(
            zip(params["rnn_stack"], cfg["dilations"])):
        residual = input_data
        output = drnn_forward(cells, dils, input_data)
        if layer_num > 0:
            output = output + residual
        input_data = output
    T, B, H = input_data.shape
    flat = input_data.reshape(T * B, H)
    flat = head_forward(flat, params, cfg)       # fused MLPW(+tanh) + adapterW
    out = flat.reshape(T, B, cfg["output_size"])
    return jnp.transpose(out, (1, 0, 2))         # .transpose(0, 1)


# TODO(synk): other cell_type options (GRU / RNN / LSTM / AttentiveLSTM) are not
# instantiated here; this script implements cell_type='ResLSTM'.


if __name__ == "__main__":
    cfg = dict(
        input_size=8,
        output_size=4,
        n_t=0,                      # n_t=0 -> input_data = Y, X unused
        cell_type="ResLSTM",
        dilations=[[1], [2]],       # two DRNN groups -> exercises the residual add
        state_hsize=32,
        add_nl_layer=True,
    )
    seq, batch = 8, 2

    key = jax.random.PRNGKey(0)
    kp, ky, kx = jax.random.split(key, 3)
    params = init_rnn_params(kp, cfg)
    Y = jax.random.normal(ky, (seq, batch, cfg["input_size"]), dtype=jnp.float32)
    X = jnp.zeros((seq, batch, 0), dtype=jnp.float32)  # unused since n_t=0

    fwd = jax.jit(functools.partial(rnn_forward, cfg=cfg))
    out = fwd(params, Y, X)
    out = jax.block_until_ready(out)
    assert out.shape == (batch, seq, cfg["output_size"]), out.shape
    print("KERNEL_OK")
</pallas_src>

<mosaic_0001>
module attributes {stable_mosaic.version = 11 : i64} {
  func.func @_res_lstm_chunk_kernel(%arg0: i32, %arg1: i32, %arg2: memref<4x4x32xf32, #tpu.memory_space<vmem>>, %arg3: memref<32x128xf32, #tpu.memory_space<vmem>>, %arg4: memref<32x128xf32, #tpu.memory_space<vmem>>, %arg5: memref<32x128xf32, #tpu.memory_space<vmem>>, %arg6: memref<1x128xf32, #tpu.memory_space<vmem>>, %arg7: memref<4x4x32xf32, #tpu.memory_space<vmem>>, %arg8: memref<4x32xf32, #tpu.memory_space<vmem>>, %arg9: memref<4x32xf32, #tpu.memory_space<vmem>>) attributes {dimension_semantics = [#tpu.dimension_semantics<parallel>, #tpu.dimension_semantics<arbitrary>], iteration_bounds = array<i64: 1, 1>, scalar_prefetch = 0 : i64, scratch_operands = 2 : i64, tpu.core_type = #tpu.core_type<tc>, window_params = [{transform_indices = @transform_0, window_bounds = array<i64: 4, 4, 32>}, {pipeline_mode = #tpu.pipeline_mode<synchronous>, transform_indices = @transform_1, window_bounds = array<i64: 32, 128>}, {pipeline_mode = #tpu.pipeline_mode<synchronous>, transform_indices = @transform_2, window_bounds = array<i64: 32, 128>}, {pipeline_mode = #tpu.pipeline_mode<synchronous>, transform_indices = @transform_3, window_bounds = array<i64: 32, 128>}, {pipeline_mode = #tpu.pipeline_mode<synchronous>, transform_indices = @transform_4, window_bounds = array<i64: 1, 128>}, {transform_indices = @transform_5, window_bounds = array<i64: 4, 4, 32>}]} {
    %c0_i32 = arith.constant 0 : i32
    %0 = arith.cmpi eq, %arg1, %c0_i32 : i32
    %1 = arith.extui %0 : i1 to i32
    %c0_i32_0 = arith.constant 0 : i32
    %2 = arith.cmpi ne, %1, %c0_i32_0 : i32
    scf.if %2 {
      %cst_60 = arith.constant 0.000000e+00 : f32
      %163 = vector.broadcast %cst_60 : f32 to vector<4x32xf32>
      %c0_61 = arith.constant 0 : index
      %c0_62 = arith.constant 0 : index
      %164 = vector.load %arg8[%c0_61, %c0_62] : memref<4x32xf32, #tpu.memory_space<vmem>>, vector<4x32xf32>
      tpu.vector_store %arg8[%c0_61, %c0_62], %163 {strides = array<i32>} : memref<4x32xf32, #tpu.memory_space<vmem>>, vector<4x32xf32>,
      %cst_63 = arith.constant 0.000000e+00 : f32
      %165 = vector.broadcast %cst_63 : f32 to vector<4x32xf32>
      %c0_64 = arith.constant 0 : index
      %c0_65 = arith.constant 0 : index
      %166 = vector.load %arg9[%c0_64, %c0_65] : memref<4x32xf32, #tpu.memory_space<vmem>>, vector<4x32xf32>
      tpu.vector_store %arg9[%c0_64, %c0_65], %165 {strides = array<i32>} : memref<4x32xf32, #tpu.memory_space<vmem>>, vector<4x32xf32>,
    } else {
    }
    %c0 = arith.constant 0 : index
    %c0_1 = arith.constant 0 : index
    %3 = vector.load %arg3[%c0, %c0_1] : memref<32x128xf32, #tpu.memory_space<vmem>>, vector<32x128xf32>
    %c0_2 = arith.constant 0 : index
    %c0_3 = arith.constant 0 : index
    %4 = vector.load %arg4[%c0_2, %c0_3] : memref<32x128xf32, #tpu.memory_space<vmem>>, vector<32x128xf32>
    %c0_4 = arith.constant 0 : index
    %c0_5 = arith.constant 0 : index
    %5 = vector.load %arg5[%c0_4, %c0_5] : memref<32x128xf32, #tpu.memory_space<vmem>>, vector<32x128xf32>
    %c0_6 = arith.constant 0 : index
    %c0_7 = arith.constant 0 : index
    %6 = vector.load %arg6[%c0_6, %c0_7] : memref<1x128xf32, #tpu.memory_space<vmem>>, vector<1x128xf32>
    %c0_8 = arith.constant 0 : index
    %c0_9 = arith.constant 0 : index
    %7 = vector.load %arg8[%c0_8, %c0_9] : memref<4x32xf32, #tpu.memory_space<vmem>>, vector<4x32xf32>
    %c0_10 = arith.constant 0 : index
    %c0_11 = arith.constant 0 : index
    %8 = vector.load %arg9[%c0_10, %c0_11] : memref<4x32xf32, #tpu.memory_space<vmem>>, vector<4x32xf32>
    %c0_12 = arith.constant 0 : index
    %c0_13 = arith.constant 0 : index
    %c0_14 = arith.constant 0 : index
    %9 = vector.load %arg2[%c0_12, %c0_13, %c0_14] : memref<4x4x32xf32, #tpu.memory_space<vmem>>, vector<1x4x32xf32>
    %10 = vector.shape_cast %9 : vector<1x4x32xf32> to vector<4x32xf32>
    %cst = arith.constant dense<0.000000e+00> : vector<4x128xf32>
    %11 = tpu.matmul %10, %3, %cst {dimension_numbers = #tpu.dot_dimension_numbers<[1], [0], [0], [1], [0, 0, 1, 1], [], []>} : vector<4x32xf32>, vector<32x128xf32>, vector<4x128xf32> -> vector<4x128xf32>
    %12 = vector.broadcast %6 : vector<1x128xf32> to vector<4x128xf32>
    %13 = arith.addf %11, %12 : vector<4x128xf32>
    %cst_15 = arith.constant dense<0.000000e+00> : vector<4x128xf32>
    %14 = tpu.matmul %7, %4, %cst_15 {dimension_numbers = #tpu.dot_dimension_numbers<[1], [0], [0], [1], [0, 0, 1, 1], [], []>} : vector<4x32xf32>, vector<32x128xf32>, vector<4x128xf32> -> vector<4x128xf32>
    %15 = arith.addf %13, %14 : vector<4x128xf32>
    %cst_16 = arith.constant dense<0.000000e+00> : vector<4x128xf32>
    %16 = tpu.matmul %8, %5, %cst_16 {dimension_numbers = #tpu.dot_dimension_numbers<[1], [0], [0], [1], [0, 0, 1, 1], [], []>} : vector<4x32xf32>, vector<32x128xf32>, vector<4x128xf32> -> vector<4x128xf32>
    %17 = arith.addf %15, %16 : vector<4x128xf32>
    %18 = vector.extract_strided_slice %17 {offsets = [0, 0], sizes = [4, 32], strides = [1, 1]} : vector<4x128xf32> to vector<4x32xf32>
    %19 = arith.negf %18 : vector<4x32xf32>
    %20 = math.exp %19 : vector<4x32xf32>
    %cst_17 = arith.constant 1.000000e+00 : f32
    %21 = vector.broadcast %cst_17 : f32 to vector<4x32xf32>
    %22 = arith.addf %21, %20 : vector<4x32xf32>
    %23 = arith.divf %21, %22 : vector<4x32xf32>
    %24 = vector.extract_strided_slice %17 {offsets = [0, 32], sizes = [4, 32], strides = [1, 1]} : vector<4x128xf32> to vector<4x32xf32>
    %25 = arith.negf %24 : vector<4x32xf32>
    %26 = math.exp %25 : vector<4x32xf32>
    %cst_18 = arith.constant 1.000000e+00 : f32
    %27 = vector.broadcast %cst_18 : f32 to vector<4x32xf32>
    %28 = arith.addf %27, %26 : vector<4x32xf32>
    %29 = arith.divf %27, %28 : vector<4x32xf32>
    %30 = vector.extract_strided_slice %17 {offsets = [0, 64], sizes = [4, 32], strides = [1, 1]} : vector<4x128xf32> to vector<4x32xf32>
    %31 = arith.negf %30 : vector<4x32xf32>
    %32 = math.exp %31 : vector<4x32xf32>
    %cst_19 = arith.constant 1.000000e+00 : f32
    %33 = vector.broadcast %cst_19 : f32 to vector<4x32xf32>
    %34 = arith.addf %33, %32 : vector<4x32xf32>
    %35 = arith.divf %33, %34 : vector<4x32xf32>
    %36 = vector.extract_strided_slice %17 {offsets = [0, 96], sizes = [4, 32], strides = [1, 1]} : vector<4x128xf32> to vector<4x32xf32>
    %37 = math.tanh %36 : vector<4x32xf32>
    %38 = arith.mulf %29, %8 : vector<4x32xf32>
    %39 = arith.mulf %23, %37 : vector<4x32xf32>
    %40 = arith.addf %38, %39 : vector<4x32xf32>
    %41 = math.tanh %40 : vector<4x32xf32>
    %42 = arith.addf %41, %10 : vector<4x32xf32>
    %43 = arith.mulf %35, %42 : vector<4x32xf32>
    %c0_20 = arith.constant 0 : index
    %c0_21 = arith.constant 0 : index
    %c0_22 = arith.constant 0 : index
    %44 = vector.load %arg7[%c0_20, %c0_21, %c0_22] : memref<4x4x32xf32, #tpu.memory_space<vmem>>, vector<1x4x32xf32>
    %45 = vector.shape_cast %44 : vector<1x4x32xf32> to vector<4x32xf32>
    %46 = vector.shape_cast %43 : vector<4x32xf32> to vector<1x4x32xf32>
    tpu.vector_store %arg7[%c0_20, %c0_21, %c0_22], %46 {strides = array<i32>} : memref<4x4x32xf32, #tpu.memory_space<vmem>>, vector<1x4x32xf32>,
    %c1 = arith.constant 1 : index
    %c0_23 = arith.constant 0 : index
    %c0_24 = arith.constant 0 : index
    %47 = vector.load %arg2[%c1, %c0_23, %c0_24] : memref<4x4x32xf32, #tpu.memory_space<vmem>>, vector<1x4x32xf32>
    %48 = vector.shape_cast %47 : vector<1x4x32xf32> to vector<4x32xf32>
    %cst_25 = arith.constant dense<0.000000e+00> : vector<4x128xf32>
    %49 = tpu.matmul %48, %3, %cst_25 {dimension_numbers = #tpu.dot_dimension_numbers<[1], [0], [0], [1], [0, 0, 1, 1], [], []>} : vector<4x32xf32>, vector<32x128xf32>, vector<4x128xf32> -> vector<4x128xf32>
    %50 = vector.broadcast %6 : vector<1x128xf32> to vector<4x128xf32>
    %51 = arith.addf %49, %50 : vector<4x128xf32>
    %cst_26 = arith.constant dense<0.000000e+00> : vector<4x128xf32>
    %52 = tpu.matmul %43, %4, %cst_26 {dimension_numbers = #tpu.dot_dimension_numbers<[1], [0], [0], [1], [0, 0, 1, 1], [], []>} : vector<4x32xf32>, vector<32x128xf32>, vector<4x128xf32> -> vector<4x128xf32>
    %53 = arith.addf %51, %52 : vector<4x128xf32>
    %cst_27 = arith.constant dense<0.000000e+00> : vector<4x128xf32>
    %54 = tpu.matmul %40, %5, %cst_27 {dimension_numbers = #tpu.dot_dimension_numbers<[1], [0], [0], [1], [0, 0, 1, 1], [], []>} : vector<4x32xf32>, vector<32x128xf32>, vector<4x128xf32> -> vector<4x128xf32>
    %55 = arith.addf %53, %54 : vector<4x128xf32>
    %56 = vector.extract_strided_slice %55 {offsets = [0, 0], sizes = [4, 32], strides = [1, 1]} : vector<4x128xf32> to vector<4x32xf32>
    %57 = arith.negf %56 : vector<4x32xf32>
    %58 = math.exp %57 : vector<4x32xf32>
    %cst_28 = arith.constant 1.000000e+00 : f32
    %59 = vector.broadcast %cst_28 : f32 to vector<4x32xf32>
    %60 = arith.addf %59, %58 : vector<4x32xf32>
    %61 = arith.divf %59, %60 : vector<4x32xf32>
    %62 = vector.extract_strided_slice %55 {offsets = [0, 32], sizes = [4, 32], strides = [1, 1]} : vector<4x128xf32> to vector<4x32xf32>
    %63 = arith.negf %62 : vector<4x32xf32>
    %64 = math.exp %63 : vector<4x32xf32>
    %cst_29 = arith.constant 1.000000e+00 : f32
    %65 = vector.broadcast %cst_29 : f32 to vector<4x32xf32>
    %66 = arith.addf %65, %64 : vector<4x32xf32>
    %67 = arith.divf %65, %66 : vector<4x32xf32>
    %68 = vector.extract_strided_slice %55 {offsets = [0, 64], sizes = [4, 32], strides = [1, 1]} : vector<4x128xf32> to vector<4x32xf32>
    %69 = arith.negf %68 : vector<4x32xf32>
    %70 = math.exp %69 : vector<4x32xf32>
    %cst_30 = arith.constant 1.000000e+00 : f32
    %71 = vector.broadcast %cst_30 : f32 to vector<4x32xf32>
    %72 = arith.addf %71, %70 : vector<4x32xf32>
    %73 = arith.divf %71, %72 : vector<4x32xf32>
    %74 = vector.extract_strided_slice %55 {offsets = [0, 96], sizes = [4, 32], strides = [1, 1]} : vector<4x128xf32> to vector<4x32xf32>
    %75 = math.tanh %74 : vector<4x32xf32>
    %76 = arith.mulf %67, %40 : vector<4x32xf32>
    %77 = arith.mulf %61, %75 : vector<4x32xf32>
    %78 = arith.addf %76, %77 : vector<4x32xf32>
    %79 = math.tanh %78 : vector<4x32xf32>
    %80 = arith.addf %79, %48 : vector<4x32xf32>
    %81 = arith.mulf %73, %80 : vector<4x32xf32>
    %c1_31 = arith.constant 1 : index
    %c0_32 = arith.constant 0 : index
    %c0_33 = arith.constant 0 : index
    %82 = vector.load %arg7[%c1_31, %c0_32, %c0_33] : memref<4x4x32xf32, #tpu.memory_space<vmem>>, vector<1x4x32xf32>
    %83 = vector.shape_cast %82 : vector<1x4x32xf32> to vector<4x32xf32>
    %84 = vector.shape_cast %81 : vector<4x32xf32> to vector<1x4x32xf32>
    tpu.vector_store %arg7[%c1_31, %c0_32, %c0_33], %84 {strides = array<i32>} : memref<4x4x32xf32, #tpu.memory_space<vmem>>, vector<1x4x32xf32>,
    %c2 = arith.constant 2 : index
    %c0_34 = arith.constant 0 : index
    %c0_35 = arith.constant 0 : index
    %85 = vector.load %arg2[%c2, %c0_34, %c0_35] : memref<4x4x32xf32, #tpu.memory_space<vmem>>, vector<1x4x32xf32>
    %86 = vector.shape_cast %85 : vector<1x4x32xf32> to vector<4x32xf32>
    %cst_36 = arith.constant dense<0.000000e+00> : vector<4x128xf32>
    %87 = tpu.matmul %86, %3, %cst_36 {dimension_numbers = #tpu.dot_dimension_numbers<[1], [0], [0], [1], [0, 0, 1, 1], [], []>} : vector<4x32xf32>, vector<32x128xf32>, vector<4x128xf32> -> vector<4x128xf32>
    %88 = vector.broadcast %6 : vector<1x128xf32> to vector<4x128xf32>
    %89 = arith.addf %87, %88 : vector<4x128xf32>
    %cst_37 = arith.constant dense<0.000000e+00> : vector<4x128xf32>
    %90 = tpu.matmul %81, %4, %cst_37 {dimension_numbers = #tpu.dot_dimension_numbers<[1], [0], [0], [1], [0, 0, 1, 1], [], []>} : vector<4x32xf32>, vector<32x128xf32>, vector<4x128xf32> -> vector<4x128xf32>
    %91 = arith.addf %89, %90 : vector<4x128xf32>
    %cst_38 = arith.constant dense<0.000000e+00> : vector<4x128xf32>
    %92 = tpu.matmul %78, %5, %cst_38 {dimension_numbers = #tpu.dot_dimension_numbers<[1], [0], [0], [1], [0, 0, 1, 1], [], []>} : vector<4x32xf32>, vector<32x128xf32>, vector<4x128xf32> -> vector<4x128xf32>
    %93 = arith.addf %91, %92 : vector<4x128xf32>
    %94 = vector.extract_strided_slice %93 {offsets = [0, 0], sizes = [4, 32], strides = [1, 1]} : vector<4x128xf32> to vector<4x32xf32>
    %95 = arith.negf %94 : vector<4x32xf32>
    %96 = math.exp %95 : vector<4x32xf32>
    %cst_39 = arith.constant 1.000000e+00 : f32
    %97 = vector.broadcast %cst_39 : f32 to vector<4x32xf32>
    %98 = arith.addf %97, %96 : vector<4x32xf32>
    %99 = arith.divf %97, %98 : vector<4x32xf32>
    %100 = vector.extract_strided_slice %93 {offsets = [0, 32], sizes = [4, 32], strides = [1, 1]} : vector<4x128xf32> to vector<4x32xf32>
    %101 = arith.negf %100 : vector<4x32xf32>
    %102 = math.exp %101 : vector<4x32xf32>
    %cst_40 = arith.constant 1.000000e+00 : f32
    %103 = vector.broadcast %cst_40 : f32 to vector<4x32xf32>
    %104 = arith.addf %103, %102 : vector<4x32xf32>
    %105 = arith.divf %103, %104 : vector<4x32xf32>
    %106 = vector.extract_strided_slice %93 {offsets = [0, 64], sizes = [4, 32], strides = [1, 1]} : vector<4x128xf32> to vector<4x32xf32>
    %107 = arith.negf %106 : vector<4x32xf32>
    %108 = math.exp %107 : vector<4x32xf32>
    %cst_41 = arith.constant 1.000000e+00 : f32
    %109 = vector.broadcast %cst_41 : f32 to vector<4x32xf32>
    %110 = arith.addf %109, %108 : vector<4x32xf32>
    %111 = arith.divf %109, %110 : vector<4x32xf32>
    %112 = vector.extract_strided_slice %93 {offsets = [0, 96], sizes = [4, 32], strides = [1, 1]} : vector<4x128xf32> to vector<4x32xf32>
    %113 = math.tanh %112 : vector<4x32xf32>
    %114 = arith.mulf %105, %78 : vector<4x32xf32>
    %115 = arith.mulf %99, %113 : vector<4x32xf32>
    %116 = arith.addf %114, %115 : vector<4x32xf32>
    %117 = math.tanh %116 : vector<4x32xf32>
    %118 = arith.addf %117, %86 : vector<4x32xf32>
    %119 = arith.mulf %111, %118 : vector<4x32xf32>
    %c2_42 = arith.constant 2 : index
    %c0_43 = arith.constant 0 : index
    %c0_44 = arith.constant 0 : index
    %120 = vector.load %arg7[%c2_42, %c0_43, %c0_44] : memref<4x4x32xf32, #tpu.memory_space<vmem>>, vector<1x4x32xf32>
    %121 = vector.shape_cast %120 : vector<1x4x32xf32> to vector<4x32xf32>
    %122 = vector.shape_cast %119 : vector<4x32xf32> to vector<1x4x32xf32>
    tpu.vector_store %arg7[%c2_42, %c0_43, %c0_44], %122 {strides = array<i32>} : memref<4x4x32xf32, #tpu.memory_space<vmem>>, vector<1x4x32xf32>,
    %c3 = arith.constant 3 : index
    %c0_45 = arith.constant 0 : index
    %c0_46 = arith.constant 0 : index
    %123 = vector.load %arg2[%c3, %c0_45, %c0_46] : memref<4x4x32xf32, #tpu.memory_space<vmem>>, vector<1x4x32xf32>
    %124 = vector.shape_cast %123 : vector<1x4x32xf32> to vector<4x32xf32>
    %cst_47 = arith.constant dense<0.000000e+00> : vector<4x128xf32>
    %125 = tpu.matmul %124, %3, %cst_47 {dimension_numbers = #tpu.dot_dimension_numbers<[1], [0], [0], [1], [0, 0, 1, 1], [], []>} : vector<4x32xf32>, vector<32x128xf32>, vector<4x128xf32> -> vector<4x128xf32>
    %126 = vector.broadcast %6 : vector<1x128xf32> to vector<4x128xf32>
    %127 = arith.addf %125, %126 : vector<4x128xf32>
    %cst_48 = arith.constant dense<0.000000e+00> : vector<4x128xf32>
    %128 = tpu.matmul %119, %4, %cst_48 {dimension_numbers = #tpu.dot_dimension_numbers<[1], [0], [0], [1], [0, 0, 1, 1], [], []>} : vector<4x32xf32>, vector<32x128xf32>, vector<4x128xf32> -> vector<4x128xf32>
    %129 = arith.addf %127, %128 : vector<4x128xf32>
    %cst_49 = arith.constant dense<0.000000e+00> : vector<4x128xf32>
    %130 = tpu.matmul %116, %5, %cst_49 {dimension_numbers = #tpu.dot_dimension_numbers<[1], [0], [0], [1], [0, 0, 1, 1], [], []>} : vector<4x32xf32>, vector<32x128xf32>, vector<4x128xf32> -> vector<4x128xf32>
    %131 = arith.addf %129, %130 : vector<4x128xf32>
    %132 = vector.extract_strided_slice %131 {offsets = [0, 0], sizes = [4, 32], strides = [1, 1]} : vector<4x128xf32> to vector<4x32xf32>
    %133 = arith.negf %132 : vector<4x32xf32>
    %134 = math.exp %133 : vector<4x32xf32>
    %cst_50 = arith.constant 1.000000e+00 : f32
    %135 = vector.broadcast %cst_50 : f32 to vector<4x32xf32>
    %136 = arith.addf %135, %134 : vector<4x32xf32>
    %137 = arith.divf %135, %136 : vector<4x32xf32>
    %138 = vector.extract_strided_slice %131 {offsets = [0, 32], sizes = [4, 32], strides = [1, 1]} : vector<4x128xf32> to vector<4x32xf32>
    %139 = arith.negf %138 : vector<4x32xf32>
    %140 = math.exp %139 : vector<4x32xf32>
    %cst_51 = arith.constant 1.000000e+00 : f32
    %141 = vector.broadcast %cst_51 : f32 to vector<4x32xf32>
    %142 = arith.addf %141, %140 : vector<4x32xf32>
    %143 = arith.divf %141, %142 : vector<4x32xf32>
    %144 = vector.extract_strided_slice %131 {offsets = [0, 64], sizes = [4, 32], strides = [1, 1]} : vector<4x128xf32> to vector<4x32xf32>
    %145 = arith.negf %144 : vector<4x32xf32>
    %146 = math.exp %145 : vector<4x32xf32>
    %cst_52 = arith.constant 1.000000e+00 : f32
    %147 = vector.broadcast %cst_52 : f32 to vector<4x32xf32>
    %148 = arith.addf %147, %146 : vector<4x32xf32>
    %149 = arith.divf %147, %148 : vector<4x32xf32>
    %150 = vector.extract_strided_slice %131 {offsets = [0, 96], sizes = [4, 32], strides = [1, 1]} : vector<4x128xf32> to vector<4x32xf32>
    %151 = math.tanh %150 : vector<4x32xf32>
    %152 = arith.mulf %143, %116 : vector<4x32xf32>
    %153 = arith.mulf %137, %151 : vector<4x32xf32>
    %154 = arith.addf %152, %153 : vector<4x32xf32>
    %155 = math.tanh %154 : vector<4x32xf32>
    %156 = arith.addf %155, %124 : vector<4x32xf32>
    %157 = arith.mulf %149, %156 : vector<4x32xf32>
    %c3_53 = arith.constant 3 : index
    %c0_54 = arith.constant 0 : index
    %c0_55 = arith.constant 0 : index
    %158 = vector.load %arg7[%c3_53, %c0_54, %c0_55] : memref<4x4x32xf32, #tpu.memory_space<vmem>>, vector<1x4x32xf32>
    %159 = vector.shape_cast %158 : vector<1x4x32xf32> to vector<4x32xf32>
    %160 = vector.shape_cast %157 : vector<4x32xf32> to vector<1x4x32xf32>
    tpu.vector_store %arg7[%c3_53, %c0_54, %c0_55], %160 {strides = array<i32>} : memref<4x4x32xf32, #tpu.memory_space<vmem>>, vector<1x4x32xf32>,
    %c0_56 = arith.constant 0 : index
    %c0_57 = arith.constant 0 : index
    %161 = vector.load %arg8[%c0_56, %c0_57] : memref<4x32xf32, #tpu.memory_space<vmem>>, vector<4x32xf32>
    tpu.vector_store %arg8[%c0_56, %c0_57], %157 {strides = array<i32>} : memref<4x32xf32, #tpu.memory_space<vmem>>, vector<4x32xf32>,
    %c0_58 = arith.constant 0 : index
    %c0_59 = arith.constant 0 : index
    %162 = vector.load %arg9[%c0_58, %c0_59] : memref<4x32xf32, #tpu.memory_space<vmem>>, vector<4x32xf32>
    tpu.vector_store %arg9[%c0_58, %c0_59], %154 {strides = array<i32>} : memref<4x32xf32, #tpu.memory_space<vmem>>, vector<4x32xf32>,
    return
  }
  func.func @transform_0(%arg0: i32, %arg1: i32) -> (i32, i32, i32) {
    %c0_i32 = arith.constant 0 : i32
    %c0_i32_0 = arith.constant 0 : i32
    return %arg1, %arg0, %c0_i32 : i32, i32, i32
  }
  func.func @transform_1(%arg0: i32, %arg1: i32) -> (i32, i32) {
    %c0_i32 = arith.constant 0 : i32
    %c0_i32_0 = arith.constant 0 : i32
    %c0_i32_1 = arith.constant 0 : i32
    return %c0_i32, %c0_i32_0 : i32, i32
  }
  func.func @transform_2(%arg0: i32, %arg1: i32) -> (i32, i32) {
    %c0_i32 = arith.constant 0 : i32
    %c0_i32_0 = arith.constant 0 : i32
    %c0_i32_1 = arith.constant 0 : i32
    return %c0_i32, %c0_i32_0 : i32, i32
  }
  func.func @transform_3(%arg0: i32, %arg1: i32) -> (i32, i32) {
    %c0_i32 = arith.constant 0 : i32
    %c0_i32_0 = arith.constant 0 : i32
    %c0_i32_1 = arith.constant 0 : i32
    return %c0_i32, %c0_i32_0 : i32, i32
  }
  func.func @transform_4(%arg0: i32, %arg1: i32) -> (i32, i32) {
    %c0_i32 = arith.constant 0 : i32
    %c0_i32_0 = arith.constant 0 : i32
    %c0_i32_1 = arith.constant 0 : i32
    return %c0_i32, %c0_i32_0 : i32, i32
  }
  func.func @transform_5(%arg0: i32, %arg1: i32) -> (i32, i32, i32) {
    %c0_i32 = arith.constant 0 : i32
    %c0_i32_0 = arith.constant 0 : i32
    return %arg1, %arg0, %c0_i32 : i32, i32, i32
  }
}

module attributes {stable_mosaic.version = 11 : i64} {
  func.func @_head_kernel(%arg0: i32, %arg1: memref<16x32xf32, #tpu.memory_space<vmem>>, %arg2: memref<32x32xf32, #tpu.memory_space<vmem>>, %arg3: memref<1x32xf32, #tpu.memory_space<vmem>>, %arg4: memref<32x4xf32, #tpu.memory_space<vmem>>, %arg5: memref<1x4xf32, #tpu.memory_space<vmem>>, %arg6: memref<16x4xf32, #tpu.memory_space<vmem>>) attributes {dimension_semantics = [#tpu.dimension_semantics<parallel>], iteration_bounds = array<i64: 1>, scalar_prefetch = 0 : i64, scratch_operands = 0 : i64, tpu.core_type = #tpu.core_type<tc>, window_params = [{transform_indices = @transform_0, window_bounds = array<i64: 16, 32>}, {pipeline_mode = #tpu.pipeline_mode<synchronous>, transform_indices = @transform_1, window_bounds = array<i64: 32, 32>}, {pipeline_mode = #tpu.pipeline_mode<synchronous>, transform_indices = @transform_2, window_bounds = array<i64: 1, 32>}, {pipeline_mode = #tpu.pipeline_mode<synchronous>, transform_indices = @transform_3, window_bounds = array<i64: 32, 4>}, {pipeline_mode = #tpu.pipeline_mode<synchronous>, transform_indices = @transform_4, window_bounds = array<i64: 1, 4>}, {transform_indices = @transform_5, window_bounds = array<i64: 16, 4>}]} {
    %c0 = arith.constant 0 : index
    %c0_0 = arith.constant 0 : index
    %0 = vector.load %arg1[%c0, %c0_0] : memref<16x32xf32, #tpu.memory_space<vmem>>, vector<16x32xf32>
    %c0_1 = arith.constant 0 : index
    %c0_2 = arith.constant 0 : index
    %1 = vector.load %arg2[%c0_1, %c0_2] : memref<32x32xf32, #tpu.memory_space<vmem>>, vector<32x32xf32>
    %cst = arith.constant dense<0.000000e+00> : vector<16x32xf32>
    %2 = tpu.matmul %0, %1, %cst {dimension_numbers = #tpu.dot_dimension_numbers<[1], [0], [0], [1], [0, 0, 1, 1], [], []>} : vector<16x32xf32>, vector<32x32xf32>, vector<16x32xf32> -> vector<16x32xf32>
    %c0_3 = arith.constant 0 : index
    %c0_4 = arith.constant 0 : index
    %3 = vector.load %arg3[%c0_3, %c0_4] : memref<1x32xf32, #tpu.memory_space<vmem>>, vector<1x32xf32>
    %4 = vector.broadcast %3 : vector<1x32xf32> to vector<16x32xf32>
    %5 = arith.addf %2, %4 : vector<16x32xf32>
    %6 = math.tanh %5 : vector<16x32xf32>
    %c0_5 = arith.constant 0 : index
    %c0_6 = arith.constant 0 : index
    %7 = vector.load %arg4[%c0_5, %c0_6] : memref<32x4xf32, #tpu.memory_space<vmem>>, vector<32x4xf32>
    %cst_7 = arith.constant dense<0.000000e+00> : vector<16x4xf32>
    %8 = tpu.matmul %6, %7, %cst_7 {dimension_numbers = #tpu.dot_dimension_numbers<[1], [0], [0], [1], [0, 0, 1, 1], [], []>} : vector<16x32xf32>, vector<32x4xf32>, vector<16x4xf32> -> vector<16x4xf32>
    %c0_8 = arith.constant 0 : index
    %c0_9 = arith.constant 0 : index
    %9 = vector.load %arg5[%c0_8, %c0_9] : memref<1x4xf32, #tpu.memory_space<vmem>>, vector<1x4xf32>
    %10 = vector.broadcast %9 : vector<1x4xf32> to vector<16x4xf32>
    %11 = arith.addf %8, %10 : vector<16x4xf32>
    %c0_10 = arith.constant 0 : index
    %c0_11 = arith.constant 0 : index
    %12 = vector.load %arg6[%c0_10, %c0_11] : memref<16x4xf32, #tpu.memory_space<vmem>>, vector<16x4xf32>
    tpu.vector_store %arg6[%c0_10, %c0_11], %11 {strides = array<i32>} : memref<16x4xf32, #tpu.memory_space<vmem>>, vector<16x4xf32>,
    return
  }
  func.func @transform_0(%arg0: i32) -> (i32, i32) {
    %c0_i32 = arith.constant 0 : i32
    %c0_i32_0 = arith.constant 0 : i32
    return %arg0, %c0_i32 : i32, i32
  }
  func.func @transform_1(%arg0: i32) -> (i32, i32) {
    %c0_i32 = arith.constant 0 : i32
    %c0_i32_0 = arith.constant 0 : i32
    %c0_i32_1 = arith.constant 0 : i32
    return %c0_i32, %c0_i32_0 : i32, i32
  }
  func.func @transform_2(%arg0: i32) -> (i32, i32) {
    %c0_i32 = arith.constant 0 : i32
    %c0_i32_0 = arith.constant 0 : i32
    %c0_i32_1 = arith.constant 0 : i32
    return %c0_i32, %c0_i32_0 : i32, i32
  }
  func.func @transform_3(%arg0: i32) -> (i32, i32) {
    %c0_i32 = arith.constant 0 : i32
    %c0_i32_0 = arith.constant 0 : i32
    %c0_i32_1 = arith.constant 0 : i32
    return %c0_i32, %c0_i32_0 : i32, i32
  }
  func.func @transform_4(%arg0: i32) -> (i32, i32) {
    %c0_i32 = arith.constant 0 : i32
    %c0_i32_0 = arith.constant 0 : i32
    %c0_i32_1 = arith.constant 0 : i32
    return %c0_i32, %c0_i32_0 : i32, i32
  }
  func.func @transform_5(%arg0: i32) -> (i32, i32) {
    %c0_i32 = arith.constant 0 : i32
    %c0_i32_0 = arith.constant 0 : i32
    return %arg0, %c0_i32 : i32, i32
  }
}

module attributes {stable_mosaic.version = 11 : i64} {
  func.func @_res_lstm_chunk_kernel(%arg0: i32, %arg1: i32, %arg2: memref<8x2x8xf32, #tpu.memory_space<vmem>>, %arg3: memref<8x160xf32, #tpu.memory_space<vmem>>, %arg4: memref<32x160xf32, #tpu.memory_space<vmem>>, %arg5: memref<32x160xf32, #tpu.memory_space<vmem>>, %arg6: memref<1x160xf32, #tpu.memory_space<vmem>>, %arg7: memref<8x2x32xf32, #tpu.memory_space<vmem>>, %arg8: memref<2x32xf32, #tpu.memory_space<vmem>>, %arg9: memref<2x32xf32, #tpu.memory_space<vmem>>) attributes {dimension_semantics = [#tpu.dimension_semantics<parallel>, #tpu.dimension_semantics<arbitrary>], iteration_bounds = array<i64: 1, 1>, scalar_prefetch = 0 : i64, scratch_operands = 2 : i64, tpu.core_type = #tpu.core_type<tc>, window_params = [{transform_indices = @transform_0, window_bounds = array<i64: 8, 2, 8>}, {pipeline_mode = #tpu.pipeline_mode<synchronous>, transform_indices = @transform_1, window_bounds = array<i64: 8, 160>}, {pipeline_mode = #tpu.pipeline_mode<synchronous>, transform_indices = @transform_2, window_bounds = array<i64: 32, 160>}, {pipeline_mode = #tpu.pipeline_mode<synchronous>, transform_indices = @transform_3, window_bounds = array<i64: 32, 160>}, {pipeline_mode = #tpu.pipeline_mode<synchronous>, transform_indices = @transform_4, window_bounds = array<i64: 1, 160>}, {transform_indices = @transform_5, window_bounds = array<i64: 8, 2, 32>}]} {
    %c0_i32 = arith.constant 0 : i32
    %0 = arith.cmpi eq, %arg1, %c0_i32 : i32
    %1 = arith.extui %0 : i1 to i32
    %c0_i32_0 = arith.constant 0 : i32
    %2 = arith.cmpi ne, %1, %c0_i32_0 : i32
    scf.if %2 {
      %cst_104 = arith.constant 0.000000e+00 : f32
      %323 = vector.broadcast %cst_104 : f32 to vector<2x32xf32>
      %c0_105 = arith.constant 0 : index
      %c0_106 = arith.constant 0 : index
      %324 = vector.load %arg8[%c0_105, %c0_106] : memref<2x32xf32, #tpu.memory_space<vmem>>, vector<2x32xf32>
      tpu.vector_store %arg8[%c0_105, %c0_106], %323 {strides = array<i32>} : memref<2x32xf32, #tpu.memory_space<vmem>>, vector<2x32xf32>,
      %cst_107 = arith.constant 0.000000e+00 : f32
      %325 = vector.broadcast %cst_107 : f32 to vector<2x32xf32>
      %c0_108 = arith.constant 0 : index
      %c0_109 = arith.constant 0 : index
      %326 = vector.load %arg9[%c0_108, %c0_109] : memref<2x32xf32, #tpu.memory_space<vmem>>, vector<2x32xf32>
      tpu.vector_store %arg9[%c0_108, %c0_109], %325 {strides = array<i32>} : memref<2x32xf32, #tpu.memory_space<vmem>>, vector<2x32xf32>,
    } else {
    }
    %c0 = arith.constant 0 : index
    %c0_1 = arith.constant 0 : index
    %3 = vector.load %arg3[%c0, %c0_1] : memref<8x160xf32, #tpu.memory_space<vmem>>, vector<8x160xf32>
    %c0_2 = arith.constant 0 : index
    %c0_3 = arith.constant 0 : index
    %4 = vector.load %arg4[%c0_2, %c0_3] : memref<32x160xf32, #tpu.memory_space<vmem>>, vector<32x160xf32>
    %c0_4 = arith.constant 0 : index
    %c0_5 = arith.constant 0 : index
    %5 = vector.load %arg5[%c0_4, %c0_5] : memref<32x160xf32, #tpu.memory_space<vmem>>, vector<32x160xf32>
    %c0_6 = arith.constant 0 : index
    %c0_7 = arith.constant 0 : index
    %6 = vector.load %arg6[%c0_6, %c0_7] : memref<1x160xf32, #tpu.memory_space<vmem>>, vector<1x160xf32>
    %c0_8 = arith.constant 0 : index
    %c0_9 = arith.constant 0 : index
    %7 = vector.load %arg8[%c0_8, %c0_9] : memref<2x32xf32, #tpu.memory_space<vmem>>, vector<2x32xf32>
    %c0_10 = arith.constant 0 : index
    %c0_11 = arith.constant 0 : index
    %8 = vector.load %arg9[%c0_10, %c0_11] : memref<2x32xf32, #tpu.memory_space<vmem>>, vector<2x32xf32>
    %c0_12 = arith.constant 0 : index
    %c0_13 = arith.constant 0 : index
    %c0_14 = arith.constant 0 : index
    %9 = vector.load %arg2[%c0_12, %c0_13, %c0_14] : memref<8x2x8xf32, #tpu.memory_space<vmem>>, vector<1x2x8xf32>
    %10 = vector.shape_cast %9 : vector<1x2x8xf32> to vector<2x8xf32>
    %cst = arith.constant dense<0.000000e+00> : vector<2x160xf32>
    %11 = tpu.matmul %10, %3, %cst {dimension_numbers = #tpu.dot_dimension_numbers<[1], [0], [0], [1], [0, 0, 1, 1], [], []>} : vector<2x8xf32>, vector<8x160xf32>, vector<2x160xf32> -> vector<2x160xf32>
    %12 = vector.broadcast %6 : vector<1x160xf32> to vector<2x160xf32>
    %13 = arith.addf %11, %12 : vector<2x160xf32>
    %cst_15 = arith.constant dense<0.000000e+00> : vector<2x160xf32>
    %14 = tpu.matmul %7, %4, %cst_15 {dimension_numbers = #tpu.dot_dimension_numbers<[1], [0], [0], [1], [0, 0, 1, 1], [], []>} : vector<2x32xf32>, vector<32x160xf32>, vector<2x160xf32> -> vector<2x160xf32>
    %15 = arith.addf %13, %14 : vector<2x160xf32>
    %cst_16 = arith.constant dense<0.000000e+00> : vector<2x160xf32>
    %16 = tpu.matmul %8, %5, %cst_16 {dimension_numbers = #tpu.dot_dimension_numbers<[1], [0], [0], [1], [0, 0, 1, 1], [], []>} : vector<2x32xf32>, vector<32x160xf32>, vector<2x160xf32> -> vector<2x160xf32>
    %17 = arith.addf %15, %16 : vector<2x160xf32>
    %18 = vector.extract_strided_slice %17 {offsets = [0, 0], sizes = [2, 32], strides = [1, 1]} : vector<2x160xf32> to vector<2x32xf32>
    %19 = arith.negf %18 : vector<2x32xf32>
    %20 = math.exp %19 : vector<2x32xf32>
    %cst_17 = arith.constant 1.000000e+00 : f32
    %21 = vector.broadcast %cst_17 : f32 to vector<2x32xf32>
    %22 = arith.addf %21, %20 : vector<2x32xf32>
    %23 = arith.divf %21, %22 : vector<2x32xf32>
    %24 = vector.extract_strided_slice %17 {offsets = [0, 32], sizes = [2, 32], strides = [1, 1]} : vector<2x160xf32> to vector<2x32xf32>
    %25 = arith.negf %24 : vector<2x32xf32>
    %26 = math.exp %25 : vector<2x32xf32>
    %cst_18 = arith.constant 1.000000e+00 : f32
    %27 = vector.broadcast %cst_18 : f32 to vector<2x32xf32>
    %28 = arith.addf %27, %26 : vector<2x32xf32>
    %29 = arith.divf %27, %28 : vector<2x32xf32>
    %30 = vector.extract_strided_slice %17 {offsets = [0, 64], sizes = [2, 32], strides = [1, 1]} : vector<2x160xf32> to vector<2x32xf32>
    %31 = arith.negf %30 : vector<2x32xf32>
    %32 = math.exp %31 : vector<2x32xf32>
    %cst_19 = arith.constant 1.000000e+00 : f32
    %33 = vector.broadcast %cst_19 : f32 to vector<2x32xf32>
    %34 = arith.addf %33, %32 : vector<2x32xf32>
    %35 = arith.divf %33, %34 : vector<2x32xf32>
    %36 = vector.extract_strided_slice %17 {offsets = [0, 96], sizes = [2, 32], strides = [1, 1]} : vector<2x160xf32> to vector<2x32xf32>
    %37 = math.tanh %36 : vector<2x32xf32>
    %38 = arith.mulf %29, %8 : vector<2x32xf32>
    %39 = arith.mulf %23, %37 : vector<2x32xf32>
    %40 = arith.addf %38, %39 : vector<2x32xf32>
    %41 = math.tanh %40 : vector<2x32xf32>
    %42 = vector.extract_strided_slice %17 {offsets = [0, 128], sizes = [2, 32], strides = [1, 1]} : vector<2x160xf32> to vector<2x32xf32>
    %43 = arith.addf %41, %42 : vector<2x32xf32>
    %44 = arith.mulf %35, %43 : vector<2x32xf32>
    %c0_20 = arith.constant 0 : index
    %c0_21 = arith.constant 0 : index
    %c0_22 = arith.constant 0 : index
    %45 = vector.load %arg7[%c0_20, %c0_21, %c0_22] : memref<8x2x32xf32, #tpu.memory_space<vmem>>, vector<1x2x32xf32>
    %46 = vector.shape_cast %45 : vector<1x2x32xf32> to vector<2x32xf32>
    %47 = vector.shape_cast %44 : vector<2x32xf32> to vector<1x2x32xf32>
    tpu.vector_store %arg7[%c0_20, %c0_21, %c0_22], %47 {strides = array<i32>} : memref<8x2x32xf32, #tpu.memory_space<vmem>>, vector<1x2x32xf32>,
    %c1 = arith.constant 1 : index
    %c0_23 = arith.constant 0 : index
    %c0_24 = arith.constant 0 : index
    %48 = vector.load %arg2[%c1, %c0_23, %c0_24] : memref<8x2x8xf32, #tpu.memory_space<vmem>>, vector<1x2x8xf32>
    %49 = vector.shape_cast %48 : vector<1x2x8xf32> to vector<2x8xf32>
    %cst_25 = arith.constant dense<0.000000e+00> : vector<2x160xf32>
    %50 = tpu.matmul %49, %3, %cst_25 {dimension_numbers = #tpu.dot_dimension_numbers<[1], [0], [0], [1], [0, 0, 1, 1], [], []>} : vector<2x8xf32>, vector<8x160xf32>, vector<2x160xf32> -> vector<2x160xf32>
    %51 = vector.broadcast %6 : vector<1x160xf32> to vector<2x160xf32>
    %52 = arith.addf %50, %51 : vector<2x160xf32>
    %cst_26 = arith.constant dense<0.000000e+00> : vector<2x160xf32>
    %53 = tpu.matmul %44, %4, %cst_26 {dimension_numbers = #tpu.dot_dimension_numbers<[1], [0], [0], [1], [0, 0, 1, 1], [], []>} : vector<2x32xf32>, vector<32x160xf32>, vector<2x160xf32> -> vector<2x160xf32>
    %54 = arith.addf %52, %53 : vector<2x160xf32>
    %cst_27 = arith.constant dense<0.000000e+00> : vector<2x160xf32>
    %55 = tpu.matmul %40, %5, %cst_27 {dimension_numbers = #tpu.dot_dimension_numbers<[1], [0], [0], [1], [0, 0, 1, 1], [], []>} : vector<2x32xf32>, vector<32x160xf32>, vector<2x160xf32> -> vector<2x160xf32>
    %56 = arith.addf %54, %55 : vector<2x160xf32>
    %57 = vector.extract_strided_slice %56 {offsets = [0, 0], sizes = [2, 32], strides = [1, 1]} : vector<2x160xf32> to vector<2x32xf32>
    %58 = arith.negf %57 : vector<2x32xf32>
    %59 = math.exp %58 : vector<2x32xf32>
    %cst_28 = arith.constant 1.000000e+00 : f32
    %60 = vector.broadcast %cst_28 : f32 to vector<2x32xf32>
    %61 = arith.addf %60, %59 : vector<2x32xf32>
    %62 = arith.divf %60, %61 : vector<2x32xf32>
    %63 = vector.extract_strided_slice %56 {offsets = [0, 32], sizes = [2, 32], strides = [1, 1]} : vector<2x160xf32> to vector<2x32xf32>
    %64 = arith.negf %63 : vector<2x32xf32>
    %65 = math.exp %64 : vector<2x32xf32>
    %cst_29 = arith.constant 1.000000e+00 : f32
    %66 = vector.broadcast %cst_29 : f32 to vector<2x32xf32>
    %67 = arith.addf %66, %65 : vector<2x32xf32>
    %68 = arith.divf %66, %67 : vector<2x32xf32>
    %69 = vector.extract_strided_slice %56 {offsets = [0, 64], sizes = [2, 32], strides = [1, 1]} : vector<2x160xf32> to vector<2x32xf32>
    %70 = arith.negf %69 : vector<2x32xf32>
    %71 = math.exp %70 : vector<2x32xf32>
    %cst_30 = arith.constant 1.000000e+00 : f32
    %72 = vector.broadcast %cst_30 : f32 to vector<2x32xf32>
    %73 = arith.addf %72, %71 : vector<2x32xf32>
    %74 = arith.divf %72, %73 : vector<2x32xf32>
    %75 = vector.extract_strided_slice %56 {offsets = [0, 96], sizes = [2, 32], strides = [1, 1]} : vector<2x160xf32> to vector<2x32xf32>
    %76 = math.tanh %75 : vector<2x32xf32>
    %77 = arith.mulf %68, %40 : vector<2x32xf32>
    %78 = arith.mulf %62, %76 : vector<2x32xf32>
    %79 = arith.addf %77, %78 : vector<2x32xf32>
    %80 = math.tanh %79 : vector<2x32xf32>
    %81 = vector.extract_strided_slice %56 {offsets = [0, 128], sizes = [2, 32], strides = [1, 1]} : vector<2x160xf32> to vector<2x32xf32>
    %82 = arith.addf %80, %81 : vector<2x32xf32>
    %83 = arith.mulf %74, %82 : vector<2x32xf32>
    %c1_31 = arith.constant 1 : index
    %c0_32 = arith.constant 0 : index
    %c0_33 = arith.constant 0 : index
    %84 = vector.load %arg7[%c1_31, %c0_32, %c0_33] : memref<8x2x32xf32, #tpu.memory_space<vmem>>, vector<1x2x32xf32>
    %85 = vector.shape_cast %84 : vector<1x2x32xf32> to vector<2x32xf32>
    %86 = vector.shape_cast %83 : vector<2x32xf32> to vector<1x2x32xf32>
    tpu.vector_store %arg7[%c1_31, %c0_32, %c0_33], %86 {strides = array<i32>} : memref<8x2x32xf32, #tpu.memory_space<vmem>>, vector<1x2x32xf32>,
    %c2 = arith.constant 2 : index
    %c0_34 = arith.constant 0 : index
    %c0_35 = arith.constant 0 : index
    %87 = vector.load %arg2[%c2, %c0_34, %c0_35] : memref<8x2x8xf32, #tpu.memory_space<vmem>>, vector<1x2x8xf32>
    %88 = vector.shape_cast %87 : vector<1x2x8xf32> to vector<2x8xf32>
    %cst_36 = arith.constant dense<0.000000e+00> : vector<2x160xf32>
    %89 = tpu.matmul %88, %3, %cst_36 {dimension_numbers = #tpu.dot_dimension_numbers<[1], [0], [0], [1], [0, 0, 1, 1], [], []>} : vector<2x8xf32>, vector<8x160xf32>, vector<2x160xf32> -> vector<2x160xf32>
    %90 = vector.broadcast %6 : vector<1x160xf32> to vector<2x160xf32>
    %91 = arith.addf %89, %90 : vector<2x160xf32>
    %cst_37 = arith.constant dense<0.000000e+00> : vector<2x160xf32>
    %92 = tpu.matmul %83, %4, %cst_37 {dimension_numbers = #tpu.dot_dimension_numbers<[1], [0], [0], [1], [0, 0, 1, 1], [], []>} : vector<2x32xf32>, vector<32x160xf32>, vector<2x160xf32> -> vector<2x160xf32>
    %93 = arith.addf %91, %92 : vector<2x160xf32>
    %cst_38 = arith.constant dense<0.000000e+00> : vector<2x160xf32>
    %94 = tpu.matmul %79, %5, %cst_38 {dimension_numbers = #tpu.dot_dimension_numbers<[1], [0], [0], [1], [0, 0, 1, 1], [], []>} : vector<2x32xf32>, vector<32x160xf32>, vector<2x160xf32> -> vector<2x160xf32>
    %95 = arith.addf %93, %94 : vector<2x160xf32>
    %96 = vector.extract_strided_slice %95 {offsets = [0, 0], sizes = [2, 32], strides = [1, 1]} : vector<2x160xf32> to vector<2x32xf32>
    %97 = arith.negf %96 : vector<2x32xf32>
    %98 = math.exp %97 : vector<2x32xf32>
    %cst_39 = arith.constant 1.000000e+00 : f32
    %99 = vector.broadcast %cst_39 : f32 to vector<2x32xf32>
    %100 = arith.addf %99, %98 : vector<2x32xf32>
    %101 = arith.divf %99, %100 : vector<2x32xf32>
    %102 = vector.extract_strided_slice %95 {offsets = [0, 32], sizes = [2, 32], strides = [1, 1]} : vector<2x160xf32> to vector<2x32xf32>
    %103 = arith.negf %102 : vector<2x32xf32>
    %104 = math.exp %103 : vector<2x32xf32>
    %cst_40 = arith.constant 1.000000e+00 : f32
    %105 = vector.broadcast %cst_40 : f32 to vector<2x32xf32>
    %106 = arith.addf %105, %104 : vector<2x32xf32>
    %107 = arith.divf %105, %106 : vector<2x32xf32>
    %108 = vector.extract_strided_slice %95 {offsets = [0, 64], sizes = [2, 32], strides = [1, 1]} : vector<2x160xf32> to vector<2x32xf32>
    %109 = arith.negf %108 : vector<2x32xf32>
    %110 = math.exp %109 : vector<2x32xf32>
    %cst_41 = arith.constant 1.000000e+00 : f32
    %111 = vector.broadcast %cst_41 : f32 to vector<2x32xf32>
    %112 = arith.addf %111, %110 : vector<2x32xf32>
    %113 = arith.divf %111, %112 : vector<2x32xf32>
    %114 = vector.extract_strided_slice %95 {offsets = [0, 96], sizes = [2, 32], strides = [1, 1]} : vector<2x160xf32> to vector<2x32xf32>
    %115 = math.tanh %114 : vector<2x32xf32>
    %116 = arith.mulf %107, %79 : vector<2x32xf32>
    %117 = arith.mulf %101, %115 : vector<2x32xf32>
    %118 = arith.addf %116, %117 : vector<2x32xf32>
    %119 = math.tanh %118 : vector<2x32xf32>
    %120 = vector.extract_strided_slice %95 {offsets = [0, 128], sizes = [2, 32], strides = [1, 1]} : vector<2x160xf32> to vector<2x32xf32>
    %121 = arith.addf %119, %120 : vector<2x32xf32>
    %122 = arith.mulf %113, %121 : vector<2x32xf32>
    %c2_42 = arith.constant 2 : index
    %c0_43 = arith.constant 0 : index
    %c0_44 = arith.constant 0 : index
    %123 = vector.load %arg7[%c2_42, %c0_43, %c0_44] : memref<8x2x32xf32, #tpu.memory_space<vmem>>, vector<1x2x32xf32>
    %124 = vector.shape_cast %123 : vector<1x2x32xf32> to vector<2x32xf32>
    %125 = vector.shape_cast %122 : vector<2x32xf32> to vector<1x2x32xf32>
    tpu.vector_store %arg7[%c2_42, %c0_43, %c0_44], %125 {strides = array<i32>} : memref<8x2x32xf32, #tpu.memory_space<vmem>>, vector<1x2x32xf32>,
    %c3 = arith.constant 3 : index
    %c0_45 = arith.constant 0 : index
    %c0_46 = arith.constant 0 : index
    %126 = vector.load %arg2[%c3, %c0_45, %c0_46] : memref<8x2x8xf32, #tpu.memory_space<vmem>>, vector<1x2x8xf32>
    %127 = vector.shape_cast %126 : vector<1x2x8xf32> to vector<2x8xf32>
    %cst_47 = arith.constant dense<0.000000e+00> : vector<2x160xf32>
    %128 = tpu.matmul %127, %3, %cst_47 {dimension_numbers = #tpu.dot_dimension_numbers<[1], [0], [0], [1], [0, 0, 1, 1], [], []>} : vector<2x8xf32>, vector<8x160xf32>, vector<2x160xf32> -> vector<2x160xf32>
    %129 = vector.broadcast %6 : vector<1x160xf32> to vector<2x160xf32>
    %130 = arith.addf %128, %129 : vector<2x160xf32>
    %cst_48 = arith.constant dense<0.000000e+00> : vector<2x160xf32>
    %131 = tpu.matmul %122, %4, %cst_48 {dimension_numbers = #tpu.dot_dimension_numbers<[1], [0], [0], [1], [0, 0, 1, 1], [], []>} : vector<2x32xf32>, vector<32x160xf32>, vector<2x160xf32> -> vector<2x160xf32>
    %132 = arith.addf %130, %131 : vector<2x160xf32>
    %cst_49 = arith.constant dense<0.000000e+00> : vector<2x160xf32>
    %133 = tpu.matmul %118, %5, %cst_49 {dimension_numbers = #tpu.dot_dimension_numbers<[1], [0], [0], [1], [0, 0, 1, 1], [], []>} : vector<2x32xf32>, vector<32x160xf32>, vector<2x160xf32> -> vector<2x160xf32>
    %134 = arith.addf %132, %133 : vector<2x160xf32>
    %135 = vector.extract_strided_slice %134 {offsets = [0, 0], sizes = [2, 32], strides = [1, 1]} : vector<2x160xf32> to vector<2x32xf32>
    %136 = arith.negf %135 : vector<2x32xf32>
    %137 = math.exp %136 : vector<2x32xf32>
    %cst_50 = arith.constant 1.000000e+00 : f32
    %138 = vector.broadcast %cst_50 : f32 to vector<2x32xf32>
    %139 = arith.addf %138, %137 : vector<2x32xf32>
    %140 = arith.divf %138, %139 : vector<2x32xf32>
    %141 = vector.extract_strided_slice %134 {offsets = [0, 32], sizes = [2, 32], strides = [1, 1]} : vector<2x160xf32> to vector<2x32xf32>
    %142 = arith.negf %141 : vector<2x32xf32>
    %143 = math.exp %142 : vector<2x32xf32>
    %cst_51 = arith.constant 1.000000e+00 : f32
    %144 = vector.broadcast %cst_51 : f32 to vector<2x32xf32>
    %145 = arith.addf %144, %143 : vector<2x32xf32>
    %146 = arith.divf %144, %145 : vector<2x32xf32>
    %147 = vector.extract_strided_slice %134 {offsets = [0, 64], sizes = [2, 32], strides = [1, 1]} : vector<2x160xf32> to vector<2x32xf32>
    %148 = arith.negf %147 : vector<2x32xf32>
    %149 = math.exp %148 : vector<2x32xf32>
    %cst_52 = arith.constant 1.000000e+00 : f32
    %150 = vector.broadcast %cst_52 : f32 to vector<2x32xf32>
    %151 = arith.addf %150, %149 : vector<2x32xf32>
    %152 = arith.divf %150, %151 : vector<2x32xf32>
    %153 = vector.extract_strided_slice %134 {offsets = [0, 96], sizes = [2, 32], strides = [1, 1]} : vector<2x160xf32> to vector<2x32xf32>
    %154 = math.tanh %153 : vector<2x32xf32>
    %155 = arith.mulf %146, %118 : vector<2x32xf32>
    %156 = arith.mulf %140, %154 : vector<2x32xf32>
    %157 = arith.addf %155, %156 : vector<2x32xf32>
    %158 = math.tanh %157 : vector<2x32xf32>
    %159 = vector.extract_strided_slice %134 {offsets = [0, 128], sizes = [2, 32], strides = [1, 1]} : vector<2x160xf32> to vector<2x32xf32>
    %160 = arith.addf %158, %159 : vector<2x32xf32>
    %161 = arith.mulf %152, %160 : vector<2x32xf32>
    %c3_53 = arith.constant 3 : index
    %c0_54 = arith.constant 0 : index
    %c0_55 = arith.constant 0 : index
    %162 = vector.load %arg7[%c3_53, %c0_54, %c0_55] : memref<8x2x32xf32, #tpu.memory_space<vmem>>, vector<1x2x32xf32>
    %163 = vector.shape_cast %162 : vector<1x2x32xf32> to vector<2x32xf32>
    %164 = vector.shape_cast %161 : vector<2x32xf32> to vector<1x2x32xf32>
    tpu.vector_store %arg7[%c3_53, %c0_54, %c0_55], %164 {strides = array<i32>} : memref<8x2x32xf32, #tpu.memory_space<vmem>>, vector<1x2x32xf32>,
    %c4 = arith.constant 4 : index
    %c0_56 = arith.constant 0 : index
    %c0_57 = arith.constant 0 : index
    %165 = vector.load %arg2[%c4, %c0_56, %c0_57] : memref<8x2x8xf32, #tpu.memory_space<vmem>>, vector<1x2x8xf32>
    %166 = vector.shape_cast %165 : vector<1x2x8xf32> to vector<2x8xf32>
    %cst_58 = arith.constant dense<0.000000e+00> : vector<2x160xf32>
    %167 = tpu.matmul %166, %3, %cst_58 {dimension_numbers = #tpu.dot_dimension_numbers<[1], [0], [0], [1], [0, 0, 1, 1], [], []>} : vector<2x8xf32>, vector<8x160xf32>, vector<2x160xf32> -> vector<2x160xf32>
    %168 = vector.broadcast %6 : vector<1x160xf32> to vector<2x160xf32>
    %169 = arith.addf %167, %168 : vector<2x160xf32>
    %cst_59 = arith.constant dense<0.000000e+00> : vector<2x160xf32>
    %170 = tpu.matmul %161, %4, %cst_59 {dimension_numbers = #tpu.dot_dimension_numbers<[1], [0], [0], [1], [0, 0, 1, 1], [], []>} : vector<2x32xf32>, vector<32x160xf32>, vector<2x160xf32> -> vector<2x160xf32>
    %171 = arith.addf %169, %170 : vector<2x160xf32>
    %cst_60 = arith.constant dense<0.000000e+00> : vector<2x160xf32>
    %172 = tpu.matmul %157, %5, %cst_60 {dimension_numbers = #tpu.dot_dimension_numbers<[1], [0], [0], [1], [0, 0, 1, 1], [], []>} : vector<2x32xf32>, vector<32x160xf32>, vector<2x160xf32> -> vector<2x160xf32>
    %173 = arith.addf %171, %172 : vector<2x160xf32>
    %174 = vector.extract_strided_slice %173 {offsets = [0, 0], sizes = [2, 32], strides = [1, 1]} : vector<2x160xf32> to vector<2x32xf32>
    %175 = arith.negf %174 : vector<2x32xf32>
    %176 = math.exp %175 : vector<2x32xf32>
    %cst_61 = arith.constant 1.000000e+00 : f32
    %177 = vector.broadcast %cst_61 : f32 to vector<2x32xf32>
    %178 = arith.addf %177, %176 : vector<2x32xf32>
    %179 = arith.divf %177, %178 : vector<2x32xf32>
    %180 = vector.extract_strided_slice %173 {offsets = [0, 32], sizes = [2, 32], strides = [1, 1]} : vector<2x160xf32> to vector<2x32xf32>
    %181 = arith.negf %180 : vector<2x32xf32>
    %182 = math.exp %181 : vector<2x32xf32>
    %cst_62 = arith.constant 1.000000e+00 : f32
    %183 = vector.broadcast %cst_62 : f32 to vector<2x32xf32>
    %184 = arith.addf %183, %182 : vector<2x32xf32>
    %185 = arith.divf %183, %184 : vector<2x32xf32>
    %186 = vector.extract_strided_slice %173 {offsets = [0, 64], sizes = [2, 32], strides = [1, 1]} : vector<2x160xf32> to vector<2x32xf32>
    %187 = arith.negf %186 : vector<2x32xf32>
    %188 = math.exp %187 : vector<2x32xf32>
    %cst_63 = arith.constant 1.000000e+00 : f32
    %189 = vector.broadcast %cst_63 : f32 to vector<2x32xf32>
    %190 = arith.addf %189, %188 : vector<2x32xf32>
    %191 = arith.divf %189, %190 : vector<2x32xf32>
    %192 = vector.extract_strided_slice %173 {offsets = [0, 96], sizes = [2, 32], strides = [1, 1]} : vector<2x160xf32> to vector<2x32xf32>
    %193 = math.tanh %192 : vector<2x32xf32>
    %194 = arith.mulf %185, %157 : vector<2x32xf32>
    %195 = arith.mulf %179, %193 : vector<2x32xf32>
    %196 = arith.addf %194, %195 : vector<2x32xf32>
    %197 = math.tanh %196 : vector<2x32xf32>
    %198 = vector.extract_strided_slice %173 {offsets = [0, 128], sizes = [2, 32], strides = [1, 1]} : vector<2x160xf32> to vector<2x32xf32>
    %199 = arith.addf %197, %198 : vector<2x32xf32>
    %200 = arith.mulf %191, %199 : vector<2x32xf32>
    %c4_64 = arith.constant 4 : index
    %c0_65 = arith.constant 0 : index
    %c0_66 = arith.constant 0 : index
    %201 = vector.load %arg7[%c4_64, %c0_65, %c0_66] : memref<8x2x32xf32, #tpu.memory_space<vmem>>, vector<1x2x32xf32>
    %202 = vector.shape_cast %201 : vector<1x2x32xf32> to vector<2x32xf32>
    %203 = vector.shape_cast %200 : vector<2x32xf32> to vector<1x2x32xf32>
    tpu.vector_store %arg7[%c4_64, %c0_65, %c0_66], %203 {strides = array<i32>} : memref<8x2x32xf32, #tpu.memory_space<vmem>>, vector<1x2x32xf32>,
    %c5 = arith.constant 5 : index
    %c0_67 = arith.constant 0 : index
    %c0_68 = arith.constant 0 : index
    %204 = vector.load %arg2[%c5, %c0_67, %c0_68] : memref<8x2x8xf32, #tpu.memory_space<vmem>>, vector<1x2x8xf32>
    %205 = vector.shape_cast %204 : vector<1x2x8xf32> to vector<2x8xf32>
    %cst_69 = arith.constant dense<0.000000e+00> : vector<2x160xf32>
    %206 = tpu.matmul %205, %3, %cst_69 {dimension_numbers = #tpu.dot_dimension_numbers<[1], [0], [0], [1], [0, 0, 1, 1], [], []>} : vector<2x8xf32>, vector<8x160xf32>, vector<2x160xf32> -> vector<2x160xf32>
    %207 = vector.broadcast %6 : vector<1x160xf32> to vector<2x160xf32>
    %208 = arith.addf %206, %207 : vector<2x160xf32>
    %cst_70 = arith.constant dense<0.000000e+00> : vector<2x160xf32>
    %209 = tpu.matmul %200, %4, %cst_70 {dimension_numbers = #tpu.dot_dimension_numbers<[1], [0], [0], [1], [0, 0, 1, 1], [], []>} : vector<2x32xf32>, vector<32x160xf32>, vector<2x160xf32> -> vector<2x160xf32>
    %210 = arith.addf %208, %209 : vector<2x160xf32>
    %cst_71 = arith.constant dense<0.000000e+00> : vector<2x160xf32>
    %211 = tpu.matmul %196, %5, %cst_71 {dimension_numbers = #tpu.dot_dimension_numbers<[1], [0], [0], [1], [0, 0, 1, 1], [], []>} : vector<2x32xf32>, vector<32x160xf32>, vector<2x160xf32> -> vector<2x160xf32>
    %212 = arith.addf %210, %211 : vector<2x160xf32>
    %213 = vector.extract_strided_slice %212 {offsets = [0, 0], sizes = [2, 32], strides = [1, 1]} : vector<2x160xf32> to vector<2x32xf32>
    %214 = arith.negf %213 : vector<2x32xf32>
    %215 = math.exp %214 : vector<2x32xf32>
    %cst_72 = arith.constant 1.000000e+00 : f32
    %216 = vector.broadcast %cst_72 : f32 to vector<2x32xf32>
    %217 = arith.addf %216, %215 : vector<2x32xf32>
    %218 = arith.divf %216, %217 : vector<2x32xf32>
    %219 = vector.extract_strided_slice %212 {offsets = [0, 32], sizes = [2, 32], strides = [1, 1]} : vector<2x160xf32> to vector<2x32xf32>
    %220 = arith.negf %219 : vector<2x32xf32>
    %221 = math.exp %220 : vector<2x32xf32>
    %cst_73 = arith.constant 1.000000e+00 : f32
    %222 = vector.broadcast %cst_73 : f32 to vector<2x32xf32>
    %223 = arith.addf %222, %221 : vector<2x32xf32>
    %224 = arith.divf %222, %223 : vector<2x32xf32>
    %225 = vector.extract_strided_slice %212 {offsets = [0, 64], sizes = [2, 32], strides = [1, 1]} : vector<2x160xf32> to vector<2x32xf32>
    %226 = arith.negf %225 : vector<2x32xf32>
    %227 = math.exp %226 : vector<2x32xf32>
    %cst_74 = arith.constant 1.000000e+00 : f32
    %228 = vector.broadcast %cst_74 : f32 to vector<2x32xf32>
    %229 = arith.addf %228, %227 : vector<2x32xf32>
    %230 = arith.divf %228, %229 : vector<2x32xf32>
    %231 = vector.extract_strided_slice %212 {offsets = [0, 96], sizes = [2, 32], strides = [1, 1]} : vector<2x160xf32> to vector<2x32xf32>
    %232 = math.tanh %231 : vector<2x32xf32>
    %233 = arith.mulf %224, %196 : vector<2x32xf32>
    %234 = arith.mulf %218, %232 : vector<2x32xf32>
    %235 = arith.addf %233, %234 : vector<2x32xf32>
    %236 = math.tanh %235 : vector<2x32xf32>
    %237 = vector.extract_strided_slice %212 {offsets = [0, 128], sizes = [2, 32], strides = [1, 1]} : vector<2x160xf32> to vector<2x32xf32>
    %238 = arith.addf %236, %237 : vector<2x32xf32>
    %239 = arith.mulf %230, %238 : vector<2x32xf32>
    %c5_75 = arith.constant 5 : index
    %c0_76 = arith.constant 0 : index
    %c0_77 = arith.constant 0 : index
    %240 = vector.load %arg7[%c5_75, %c0_76, %c0_77] : memref<8x2x32xf32, #tpu.memory_space<vmem>>, vector<1x2x32xf32>
    %241 = vector.shape_cast %240 : vector<1x2x32xf32> to vector<2x32xf32>
    %242 = vector.shape_cast %239 : vector<2x32xf32> to vector<1x2x32xf32>
    tpu.vector_store %arg7[%c5_75, %c0_76, %c0_77], %242 {strides = array<i32>} : memref<8x2x32xf32, #tpu.memory_space<vmem>>, vector<1x2x32xf32>,
    %c6 = arith.constant 6 : index
    %c0_78 = arith.constant 0 : index
    %c0_79 = arith.constant 0 : index
    %243 = vector.load %arg2[%c6, %c0_78, %c0_79] : memref<8x2x8xf32, #tpu.memory_space<vmem>>, vector<1x2x8xf32>
    %244 = vector.shape_cast %243 : vector<1x2x8xf32> to vector<2x8xf32>
    %cst_80 = arith.constant dense<0.000000e+00> : vector<2x160xf32>
    %245 = tpu.matmul %244, %3, %cst_80 {dimension_numbers = #tpu.dot_dimension_numbers<[1], [0], [0], [1], [0, 0, 1, 1], [], []>} : vector<2x8xf32>, vector<8x160xf32>, vector<2x160xf32> -> vector<2x160xf32>
    %246 = vector.broadcast %6 : vector<1x160xf32> to vector<2x160xf32>
    %247 = arith.addf %245, %246 : vector<2x160xf32>
    %cst_81 = arith.constant dense<0.000000e+00> : vector<2x160xf32>
    %248 = tpu.matmul %239, %4, %cst_81 {dimension_numbers = #tpu.dot_dimension_numbers<[1], [0], [0], [1], [0, 0, 1, 1], [], []>} : vector<2x32xf32>, vector<32x160xf32>, vector<2x160xf32> -> vector<2x160xf32>
    %249 = arith.addf %247, %248 : vector<2x160xf32>
    %cst_82 = arith.constant dense<0.000000e+00> : vector<2x160xf32>
    %250 = tpu.matmul %235, %5, %cst_82 {dimension_numbers = #tpu.dot_dimension_numbers<[1], [0], [0], [1], [0, 0, 1, 1], [], []>} : vector<2x32xf32>, vector<32x160xf32>, vector<2x160xf32> -> vector<2x160xf32>
    %251 = arith.addf %249, %250 : vector<2x160xf32>
    %252 = vector.extract_strided_slice %251 {offsets = [0, 0], sizes = [2, 32], strides = [1, 1]} : vector<2x160xf32> to vector<2x32xf32>
    %253 = arith.negf %252 : vector<2x32xf32>
    %254 = math.exp %253 : vector<2x32xf32>
    %cst_83 = arith.constant 1.000000e+00 : f32
    %255 = vector.broadcast %cst_83 : f32 to vector<2x32xf32>
    %256 = arith.addf %255, %254 : vector<2x32xf32>
    %257 = arith.divf %255, %256 : vector<2x32xf32>
    %258 = vector.extract_strided_slice %251 {offsets = [0, 32], sizes = [2, 32], strides = [1, 1]} : vector<2x160xf32> to vector<2x32xf32>
    %259 = arith.negf %258 : vector<2x32xf32>
    %260 = math.exp %259 : vector<2x32xf32>
    %cst_84 = arith.constant 1.000000e+00 : f32
    %261 = vector.broadcast %cst_84 : f32 to vector<2x32xf32>
    %262 = arith.addf %261, %260 : vector<2x32xf32>
    %263 = arith.divf %261, %262 : vector<2x32xf32>
    %264 = vector.extract_strided_slice %251 {offsets = [0, 64], sizes = [2, 32], strides = [1, 1]} : vector<2x160xf32> to vector<2x32xf32>
    %265 = arith.negf %264 : vector<2x32xf32>
    %266 = math.exp %265 : vector<2x32xf32>
    %cst_85 = arith.constant 1.000000e+00 : f32
    %267 = vector.broadcast %cst_85 : f32 to vector<2x32xf32>
    %268 = arith.addf %267, %266 : vector<2x32xf32>
    %269 = arith.divf %267, %268 : vector<2x32xf32>
    %270 = vector.extract_strided_slice %251 {offsets = [0, 96], sizes = [2, 32], strides = [1, 1]} : vector<2x160xf32> to vector<2x32xf32>
    %271 = math.tanh %270 : vector<2x32xf32>
    %272 = arith.mulf %263, %235 : vector<2x32xf32>
    %273 = arith.mulf %257, %271 : vector<2x32xf32>
    %274 = arith.addf %272, %273 : vector<2x32xf32>
    %275 = math.tanh %274 : vector<2x32xf32>
    %276 = vector.extract_strided_slice %251 {offsets = [0, 128], sizes = [2, 32], strides = [1, 1]} : vector<2x160xf32> to vector<2x32xf32>
    %277 = arith.addf %275, %276 : vector<2x32xf32>
    %278 = arith.mulf %269, %277 : vector<2x32xf32>
    %c6_86 = arith.constant 6 : index
    %c0_87 = arith.constant 0 : index
    %c0_88 = arith.constant 0 : index
    %279 = vector.load %arg7[%c6_86, %c0_87, %c0_88] : memref<8x2x32xf32, #tpu.memory_space<vmem>>, vector<1x2x32xf32>
    %280 = vector.shape_cast %279 : vector<1x2x32xf32> to vector<2x32xf32>
    %281 = vector.shape_cast %278 : vector<2x32xf32> to vector<1x2x32xf32>
    tpu.vector_store %arg7[%c6_86, %c0_87, %c0_88], %281 {strides = array<i32>} : memref<8x2x32xf32, #tpu.memory_space<vmem>>, vector<1x2x32xf32>,
    %c7 = arith.constant 7 : index
    %c0_89 = arith.constant 0 : index
    %c0_90 = arith.constant 0 : index
    %282 = vector.load %arg2[%c7, %c0_89, %c0_90] : memref<8x2x8xf32, #tpu.memory_space<vmem>>, vector<1x2x8xf32>
    %283 = vector.shape_cast %282 : vector<1x2x8xf32> to vector<2x8xf32>
    %cst_91 = arith.constant dense<0.000000e+00> : vector<2x160xf32>
    %284 = tpu.matmul %283, %3, %cst_91 {dimension_numbers = #tpu.dot_dimension_numbers<[1], [0], [0], [1], [0, 0, 1, 1], [], []>} : vector<2x8xf32>, vector<8x160xf32>, vector<2x160xf32> -> vector<2x160xf32>
    %285 = vector.broadcast %6 : vector<1x160xf32> to vector<2x160xf32>
    %286 = arith.addf %284, %285 : vector<2x160xf32>
    %cst_92 = arith.constant dense<0.000000e+00> : vector<2x160xf32>
    %287 = tpu.matmul %278, %4, %cst_92 {dimension_numbers = #tpu.dot_dimension_numbers<[1], [0], [0], [1], [0, 0, 1, 1], [], []>} : vector<2x32xf32>, vector<32x160xf32>, vector<2x160xf32> -> vector<2x160xf32>
    %288 = arith.addf %286, %287 : vector<2x160xf32>
    %cst_93 = arith.constant dense<0.000000e+00> : vector<2x160xf32>
    %289 = tpu.matmul %274, %5, %cst_93 {dimension_numbers = #tpu.dot_dimension_numbers<[1], [0], [0], [1], [0, 0, 1, 1], [], []>} : vector<2x32xf32>, vector<32x160xf32>, vector<2x160xf32> -> vector<2x160xf32>
    %290 = arith.addf %288, %289 : vector<2x160xf32>
    %291 = vector.extract_strided_slice %290 {offsets = [0, 0], sizes = [2, 32], strides = [1, 1]} : vector<2x160xf32> to vector<2x32xf32>
    %292 = arith.negf %291 : vector<2x32xf32>
    %293 = math.exp %292 : vector<2x32xf32>
    %cst_94 = arith.constant 1.000000e+00 : f32
    %294 = vector.broadcast %cst_94 : f32 to vector<2x32xf32>
    %295 = arith.addf %294, %293 : vector<2x32xf32>
    %296 = arith.divf %294, %295 : vector<2x32xf32>
    %297 = vector.extract_strided_slice %290 {offsets = [0, 32], sizes = [2, 32], strides = [1, 1]} : vector<2x160xf32> to vector<2x32xf32>
    %298 = arith.negf %297 : vector<2x32xf32>
    %299 = math.exp %298 : vector<2x32xf32>
    %cst_95 = arith.constant 1.000000e+00 : f32
    %300 = vector.broadcast %cst_95 : f32 to vector<2x32xf32>
    %301 = arith.addf %300, %299 : vector<2x32xf32>
    %302 = arith.divf %300, %301 : vector<2x32xf32>
    %303 = vector.extract_strided_slice %290 {offsets = [0, 64], sizes = [2, 32], strides = [1, 1]} : vector<2x160xf32> to vector<2x32xf32>
    %304 = arith.negf %303 : vector<2x32xf32>
    %305 = math.exp %304 : vector<2x32xf32>
    %cst_96 = arith.constant 1.000000e+00 : f32
    %306 = vector.broadcast %cst_96 : f32 to vector<2x32xf32>
    %307 = arith.addf %306, %305 : vector<2x32xf32>
    %308 = arith.divf %306, %307 : vector<2x32xf32>
    %309 = vector.extract_strided_slice %290 {offsets = [0, 96], sizes = [2, 32], strides = [1, 1]} : vector<2x160xf32> to vector<2x32xf32>
    %310 = math.tanh %309 : vector<2x32xf32>
    %311 = arith.mulf %302, %274 : vector<2x32xf32>
    %312 = arith.mulf %296, %310 : vector<2x32xf32>
    %313 = arith.addf %311, %312 : vector<2x32xf32>
    %314 = math.tanh %313 : vector<2x32xf32>
    %315 = vector.extract_strided_slice %290 {offsets = [0, 128], sizes = [2, 32], strides = [1, 1]} : vector<2x160xf32> to vector<2x32xf32>
    %316 = arith.addf %314, %315 : vector<2x32xf32>
    %317 = arith.mulf %308, %316 : vector<2x32xf32>
    %c7_97 = arith.constant 7 : index
    %c0_98 = arith.constant 0 : index
    %c0_99 = arith.constant 0 : index
    %318 = vector.load %arg7[%c7_97, %c0_98, %c0_99] : memref<8x2x32xf32, #tpu.memory_space<vmem>>, vector<1x2x32xf32>
    %319 = vector.shape_cast %318 : vector<1x2x32xf32> to vector<2x32xf32>
    %320 = vector.shape_cast %317 : vector<2x32xf32> to vector<1x2x32xf32>
    tpu.vector_store %arg7[%c7_97, %c0_98, %c0_99], %320 {strides = array<i32>} : memref<8x2x32xf32, #tpu.memory_space<vmem>>, vector<1x2x32xf32>,
    %c0_100 = arith.constant 0 : index
    %c0_101 = arith.constant 0 : index
    %321 = vector.load %arg8[%c0_100, %c0_101] : memref<2x32xf32, #tpu.memory_space<vmem>>, vector<2x32xf32>
    tpu.vector_store %arg8[%c0_100, %c0_101], %317 {strides = array<i32>} : memref<2x32xf32, #tpu.memory_space<vmem>>, vector<2x32xf32>,
    %c0_102 = arith.constant 0 : index
    %c0_103 = arith.constant 0 : index
    %322 = vector.load %arg9[%c0_102, %c0_103] : memref<2x32xf32, #tpu.memory_space<vmem>>, vector<2x32xf32>
    tpu.vector_store %arg9[%c0_102, %c0_103], %313 {strides = array<i32>} : memref<2x32xf32, #tpu.memory_space<vmem>>, vector<2x32xf32>,
    return
  }
  func.func @transform_0(%arg0: i32, %arg1: i32) -> (i32, i32, i32) {
    %c0_i32 = arith.constant 0 : i32
    %c0_i32_0 = arith.constant 0 : i32
    return %arg1, %arg0, %c0_i32 : i32, i32, i32
  }
  func.func @transform_1(%arg0: i32, %arg1: i32) -> (i32, i32) {
    %c0_i32 = arith.constant 0 : i32
    %c0_i32_0 = arith.constant 0 : i32
    %c0_i32_1 = arith.constant 0 : i32
    return %c0_i32, %c0_i32_0 : i32, i32
  }
  func.func @transform_2(%arg0: i32, %arg1: i32) -> (i32, i32) {
    %c0_i32 = arith.constant 0 : i32
    %c0_i32_0 = arith.constant 0 : i32
    %c0_i32_1 = arith.constant 0 : i32
    return %c0_i32, %c0_i32_0 : i32, i32
  }
  func.func @transform_3(%arg0: i32, %arg1: i32) -> (i32, i32) {
    %c0_i32 = arith.constant 0 : i32
    %c0_i32_0 = arith.constant 0 : i32
    %c0_i32_1 = arith.constant 0 : i32
    return %c0_i32, %c0_i32_0 : i32, i32
  }
  func.func @transform_4(%arg0: i32, %arg1: i32) -> (i32, i32) {
    %c0_i32 = arith.constant 0 : i32
    %c0_i32_0 = arith.constant 0 : i32
    %c0_i32_1 = arith.constant 0 : i32
    return %c0_i32, %c0_i32_0 : i32, i32
  }
  func.func @transform_5(%arg0: i32, %arg1: i32) -> (i32, i32, i32) {
    %c0_i32 = arith.constant 0 : i32
    %c0_i32_0 = arith.constant 0 : i32
    return %arg1, %arg0, %c0_i32 : i32, i32, i32
  }
}

</mosaic_0001>

<llo_original>
// kernel: rnn_forward.5
$region0: #{rnn_forward.5}
  #allocation0 [shape = 'u32[]', space=smem, size = 0x4, offset = 0x4, fixed_abs, tag = 'smem constant byte address 0x4 - core index']
  #allocation1 [shape = 'u32[144,128]{1,0:T(1,128)}', space=vmem, size = 0x12000, scoped, tag = 'internal scratch']
  %s0 = inlined_call_operand.vmem [shape: f32[16,32], index: 0, kind: input, shape index: {}]
  %s1 = inlined_call_operand.vmem [shape: f32[32,32], index: 1, kind: input, shape index: {}]
  %s2 = inlined_call_operand.vmem [shape: f32[1,32], index: 2, kind: input, shape index: {}]
  %s3 = inlined_call_operand.vmem [shape: f32[32,4], index: 3, kind: input, shape index: {}]
  %s4 = inlined_call_operand.vmem [shape: f32[1,4], index: 4, kind: input, shape index: {}]
  %s5 = inlined_call_operand.vmem [shape: f32[16,4], index: 5, kind: output, shape index: {}]
  %s6 = sld [smem:[#allocation0]]
  $region30: #{rnn_forward.5} parent=0
    _
  %s8 = ssub.s32 1, %s6
  %s9 = scalar_select 0, %s8, %s6
  // Predicated region
  $region2: #{rnn_forward.5} parent=0 // pred_check
    _
  $region3: #{rnn_forward.5} parent=0 // pred_check_branch
    %11 = sbr.rel (0) target = $region5
  $region4: #{rnn_forward.5} parent=0 // pred_region
    _
  $region5: #{rnn_forward.5} parent=0 // pred_fallthru
    _
  // Predicated region
  $region6: #{rnn_forward.5} parent=0 // pred_check
    _
  $region7: #{rnn_forward.5} parent=0 // pred_check_branch
    %13 = sbr.rel (0) target = $region9
  $region8: #{rnn_forward.5} parent=0 // pred_region
    _
  $region9: #{rnn_forward.5} parent=0 // pred_fallthru
    _
  // Predicated region
  $region10: #{rnn_forward.5} parent=0 // pred_check
    _
  $region11: #{rnn_forward.5} parent=0 // pred_check_branch
    %15 = sbr.rel (0) target = $region13
  $region12: #{rnn_forward.5} parent=0 // pred_region
    _
  $region13: #{rnn_forward.5} parent=0 // pred_fallthru
    _
  // Predicated region
  $region14: #{rnn_forward.5} parent=0 // pred_check
    _
  $region15: #{rnn_forward.5} parent=0 // pred_check_branch
    %17 = sbr.rel (0) target = $region17
  $region16: #{rnn_forward.5} parent=0 // pred_region
    _
  $region17: #{rnn_forward.5} parent=0 // pred_fallthru
    _
  // Predicated region
  $region18: #{rnn_forward.5} parent=0 // pred_check
    _
  $region19: #{rnn_forward.5} parent=0 // pred_check_branch
    %19 = sbr.rel (0) target = $region21
  $region20: #{rnn_forward.5} parent=0 // pred_region
    _
  $region21: #{rnn_forward.5} parent=0 // pred_fallthru
    _
  %v20 = vld [vmem:[%s0] sm:$0xff]
  %v21 = vld [vmem:[%s0 + $0x8] sm:$0xff]
  %v22 = vld [vmem:[%s1] sm:$0xff]
  %v23 = vld [vmem:[%s1 + $0x8] sm:$0xff]
  %v24 = vld [vmem:[%s1 + $0x10] sm:$0xff]
  %v25 = vld [vmem:[%s1 + $0x18] sm:$0xff]
  %v26 = vld [vmem:[%s2] sm:$0x1]
  %v28 = vlaneseq
  %v29 = vshrl.u32 %v28, 7
  %v30 = vsub.s32 0, %v29
  %v31 = vrot.slane %v26, %v30
  %vm33 = vcmask 261120
  %v35 = vsel %vm33, %v20, 0
  %v38 = vsel %vm33, %v21, 0
  %40 = vmatprep.subr.mxu0 0.0
  %41 = vmatpush1.msra.mxu0 %v22
  %42 = vmatprep.subr.mxu0 0.0
  %43 = vmatpush1.msra.mxu0 %v23
  %44 = vmatprep.subr.mxu0 0.0
  %45 = vmatpush1.msra.mxu0 %v24
  %46 = vmatprep.subr.mxu0 0.0
  %47 = vmatpush1.msra.mxu0 %v25
  %48 = vmatprep.subr.mxu0 0.0
  %49 = vmatpush1.msra.mxu0 0.0
  %50 = vmatprep.subr.mxu0 0.0
  %51 = vmatpush1.msra.mxu0 0.0
  %52 = vmatprep.subr.mxu0 0.0
  %53 = vmatpush1.msra.mxu0 0.0
  %54 = vmatprep.subr.mxu0 0.0
  %55 = vmatpush1.msra.mxu0 0.0
  %56 = vmatprep.subr.mxu0 0.0
  %57 = vmatpush1.msra.mxu0 0.0
  %58 = vmatprep.subr.mxu0 0.0
  %59 = vmatpush1.msra.mxu0 0.0
  %60 = vmatprep.subr.mxu0 0.0
  %61 = vmatpush1.msra.mxu0 0.0
  %62 = vmatprep.subr.mxu0 0.0
  %63 = vmatpush1.msra.mxu0 0.0
  %64 = vmatprep.subr.mxu0 0.0
  %65 = vmatpush1.msra.mxu0 0.0
  %66 = vmatprep.subr.mxu0 0.0
  %67 = vmatpush1.msra.mxu0 0.0
  %68 = vmatprep.subr.mxu0 0.0
  %69 = vmatpush1.msra.mxu0 0.0
  %70 = vmatprep.subr.mxu0 0.0
  %71 = vmatpush1.msra.mxu0 0.0
  %72 = vmatprep.subr.mxu0 0.0
  %73 = vmatpush1.msra.mxu0 0.0
  %74 = vmatprep.subr.mxu0 0.0
  %75 = vmatpush1.msra.mxu0 0.0
  %76 = vmatprep.subr.mxu0 0.0
  %77 = vmatpush1.msra.mxu0 0.0
  %78 = vmatprep.subr.mxu0 0.0
  %79 = vmatpush1.msra.mxu0 0.0
  %80 = vmatprep.subr.mxu0 0.0
  %81 = vmatpush1.msra.mxu0 0.0
  %82 = vmatprep.subr.mxu0 0.0
  %83 = vmatpush1.msra.mxu0 0.0
  %84 = vmatprep.subr.mxu0 0.0
  %85 = vmatpush1.msra.mxu0 0.0
  %86 = vmatprep.subr.mxu0 0.0
  %87 = vmatpush1.msra.mxu0 0.0
  %88 = vmatprep.subr.mxu0 0.0
  %89 = vmatpush1.msra.mxu0 0.0
  %90 = vmatprep.subr.mxu0 0.0
  %91 = vmatpush1.msra.mxu0 0.0
  %92 = vmatprep.subr.mxu0 0.0
  %93 = vmatpush1.msra.mxu0 0.0
  %94 = vmatprep.subr.mxu0 0.0
  %95 = vmatpush1.msra.mxu0 0.0
  %96 = vmatprep.subr.mxu0 0.0
  %97 = vmatpush1.msra.mxu0 0.0
  %98 = vmatprep.subr.mxu0 0.0
  %99 = vmatpush1.msra.mxu0 0.0
  %100 = vmatprep.subr.mxu0 0.0
  %101 = vmatpush1.msra.mxu0 0.0
  %102 = vmatprep.subr.mxu0 0.0
  %103 = vmatpush1.msra.mxu0 0.0
  %104 = vmatprep.mubr.f32.mxu0 0.0
  %105 = vmatmul.mubr.f32.gmra.mrb[0].mxu0 %v35
  %v106 = vpop.f32.mrb[0].mxu0
  %v107 = vadd.f32 %v31, %v106
  %v108 = vpop.f32.mrb[0].mxu0
  %109 = vmatprep.mubr.f32.mxu0 0.0
  %110 = vmatmul.mubr.f32.gmra.mrb[0].mxu0 %v38
  %v111 = vpop.f32.mrb[0].mxu0
  %v112 = vadd.f32 %v31, %v111
  %v113 = vpop.f32.mrb[0].mxu0
  %114 = vdwg.mxu0
  %v115 = vtanh.pop %v107
  %v116 = vtanh.pop %v112
  %v117 = vld [vmem:[%s3] sm:$0xff]
  %v118 = vld [vmem:[%s3 + $0x8] sm:$0xff]
  %v119 = vld [vmem:[%s3 + $0x10] sm:$0xff]
  %v120 = vld [vmem:[%s3 + $0x18] sm:$0xff]
  %v121 = vld [vmem:[%s4] sm:$0x1]
  %v123 = vlaneseq
  %v124 = vshrl.u32 %v123, 7
  %v125 = vsub.s32 0, %v124
  %v126 = vrot.slane %v121, %v125
  %v129 = vsel %vm33, %v115, 0
  %v132 = vsel %vm33, %v116, 0
  %134 = vmatprep.subr.mxu0 0.0
  %135 = vmatpush1.msra.mxu0 %v117
  %136 = vmatprep.subr.mxu0 0.0
  %137 = vmatpush1.msra.mxu0 %v118
  %138 = vmatprep.subr.mxu0 0.0
  %139 = vmatpush1.msra.mxu0 %v119
  %140 = vmatprep.subr.mxu0 0.0
  %141 = vmatpush1.msra.mxu0 %v120
  %142 = vmatprep.subr.mxu0 0.0
  %143 = vmatpush1.msra.mxu0 0.0
  %144 = vmatprep.subr.mxu0 0.0
  %145 = vmatpush1.msra.mxu0 0.0
  %146 = vmatprep.subr.mxu0 0.0
  %147 = vmatpush1.msra.mxu0 0.0
  %148 = vmatprep.subr.mxu0 0.0
  %149 = vmatpush1.msra.mxu0 0.0
  %150 = vmatprep.subr.mxu0 0.0
  %151 = vmatpush1.msra.mxu0 0.0
  %152 = vmatprep.subr.mxu0 0.0
  %153 = vmatpush1.msra.mxu0 0.0
  %154 = vmatprep.subr.mxu0 0.0
  %155 = vmatpush1.msra.mxu0 0.0
  %156 = vmatprep.subr.mxu0 0.0
  %157 = vmatpush1.msra.mxu0 0.0
  %158 = vmatprep.subr.mxu0 0.0
  %159 = vmatpush1.msra.mxu0 0.0
  %160 = vmatprep.subr.mxu0 0.0
  %161 = vmatpush1.msra.mxu0 0.0
  %162 = vmatprep.subr.mxu0 0.0
  %163 = vmatpush1.msra.mxu0 0.0
  %164 = vmatprep.subr.mxu0 0.0
  %165 = vmatpush1.msra.mxu0 0.0
  %166 = vmatprep.subr.mxu0 0.0
  %167 = vmatpush1.msra.mxu0 0.0
  %168 = vmatprep.subr.mxu0 0.0
  %169 = vmatpush1.msra.mxu0 0.0
  %170 = vmatprep.subr.mxu0 0.0
  %171 = vmatpush1.msra.mxu0 0.0
  %172 = vmatprep.subr.mxu0 0.0
  %173 = vmatpush1.msra.mxu0 0.0
  %174 = vmatprep.subr.mxu0 0.0
  %175 = vmatpush1.msra.mxu0 0.0
  %176 = vmatprep.subr.mxu0 0.0
  %177 = vmatpush1.msra.mxu0 0.0
  %178 = vmatprep.subr.mxu0 0.0
  %179 = vmatpush1.msra.mxu0 0.0
  %180 = vmatprep.subr.mxu0 0.0
  %181 = vmatpush1.msra.mxu0 0.0
  %182 = vmatprep.subr.mxu0 0.0
  %183 = vmatpush1.msra.mxu0 0.0
  %184 = vmatprep.subr.mxu0 0.0
  %185 = vmatpush1.msra.mxu0 0.0
  %186 = vmatprep.subr.mxu0 0.0
  %187 = vmatpush1.msra.mxu0 0.0
  %188 = vmatprep.subr.mxu0 0.0
  %189 = vmatpush1.msra.mxu0 0.0
  %190 = vmatprep.subr.mxu0 0.0
  %191 = vmatpush1.msra.mxu0 0.0
  %192 = vmatprep.subr.mxu0 0.0
  %193 = vmatpush1.msra.mxu0 0.0
  %194 = vmatprep.subr.mxu0 0.0
  %195 = vmatpush1.msra.mxu0 0.0
  %196 = vmatprep.subr.mxu0 0.0
  %197 = vmatpush1.msra.mxu0 0.0
  %198 = vmatprep.mubr.f32.mxu0 0.0
  %199 = vmatmul.mubr.f32.gmra.mrb[0].mxu0 %v129
  %v200 = vpop.f32.mrb[0].mxu0
  %v201 = vadd.f32 %v126, %v200
  %v202 = vpop.f32.mrb[0].mxu0
  %203 = vmatprep.mubr.f32.mxu0 0.0
  %204 = vmatmul.mubr.f32.gmra.mrb[0].mxu0 %v132
  %v205 = vpop.f32.mrb[0].mxu0
  %v206 = vadd.f32 %v126, %v205
  %v207 = vpop.f32.mrb[0].mxu0
  %208 = vdwg.mxu0
  %vm209 = vcmask 31744
  %210 = vst.msk [vmem:[%s5] sm:$0xff] %vm209, %v201
  %211 = vst.msk [vmem:[%s5 + $0x8] sm:$0xff] %vm209, %v206
  // Predicated region
  $region22: #{rnn_forward.5} parent=0 // pred_check
    _
  $region23: #{rnn_forward.5} parent=0 // pred_check_branch
    %213 = sbr.rel (0) target = $region25
  $region24: #{rnn_forward.5} parent=0 // pred_region
    _
  $region25: #{rnn_forward.5} parent=0 // pred_fallthru
    _
  // Predicated region
  $region26: #{rnn_forward.5} parent=0 // pred_check
    _
  $region27: #{rnn_forward.5} parent=0 // pred_check_branch
    %215 = sbr.rel (0) target = $region29
  $region28: #{rnn_forward.5} parent=0 // pred_region
    _
  $region29: #{rnn_forward.5} parent=0 // pred_fallthru
    _

// kernel: rnn_forward.4
$region0: #{rnn_forward.4}
  #allocation0 [shape = 'u32[]', space=smem, size = 0x4, offset = 0x4, fixed_abs, tag = 'smem constant byte address 0x4 - core index']
  #allocation1 [shape = 'u32[144,128]{1,0:T(1,128)}', space=vmem, size = 0x12000, scoped, tag = 'internal scratch']
  #allocation2 [shape = 'f32[4,32]{1,0:T(4,128)}', space=vmem, size = 0x800, scoped, tag = 'scratch operand']
  #allocation3 [shape = 'f32[4,32]{1,0:T(4,128)}', space=vmem, size = 0x800, scoped, tag = 'scratch operand']
  %s0 = inlined_call_operand.vmem [shape: f32[4,4,32], index: 0, kind: input, shape index: {}]
  %s1 = inlined_call_operand.vmem [shape: f32[32,128], index: 1, kind: input, shape index: {}]
  %s2 = inlined_call_operand.vmem [shape: f32[32,128], index: 2, kind: input, shape index: {}]
  %s3 = inlined_call_operand.vmem [shape: f32[32,128], index: 3, kind: input, shape index: {}]
  %s4 = inlined_call_operand.vmem [shape: f32[1,128], index: 4, kind: input, shape index: {}]
  %s5 = inlined_call_operand.vmem [shape: f32[4,4,32], index: 5, kind: output, shape index: {}]
  %s6 = sld [smem:[#allocation0]]
  $region34: #{rnn_forward.4} parent=0
    _
  %s8 = ssub.s32 1, %s6
  %s9 = scalar_select 0, %s8, %s6
  // Predicated region
  $region2: #{rnn_forward.4} parent=0 // pred_check
    _
  $region3: #{rnn_forward.4} parent=0 // pred_check_branch
    %11 = sbr.rel (0) target = $region5
  $region4: #{rnn_forward.4} parent=0 // pred_region
    _
  $region5: #{rnn_forward.4} parent=0 // pred_fallthru
    _
  // Predicated region
  $region6: #{rnn_forward.4} parent=0 // pred_check
    _
  $region7: #{rnn_forward.4} parent=0 // pred_check_branch
    %13 = sbr.rel (0) target = $region9
  $region8: #{rnn_forward.4} parent=0 // pred_region
    _
  $region9: #{rnn_forward.4} parent=0 // pred_fallthru
    _
  // Predicated region
  $region10: #{rnn_forward.4} parent=0 // pred_check
    _
  $region11: #{rnn_forward.4} parent=0 // pred_check_branch
    %15 = sbr.rel (0) target = $region13
  $region12: #{rnn_forward.4} parent=0 // pred_region
    _
  $region13: #{rnn_forward.4} parent=0 // pred_fallthru
    _
  // Predicated region
  $region14: #{rnn_forward.4} parent=0 // pred_check
    _
  $region15: #{rnn_forward.4} parent=0 // pred_check_branch
    %17 = sbr.rel (0) target = $region17
  $region16: #{rnn_forward.4} parent=0 // pred_region
    _
  $region17: #{rnn_forward.4} parent=0 // pred_fallthru
    _
  // Predicated region
  $region18: #{rnn_forward.4} parent=0 // pred_check
    _
  $region19: #{rnn_forward.4} parent=0 // pred_check_branch
    %19 = sbr.rel (0) target = $region21
  $region20: #{rnn_forward.4} parent=0 // pred_region
    _
  $region21: #{rnn_forward.4} parent=0 // pred_fallthru
    _
  %p20 = scmp.eq.s32.totalorder 0, 0
  // Predicated region
  $region22: #{rnn_forward.4} parent=0 // pred_check
    %p21 = pneg %p20
  $region23: #{rnn_forward.4} parent=0 // pred_check_branch
    %23 = sbr.rel (%p21) target = $region25
  $region24: #{rnn_forward.4} parent=0 // pred_region
    %vm24 = vcmask 257024
    %25 = vst.msk [vmem:[#allocation2] sm:$0xf] %vm24, 0.0
    %26 = vst.msk [vmem:[#allocation3] sm:$0xf] %vm24, 0.0
  $region25: #{rnn_forward.4} parent=0 // pred_fallthru
    _
  %v27 = vld [vmem:[%s1] sm:$0xff]
  %v28 = vld [vmem:[%s1 + $0x8] sm:$0xff]
  %v29 = vld [vmem:[%s1 + $0x10] sm:$0xff]
  %v30 = vld [vmem:[%s1 + $0x18] sm:$0xff]
  %v31 = vld [vmem:[%s2] sm:$0xff]
  %v32 = vld [vmem:[%s2 + $0x8] sm:$0xff]
  %v33 = vld [vmem:[%s2 + $0x10] sm:$0xff]
  %v34 = vld [vmem:[%s2 + $0x18] sm:$0xff]
  %v35 = vld [vmem:[%s3] sm:$0xff]
  %v36 = vld [vmem:[%s3 + $0x8] sm:$0xff]
  %v37 = vld [vmem:[%s3 + $0x10] sm:$0xff]
  %v38 = vld [vmem:[%s3 + $0x18] sm:$0xff]
  %v39 = vld [vmem:[%s4] sm:$0x1]
  %v40 = vld [vmem:[#allocation2] sm:$0xf]
  %v41 = vld [vmem:[#allocation3] sm:$0xf]
  %v42 = vld [vmem:[%s0] sm:$0xf]
  %v44 = vlaneseq
  %v45 = vshrl.u32 %v44, 7
  %v46 = vsub.s32 0, %v45
  %v47 = vrot.slane %v39, %v46
  %vm49 = vcmask 261120
  %v51 = vsel %vm49, %v42, 0
  %53 = vmatprep.subr.mxu0 0.0
  %54 = vmatpush1.msra.mxu0 %v27
  %55 = vmatprep.subr.mxu0 0.0
  %56 = vmatpush1.msra.mxu0 %v28
  %57 = vmatprep.subr.mxu0 0.0
  %58 = vmatpush1.msra.mxu0 %v29
  %59 = vmatprep.subr.mxu0 0.0
  %60 = vmatpush1.msra.mxu0 %v30
  %61 = vmatprep.subr.mxu0 0.0
  %62 = vmatpush1.msra.mxu0 0.0
  %63 = vmatprep.subr.mxu0 0.0
  %64 = vmatpush1.msra.mxu0 0.0
  %65 = vmatprep.subr.mxu0 0.0
  %66 = vmatpush1.msra.mxu0 0.0
  %67 = vmatprep.subr.mxu0 0.0
  %68 = vmatpush1.msra.mxu0 0.0
  %69 = vmatprep.subr.mxu0 0.0
  %70 = vmatpush1.msra.mxu0 0.0
  %71 = vmatprep.subr.mxu0 0.0
  %72 = vmatpush1.msra.mxu0 0.0
  %73 = vmatprep.subr.mxu0 0.0
  %74 = vmatpush1.msra.mxu0 0.0
  %75 = vmatprep.subr.mxu0 0.0
  %76 = vmatpush1.msra.mxu0 0.0
  %77 = vmatprep.subr.mxu0 0.0
  %78 = vmatpush1.msra.mxu0 0.0
  %79 = vmatprep.subr.mxu0 0.0
  %80 = vmatpush1.msra.mxu0 0.0
  %81 = vmatprep.subr.mxu0 0.0
  %82 = vmatpush1.msra.mxu0 0.0
  %83 = vmatprep.subr.mxu0 0.0
  %84 = vmatpush1.msra.mxu0 0.0
  %85 = vmatprep.subr.mxu0 0.0
  %86 = vmatpush1.msra.mxu0 0.0
  %87 = vmatprep.subr.mxu0 0.0
  %88 = vmatpush1.msra.mxu0 0.0
  %89 = vmatprep.subr.mxu0 0.0
  %90 = vmatpush1.msra.mxu0 0.0
  %91 = vmatprep.subr.mxu0 0.0
  %92 = vmatpush1.msra.mxu0 0.0
  %93 = vmatprep.subr.mxu0 0.0
  %94 = vmatpush1.msra.mxu0 0.0
  %95 = vmatprep.subr.mxu0 0.0
  %96 = vmatpush1.msra.mxu0 0.0
  %97 = vmatprep.subr.mxu0 0.0
  %98 = vmatpush1.msra.mxu0 0.0
  %99 = vmatprep.subr.mxu0 0.0
  %100 = vmatpush1.msra.mxu0 0.0
  %101 = vmatprep.subr.mxu0 0.0
  %102 = vmatpush1.msra.mxu0 0.0
  %103 = vmatprep.subr.mxu0 0.0
  %104 = vmatpush1.msra.mxu0 0.0
  %105 = vmatprep.subr.mxu0 0.0
  %106 = vmatpush1.msra.mxu0 0.0
  %107 = vmatprep.subr.mxu0 0.0
  %108 = vmatpush1.msra.mxu0 0.0
  %109 = vmatprep.subr.mxu0 0.0
  %110 = vmatpush1.msra.mxu0 0.0
  %111 = vmatprep.subr.mxu0 0.0
  %112 = vmatpush1.msra.mxu0 0.0
  %113 = vmatprep.subr.mxu0 0.0
  %114 = vmatpush1.msra.mxu0 0.0
  %115 = vmatprep.subr.mxu0 0.0
  %116 = vmatpush1.msra.mxu0 0.0
  %117 = vmatprep.mubr.f32.mxu0 0.0
  %118 = vmatmul.mubr.f32.gmra.mrb[0].mxu0 %v51
  %v119 = vpop.f32.mrb[0].mxu0
  %v120 = vadd.f32 %v47, %v119
  %v121 = vpop.f32.mrb[0].mxu0
  %122 = vdwg.mxu0
  %v124 = vsel %vm49, %v40, 0
  %126 = vmatprep.subr.mxu0 0.0
  %127 = vmatpush1.msra.mxu0 %v31
  %128 = vmatprep.subr.mxu0 0.0
  %129 = vmatpush1.msra.mxu0 %v32
  %130 = vmatprep.subr.mxu0 0.0
  %131 = vmatpush1.msra.mxu0 %v33
  %132 = vmatprep.subr.mxu0 0.0
  %133 = vmatpush1.msra.mxu0 %v34
  %134 = vmatprep.subr.mxu0 0.0
  %135 = vmatpush1.msra.mxu0 0.0
  %136 = vmatprep.subr.mxu0 0.0
  %137 = vmatpush1.msra.mxu0 0.0
  %138 = vmatprep.subr.mxu0 0.0
  %139 = vmatpush1.msra.mxu0 0.0
  %140 = vmatprep.subr.mxu0 0.0
  %141 = vmatpush1.msra.mxu0 0.0
  %142 = vmatprep.subr.mxu0 0.0
  %143 = vmatpush1.msra.mxu0 0.0
  %144 = vmatprep.subr.mxu0 0.0
  %145 = vmatpush1.msra.mxu0 0.0
  %146 = vmatprep.subr.mxu0 0.0
  %147 = vmatpush1.msra.mxu0 0.0
  %148 = vmatprep.subr.mxu0 0.0
  %149 = vmatpush1.msra.mxu0 0.0
  %150 = vmatprep.subr.mxu0 0.0
  %151 = vmatpush1.msra.mxu0 0.0
  %152 = vmatprep.subr.mxu0 0.0
  %153 = vmatpush1.msra.mxu0 0.0
  %154 = vmatprep.subr.mxu0 0.0
  %155 = vmatpush1.msra.mxu0 0.0
  %156 = vmatprep.subr.mxu0 0.0
  %157 = vmatpush1.msra.mxu0 0.0
  %158 = vmatprep.subr.mxu0 0.0
  %159 = vmatpush1.msra.mxu0 0.0
  %160 = vmatprep.subr.mxu0 0.0
  %161 = vmatpush1.msra.mxu0 0.0
  %162 = vmatprep.subr.mxu0 0.0
  %163 = vmatpush1.msra.mxu0 0.0
  %164 = vmatprep.subr.mxu0 0.0
  %165 = vmatpush1.msra.mxu0 0.0
  %166 = vmatprep.subr.mxu0 0.0
  %167 = vmatpush1.msra.mxu0 0.0
  %168 = vmatprep.subr.mxu0 0.0
  %169 = vmatpush1.msra.mxu0 0.0
  %170 = vmatprep.subr.mxu0 0.0
  %171 = vmatpush1.msra.mxu0 0.0
  %172 = vmatprep.subr.mxu0 0.0
  %173 = vmatpush1.msra.mxu0 0.0
  %174 = vmatprep.subr.mxu0 0.0
  %175 = vmatpush1.msra.mxu0 0.0
  %176 = vmatprep.subr.mxu0 0.0
  %177 = vmatpush1.msra.mxu0 0.0
  %178 = vmatprep.subr.mxu0 0.0
  %179 = vmatpush1.msra.mxu0 0.0
  %180 = vmatprep.subr.mxu0 0.0
  %181 = vmatpush1.msra.mxu0 0.0
  %182 = vmatprep.subr.mxu0 0.0
  %183 = vmatpush1.msra.mxu0 0.0
  %184 = vmatprep.subr.mxu0 0.0
  %185 = vmatpush1.msra.mxu0 0.0
  %186 = vmatprep.subr.mxu0 0.0
  %187 = vmatpush1.msra.mxu0 0.0
  %188 = vmatprep.subr.mxu0 0.0
  %189 = vmatpush1.msra.mxu0 0.0
  %190 = vmatprep.mubr.f32.mxu0 0.0
  %191 = vmatmul.mubr.f32.gmra.mrb[0].mxu0 %v124
  %v192 = vpop.f32.mrb[0].mxu0
  %v193 = vadd.f32 0.0, %v192
  %v194 = vpop.f32.mrb[0].mxu0
  %195 = vdwg.mxu0
  %v196 = vadd.f32 %v120, %v193
  %v198 = vsel %vm49, %v41, 0
  %200 = vmatprep.subr.mxu0 0.0
  %201 = vmatpush1.msra.mxu0 %v35
  %202 = vmatprep.subr.mxu0 0.0
  %203 = vmatpush1.msra.mxu0 %v36
  %204 = vmatprep.subr.mxu0 0.0
  %205 = vmatpush1.msra.mxu0 %v37
  %206 = vmatprep.subr.mxu0 0.0
  %207 = vmatpush1.msra.mxu0 %v38
  %208 = vmatprep.subr.mxu0 0.0
  %209 = vmatpush1.msra.mxu0 0.0
  %210 = vmatprep.subr.mxu0 0.0
  %211 = vmatpush1.msra.mxu0 0.0
  %212 = vmatprep.subr.mxu0 0.0
  %213 = vmatpush1.msra.mxu0 0.0
  %214 = vmatprep.subr.mxu0 0.0
  %215 = vmatpush1.msra.mxu0 0.0
  %216 = vmatprep.subr.mxu0 0.0
  %217 = vmatpush1.msra.mxu0 0.0
  %218 = vmatprep.subr.mxu0 0.0
  %219 = vmatpush1.msra.mxu0 0.0
  %220 = vmatprep.subr.mxu0 0.0
  %221 = vmatpush1.msra.mxu0 0.0
  %222 = vmatprep.subr.mxu0 0.0
  %223 = vmatpush1.msra.mxu0 0.0
  %224 = vmatprep.subr.mxu0 0.0
  %225 = vmatpush1.msra.mxu0 0.0
  %226 = vmatprep.subr.mxu0 0.0
  %227 = vmatpush1.msra.mxu0 0.0
  %228 = vmatprep.subr.mxu0 0.0
  %229 = vmatpush1.msra.mxu0 0.0
  %230 = vmatprep.subr.mxu0 0.0
  %231 = vmatpush1.msra.mxu0 0.0
  %232 = vmatprep.subr.mxu0 0.0
  %233 = vmatpush1.msra.mxu0 0.0
  %234 = vmatprep.subr.mxu0 0.0
  %235 = vmatpush1.msra.mxu0 0.0
  %236 = vmatprep.subr.mxu0 0.0
  %237 = vmatpush1.msra.mxu0 0.0
  %238 = vmatprep.subr.mxu0 0.0
  %239 = vmatpush1.msra.mxu0 0.0
  %240 = vmatprep.subr.mxu0 0.0
  %241 = vmatpush1.msra.mxu0 0.0
  %242 = vmatprep.subr.mxu0 0.0
  %243 = vmatpush1.msra.mxu0 0.0
  %244 = vmatprep.subr.mxu0 0.0
  %245 = vmatpush1.msra.mxu0 0.0
  %246 = vmatprep.subr.mxu0 0.0
  %247 = vmatpush1.msra.mxu0 0.0
  %248 = vmatprep.subr.mxu0 0.0
  %249 = vmatpush1.msra.mxu0 0.0
  %250 = vmatprep.subr.mxu0 0.0
  %251 = vmatpush1.msra.mxu0 0.0
  %252 = vmatprep.subr.mxu0 0.0
  %253 = vmatpush1.msra.mxu0 0.0
  %254 = vmatprep.subr.mxu0 0.0
  %255 = vmatpush1.msra.mxu0 0.0
  %256 = vmatprep.subr.mxu0 0.0
  %257 = vmatpush1.msra.mxu0 0.0
  %258 = vmatprep.subr.mxu0 0.0
  %259 = vmatpush1.msra.mxu0 0.0
  %260 = vmatprep.subr.mxu0 0.0
  %261 = vmatpush1.msra.mxu0 0.0
  %262 = vmatprep.subr.mxu0 0.0
  %263 = vmatpush1.msra.mxu0 0.0
  %264 = vmatprep.mubr.f32.mxu0 0.0
  %265 = vmatmul.mubr.f32.gmra.mrb[0].mxu0 %v198
  %v266 = vpop.f32.mrb[0].mxu0
  %v267 = vadd.f32 0.0, %v266
  %v268 = vpop.f32.mrb[0].mxu0
  %269 = vdwg.mxu0
  %v270 = vadd.f32 %v196, %v267
  %v271 = vxor.u32 %v270, 2147483648
  %v272 = vmul.f32 %v271, 1.442695
  %v273 = vpow.pop %v272
  %v274 = vadd.f32 %v273, 1.0
  %v275 = vrcp.pop %v274
  %v276 = vmul.f32 1.0, %v275
  %v277 = vtanh.pop %v270
  %278 = vrot.lane.b32.xlu0 %v41, 32
  %v279 = vpop.permute.xlu0 %278
  %v281 = vmul.f32 %v276, %v279
  %283 = vrot.lane.b32.xlu0 %v277, 32
  %v284 = vpop.permute.xlu0 %283
  %v286 = vmul.f32 %v276, %v284
  %288 = vrot.lane.b32.xlu0 %v286, 32
  %v289 = vpop.permute.xlu0 %288
  %v291 = vadd.f32 %v281, %v289
  %v292 = vtanh.pop %v291
  %293 = vrot.lane.b32.xlu0 %v42, 32
  %v294 = vpop.permute.xlu0 %293
  %v296 = vadd.f32 %v292, %v294
  %298 = vrot.lane.b32.xlu0 %v296, 32
  %v299 = vpop.permute.xlu0 %298
  %v301 = vmul.f32 %v276, %v299
  %303 = vrot.lane.b32.xlu0 %v301, 64
  %v304 = vpop.permute.xlu0 %303
  %vm306 = vcmask 257024
  %307 = vst.msk [vmem:[%s5] sm:$0xf] %vm306, %v304
  %s308 = scalar_lea.vmem %s0, 4
  %v309 = vld [vmem:[%s308] sm:$0xf]
  %v311 = vsel %vm49, %v309, 0
  %313 = vmatprep.subr.mxu0 0.0
  %314 = vmatpush1.msra.mxu0 %v27
  %315 = vmatprep.subr.mxu0 0.0
  %316 = vmatpush1.msra.mxu0 %v28
  %317 = vmatprep.subr.mxu0 0.0
  %318 = vmatpush1.msra.mxu0 %v29
  %319 = vmatprep.subr.mxu0 0.0
  %320 = vmatpush1.msra.mxu0 %v30
  %321 = vmatprep.subr.mxu0 0.0
  %322 = vmatpush1.msra.mxu0 0.0
  %323 = vmatprep.subr.mxu0 0.0
  %324 = vmatpush1.msra.mxu0 0.0
  %325 = vmatprep.subr.mxu0 0.0
  %326 = vmatpush1.msra.mxu0 0.0
  %327 = vmatprep.subr.mxu0 0.0
  %328 = vmatpush1.msra.mxu0 0.0
  %329 = vmatprep.subr.mxu0 0.0
  %330 = vmatpush1.msra.mxu0 0.0
  %331 = vmatprep.subr.mxu0 0.0
  %332 = vmatpush1.msra.mxu0 0.0
  %333 = vmatprep.subr.mxu0 0.0
  %334 = vmatpush1.msra.mxu0 0.0
  %335 = vmatprep.subr.mxu0 0.0
  %336 = vmatpush1.msra.mxu0 0.0
  %337 = vmatprep.subr.mxu0 0.0
  %338 = vmatpush1.msra.mxu0 0.0
  %339 = vmatprep.subr.mxu0 0.0
  %340 = vmatpush1.msra.mxu0 0.0
  %341 = vmatprep.subr.mxu0 0.0
  %342 = vmatpush1.msra.mxu0 0.0
  %343 = vmatprep.subr.mxu0 0.0
  %344 = vmatpush1.msra.mxu0 0.0
  %345 = vmatprep.subr.mxu0 0.0
  %346 = vmatpush1.msra.mxu0 0.0
  %347 = vmatprep.subr.mxu0 0.0
  %348 = vmatpush1.msra.mxu0 0.0
  %349 = vmatprep.subr.mxu0 0.0
  %350 = vmatpush1.msra.mxu0 0.0
  %351 = vmatprep.subr.mxu0 0.0
  %352 = vmatpush1.msra.mxu0 0.0
  %353 = vmatprep.subr.mxu0 0.0
  %354 = vmatpush1.msra.mxu0 0.0
  %355 = vmatprep.subr.mxu0 0.0
  %356 = vmatpush1.msra.mxu0 0.0
  %357 = vmatprep.subr.mxu0 0.0
  %358 = vmatpush1.msra.mxu0 0.0
  %359 = vmatprep.subr.mxu0 0.0
  %360 = vmatpush1.msra.mxu0 0.0
  %361 = vmatprep.subr.mxu0 0.0
  %362 = vmatpush1.msra.mxu0 0.0
  %363 = vmatprep.subr.mxu0 0.0
  %364 = vmatpush1.msra.mxu0 0.0
  %365 = vmatprep.subr.mxu0 0.0
  %366 = vmatpush1.msra.mxu0 0.0
  %367 = vmatprep.subr.mxu0 0.0
  %368 = vmatpush1.msra.mxu0 0.0
  %369 = vmatprep.subr.mxu0 0.0
  %370 = vmatpush1.msra.mxu0 0.0
  %371 = vmatprep.subr.mxu0 0.0
  %372 = vmatpush1.msra.mxu0 0.0
  %373 = vmatprep.subr.mxu0 0.0
  %374 = vmatpush1.msra.mxu0 0.0
  %375 = vmatprep.subr.mxu0 0.0
  %376 = vmatpush1.msra.mxu0 0.0
  %377 = vmatprep.mubr.f32.mxu0 0.0
  %378 = vmatmul.mubr.f32.gmra.mrb[0].mxu0 %v311
  %v379 = vpop.f32.mrb[0].mxu0
  %v380 = vadd.f32 %v47, %v379
  %v381 = vpop.f32.mrb[0].mxu0
  %382 = vdwg.mxu0
  %v383 = vsel %vm49, %v304, 0
  %385 = vmatprep.subr.mxu0 0.0
  %386 = vmatpush1.msra.mxu0 %v31
  %387 = vmatprep.subr.mxu0 0.0
  %388 = vmatpush1.msra.mxu0 %v32
  %389 = vmatprep.subr.mxu0 0.0
  %390 = vmatpush1.msra.mxu0 %v33
  %391 = vmatprep.subr.mxu0 0.0
  %392 = vmatpush1.msra.mxu0 %v34
  %393 = vmatprep.subr.mxu0 0.0
  %394 = vmatpush1.msra.mxu0 0.0
  %395 = vmatprep.subr.mxu0 0.0
  %396 = vmatpush1.msra.mxu0 0.0
  %397 = vmatprep.subr.mxu0 0.0
  %398 = vmatpush1.msra.mxu0 0.0
  %399 = vmatprep.subr.mxu0 0.0
  %400 = vmatpush1.msra.mxu0 0.0
  %401 = vmatprep.subr.mxu0 0.0
  %402 = vmatpush1.msra.mxu0 0.0
  %403 = vmatprep.subr.mxu0 0.0
  %404 = vmatpush1.msra.mxu0 0.0
  %405 = vmatprep.subr.mxu0 0.0
  %406 = vmatpush1.msra.mxu0 0.0
  %407 = vmatprep.subr.mxu0 0.0
  %408 = vmatpush1.msra.mxu0 0.0
  %409 = vmatprep.subr.mxu0 0.0
  %410 = vmatpush1.msra.mxu0 0.0
  %411 = vmatprep.subr.mxu0 0.0
  %412 = vmatpush1.msra.mxu0 0.0
  %413 = vmatprep.subr.mxu0 0.0
  %414 = vmatpush1.msra.mxu0 0.0
  %415 = vmatprep.subr.mxu0 0.0
  %416 = vmatpush1.msra.mxu0 0.0
  %417 = vmatprep.subr.mxu0 0.0
  %418 = vmatpush1.msra.mxu0 0.0
  %419 = vmatprep.subr.mxu0 0.0
  %420 = vmatpush1.msra.mxu0 0.0
  %421 = vmatprep.subr.mxu0 0.0
  %422 = vmatpush1.msra.mxu0 0.0
  %423 = vmatprep.subr.mxu0 0.0
  %424 = vmatpush1.msra.mxu0 0.0
  %425 = vmatprep.subr.mxu0 0.0
  %426 = vmatpush1.msra.mxu0 0.0
  %427 = vmatprep.subr.mxu0 0.0
  %428 = vmatpush1.msra.mxu0 0.0
  %429 = vmatprep.subr.mxu0 0.0
  %430 = vmatpush1.msra.mxu0 0.0
  %431 = vmatprep.subr.mxu0 0.0
  %432 = vmatpush1.msra.mxu0 0.0
  %433 = vmatprep.subr.mxu0 0.0
  %434 = vmatpush1.msra.mxu0 0.0
  %435 = vmatprep.subr.mxu0 0.0
  %436 = vmatpush1.msra.mxu0 0.0
  %437 = vmatprep.subr.mxu0 0.0
  %438 = vmatpush1.msra.mxu0 0.0
  %439 = vmatprep.subr.mxu0 0.0
  %440 = vmatpush1.msra.mxu0 0.0
  %441 = vmatprep.subr.mxu0 0.0
  %442 = vmatpush1.msra.mxu0 0.0
  %443 = vmatprep.subr.mxu0 0.0
  %444 = vmatpush1.msra.mxu0 0.0
  %445 = vmatprep.subr.mxu0 0.0
  %446 = vmatpush1.msra.mxu0 0.0
  %447 = vmatprep.subr.mxu0 0.0
  %448 = vmatpush1.msra.mxu0 0.0
  %449 = vmatprep.mubr.f32.mxu0 0.0
  %450 = vmatmul.mubr.f32.gmra.mrb[0].mxu0 %v383
  %v451 = vpop.f32.mrb[0].mxu0
  %v452 = vadd.f32 0.0, %v451
  %v453 = vpop.f32.mrb[0].mxu0
  %454 = vdwg.mxu0
  %v455 = vadd.f32 %v380, %v452
  %457 = vrot.lane.b32.xlu0 %v291, 96
  %v458 = vpop.permute.xlu0 %457
  %v459 = vsel %vm49, %v458, 0
  %461 = vmatprep.subr.mxu0 0.0
  %462 = vmatpush1.msra.mxu0 %v35
  %463 = vmatprep.subr.mxu0 0.0
  %464 = vmatpush1.msra.mxu0 %v36
  %465 = vmatprep.subr.mxu0 0.0
  %466 = vmatpush1.msra.mxu0 %v37
  %467 = vmatprep.subr.mxu0 0.0
  %468 = vmatpush1.msra.mxu0 %v38
  %469 = vmatprep.subr.mxu0 0.0
  %470 = vmatpush1.msra.mxu0 0.0
  %471 = vmatprep.subr.mxu0 0.0
  %472 = vmatpush1.msra.mxu0 0.0
  %473 = vmatprep.subr.mxu0 0.0
  %474 = vmatpush1.msra.mxu0 0.0
  %475 = vmatprep.subr.mxu0 0.0
  %476 = vmatpush1.msra.mxu0 0.0
  %477 = vmatprep.subr.mxu0 0.0
  %478 = vmatpush1.msra.mxu0 0.0
  %479 = vmatprep.subr.mxu0 0.0
  %480 = vmatpush1.msra.mxu0 0.0
  %481 = vmatprep.subr.mxu0 0.0
  %482 = vmatpush1.msra.mxu0 0.0
  %483 = vmatprep.subr.mxu0 0.0
  %484 = vmatpush1.msra.mxu0 0.0
  %485 = vmatprep.subr.mxu0 0.0
  %486 = vmatpush1.msra.mxu0 0.0
  %487 = vmatprep.subr.mxu0 0.0
  %488 = vmatpush1.msra.mxu0 0.0
  %489 = vmatprep.subr.mxu0 0.0
  %490 = vmatpush1.msra.mxu0 0.0
  %491 = vmatprep.subr.mxu0 0.0
  %492 = vmatpush1.msra.mxu0 0.0
  %493 = vmatprep.subr.mxu0 0.0
  %494 = vmatpush1.msra.mxu0 0.0
  %495 = vmatprep.subr.mxu0 0.0
  %496 = vmatpush1.msra.mxu0 0.0
  %497 = vmatprep.subr.mxu0 0.0
  %498 = vmatpush1.msra.mxu0 0.0
  %499 = vmatprep.subr.mxu0 0.0
  %500 = vmatpush1.msra.mxu0 0.0
  %501 = vmatprep.subr.mxu0 0.0
  %502 = vmatpush1.msra.mxu0 0.0
  %503 = vmatprep.subr.mxu0 0.0
  %504 = vmatpush1.msra.mxu0 0.0
  %505 = vmatprep.subr.mxu0 0.0
  %506 = vmatpush1.msra.mxu0 0.0
  %507 = vmatprep.subr.mxu0 0.0
  %508 = vmatpush1.msra.mxu0 0.0
  %509 = vmatprep.subr.mxu0 0.0
  %510 = vmatpush1.msra.mxu0 0.0
  %511 = vmatprep.subr.mxu0 0.0
  %512 = vmatpush1.msra.mxu0 0.0
  %513 = vmatprep.subr.mxu0 0.0
  %514 = vmatpush1.msra.mxu0 0.0
  %515 = vmatprep.subr.mxu0 0.0
  %516 = vmatpush1.msra.mxu0 0.0
  %517 = vmatprep.subr.mxu0 0.0
  %518 = vmatpush1.msra.mxu0 0.0
  %519 = vmatprep.subr.mxu0 0.0
  %520 = vmatpush1.msra.mxu0 0.0
  %521 = vmatprep.subr.mxu0 0.0
  %522 = vmatpush1.msra.mxu0 0.0
  %523 = vmatprep.subr.mxu0 0.0
  %524 = vmatpush1.msra.mxu0 0.0
  %525 = vmatprep.mubr.f32.mxu0 0.0
  %526 = vmatmul.mubr.f32.gmra.mrb[0].mxu0 %v459
  %v527 = vpop.f32.mrb[0].mxu0
  %v528 = vadd.f32 0.0, %v527
  %v529 = vpop.f32.mrb[0].mxu0
  %530 = vdwg.mxu0
  %v531 = vadd.f32 %v455, %v528
  %v532 = vxor.u32 %v531, 2147483648
  %v533 = vmul.f32 %v532, 1.442695
  %v534 = vpow.pop %v533
  %v535 = vadd.f32 %v534, 1.0
  %v536 = vrcp.pop %v535
  %v537 = vmul.f32 1.0, %v536
  %v538 = vtanh.pop %v531
  %v539 = vmul.f32 %v537, %v291
  %541 = vrot.lane.b32.xlu0 %v538, 32
  %v542 = vpop.permute.xlu0 %541
  %v544 = vmul.f32 %v537, %v542
  %546 = vrot.lane.b32.xlu0 %v544, 32
  %v547 = vpop.permute.xlu0 %546
  %v549 = vadd.f32 %v539, %v547
  %v550 = vtanh.pop %v549
  %551 = vrot.lane.b32.xlu0 %v309, 32
  %v552 = vpop.permute.xlu0 %551
  %v554 = vadd.f32 %v550, %v552
  %556 = vrot.lane.b32.xlu0 %v554, 32
  %v557 = vpop.permute.xlu0 %556
  %v559 = vmul.f32 %v537, %v557
  %561 = vrot.lane.b32.xlu0 %v559, 64
  %v562 = vpop.permute.xlu0 %561
  %s564 = scalar_lea.vmem %s5, 4
  %565 = vst.msk [vmem:[%s564] sm:$0xf] %vm306, %v562
  %s566 = scalar_lea.vmem %s0, 8
  %v567 = vld [vmem:[%s566] sm:$0xf]
  %v569 = vsel %vm49, %v567, 0
  %571 = vmatprep.subr.mxu0 0.0
  %572 = vmatpush1.msra.mxu0 %v27
  %573 = vmatprep.subr.mxu0 0.0
  %574 = vmatpush1.msra.mxu0 %v28
  %575 = vmatprep.subr.mxu0 0.0
  %576 = vmatpush1.msra.mxu0 %v29
  %577 = vmatprep.subr.mxu0 0.0
  %578 = vmatpush1.msra.mxu0 %v30
  %579 = vmatprep.subr.mxu0 0.0
  %580 = vmatpush1.msra.mxu0 0.0
  %581 = vmatprep.subr.mxu0 0.0
  %582 = vmatpush1.msra.mxu0 0.0
  %583 = vmatprep.subr.mxu0 0.0
  %584 = vmatpush1.msra.mxu0 0.0
  %585 = vmatprep.subr.mxu0 0.0
  %586 = vmatpush1.msra.mxu0 0.0
  %587 = vmatprep.subr.mxu0 0.0
  %588 = vmatpush1.msra.mxu0 0.0
  %589 = vmatprep.subr.mxu0 0.0
  %590 = vmatpush1.msra.mxu0 0.0
  %591 = vmatprep.subr.mxu0 0.0
  %592 = vmatpush1.msra.mxu0 0.0
  %593 = vmatprep.subr.mxu0 0.0
  %594 = vmatpush1.msra.mxu0 0.0
  %595 = vmatprep.subr.mxu0 0.0
  %596 = vmatpush1.msra.mxu0 0.0
  %597 = vmatprep.subr.mxu0 0.0
  %598 = vmatpush1.msra.mxu0 0.0
  %599 = vmatprep.subr.mxu0 0.0
  %600 = vmatpush1.msra.mxu0 0.0
  %601 = vmatprep.subr.mxu0 0.0
  %602 = vmatpush1.msra.mxu0 0.0
  %603 = vmatprep.subr.mxu0 0.0
  %604 = vmatpush1.msra.mxu0 0.0
  %605 = vmatprep.subr.mxu0 0.0
  %606 = vmatpush1.msra.mxu0 0.0
  %607 = vmatprep.subr.mxu0 0.0
  %608 = vmatpush1.msra.mxu0 0.0
  %609 = vmatprep.subr.mxu0 0.0
  %610 = vmatpush1.msra.mxu0 0.0
  %611 = vmatprep.subr.mxu0 0.0
  %612 = vmatpush1.msra.mxu0 0.0
  %613 = vmatprep.subr.mxu0 0.0
  %614 = vmatpush1.msra.mxu0 0.0
  %615 = vmatprep.subr.mxu0 0.0
  %616 = vmatpush1.msra.mxu0 0.0
  %617 = vmatprep.subr.mxu0 0.0
  %618 = vmatpush1.msra.mxu0 0.0
  %619 = vmatprep.subr.mxu0 0.0
  %620 = vmatpush1.msra.mxu0 0.0
  %621 = vmatprep.subr.mxu0 0.0
  %622 = vmatpush1.msra.mxu0 0.0
  %623 = vmatprep.subr.mxu0 0.0
  %624 = vmatpush1.msra.mxu0 0.0
  %625 = vmatprep.subr.mxu0 0.0
  %626 = vmatpush1.msra.mxu0 0.0
  %627 = vmatprep.subr.mxu0 0.0
  %628 = vmatpush1.msra.mxu0 0.0
  %629 = vmatprep.subr.mxu0 0.0
  %630 = vmatpush1.msra.mxu0 0.0
  %631 = vmatprep.subr.mxu0 0.0
  %632 = vmatpush1.msra.mxu0 0.0
  %633 = vmatprep.subr.mxu0 0.0
  %634 = vmatpush1.msra.mxu0 0.0
  %635 = vmatprep.mubr.f32.mxu0 0.0
  %636 = vmatmul.mubr.f32.gmra.mrb[0].mxu0 %v569
  %v637 = vpop.f32.mrb[0].mxu0
  %v638 = vadd.f32 %v47, %v637
  %v639 = vpop.f32.mrb[0].mxu0
  %640 = vdwg.mxu0
  %v641 = vsel %vm49, %v562, 0
  %643 = vmatprep.subr.mxu0 0.0
  %644 = vmatpush1.msra.mxu0 %v31
  %645 = vmatprep.subr.mxu0 0.0
  %646 = vmatpush1.msra.mxu0 %v32
  %647 = vmatprep.subr.mxu0 0.0
  %648 = vmatpush1.msra.mxu0 %v33
  %649 = vmatprep.subr.mxu0 0.0
  %650 = vmatpush1.msra.mxu0 %v34
  %651 = vmatprep.subr.mxu0 0.0
  %652 = vmatpush1.msra.mxu0 0.0
  %653 = vmatprep.subr.mxu0 0.0
  %654 = vmatpush1.msra.mxu0 0.0
  %655 = vmatprep.subr.mxu0 0.0
  %656 = vmatpush1.msra.mxu0 0.0
  %657 = vmatprep.subr.mxu0 0.0
  %658 = vmatpush1.msra.mxu0 0.0
  %659 = vmatprep.subr.mxu0 0.0
  %660 = vmatpush1.msra.mxu0 0.0
  %661 = vmatprep.subr.mxu0 0.0
  %662 = vmatpush1.msra.mxu0 0.0
  %663 = vmatprep.subr.mxu0 0.0
  %664 = vmatpush1.msra.mxu0 0.0
  %665 = vmatprep.subr.mxu0 0.0
  %666 = vmatpush1.msra.mxu0 0.0
  %667 = vmatprep.subr.mxu0 0.0
  %668 = vmatpush1.msra.mxu0 0.0
  %669 = vmatprep.subr.mxu0 0.0
  %670 = vmatpush1.msra.mxu0 0.0
  %671 = vmatprep.subr.mxu0 0.0
  %672 = vmatpush1.msra.mxu0 0.0
  %673 = vmatprep.subr.mxu0 0.0
  %674 = vmatpush1.msra.mxu0 0.0
  %675 = vmatprep.subr.mxu0 0.0
  %676 = vmatpush1.msra.mxu0 0.0
  %677 = vmatprep.subr.mxu0 0.0
  %678 = vmatpush1.msra.mxu0 0.0
  %679 = vmatprep.subr.mxu0 0.0
  %680 = vmatpush1.msra.mxu0 0.0
  %681 = vmatprep.subr.mxu0 0.0
  %682 = vmatpush1.msra.mxu0 0.0
  %683 = vmatprep.subr.mxu0 0.0
  %684 = vmatpush1.msra.mxu0 0.0
  %685 = vmatprep.subr.mxu0 0.0
  %686 = vmatpush1.msra.mxu0 0.0
  %687 = vmatprep.subr.mxu0 0.0
  %688 = vmatpush1.msra.mxu0 0.0
  %689 = vmatprep.subr.mxu0 0.0
  %690 = vmatpush1.msra.mxu0 0.0
  %691 = vmatprep.subr.mxu0 0.0
  %692 = vmatpush1.msra.mxu0 0.0
  %693 = vmatprep.subr.mxu0 0.0
  %694 = vmatpush1.msra.mxu0 0.0
  %695 = vmatprep.subr.mxu0 0.0
  %696 = vmatpush1.msra.mxu0 0.0
  %697 = vmatprep.subr.mxu0 0.0
  %698 = vmatpush1.msra.mxu0 0.0
  %699 = vmatprep.subr.mxu0 0.0
  %700 = vmatpush1.msra.mxu0 0.0
  %701 = vmatprep.subr.mxu0 0.0
  %702 = vmatpush1.msra.mxu0 0.0
  %703 = vmatprep.subr.mxu0 0.0
  %704 = vmatpush1.msra.mxu0 0.0
  %705 = vmatprep.subr.mxu0 0.0
  %706 = vmatpush1.msra.mxu0 0.0
  %707 = vmatprep.mubr.f32.mxu0 0.0
  %708 = vmatmul.mubr.f32.gmra.mrb[0].mxu0 %v641
  %v709 = vpop.f32.mrb[0].mxu0
  %v710 = vadd.f32 0.0, %v709
  %v711 = vpop.f32.mrb[0].mxu0
  %712 = vdwg.mxu0
  %v713 = vadd.f32 %v638, %v710
  %715 = vrot.lane.b32.xlu0 %v549, 96
  %v716 = vpop.permute.xlu0 %715
  %v717 = vsel %vm49, %v716, 0
  %719 = vmatprep.subr.mxu0 0.0
  %720 = vmatpush1.msra.mxu0 %v35
  %721 = vmatprep.subr.mxu0 0.0
  %722 = vmatpush1.msra.mxu0 %v36
  %723 = vmatprep.subr.mxu0 0.0
  %724 = vmatpush1.msra.mxu0 %v37
  %725 = vmatprep.subr.mxu0 0.0
  %726 = vmatpush1.msra.mxu0 %v38
  %727 = vmatprep.subr.mxu0 0.0
  %728 = vmatpush1.msra.mxu0 0.0
  %729 = vmatprep.subr.mxu0 0.0
  %730 = vmatpush1.msra.mxu0 0.0
  %731 = vmatprep.subr.mxu0 0.0
  %732 = vmatpush1.msra.mxu0 0.0
  %733 = vmatprep.subr.mxu0 0.0
  %734 = vmatpush1.msra.mxu0 0.0
  %735 = vmatprep.subr.mxu0 0.0
  %736 = vmatpush1.msra.mxu0 0.0
  %737 = vmatprep.subr.mxu0 0.0
  %738 = vmatpush1.msra.mxu0 0.0
  %739 = vmatprep.subr.mxu0 0.0
  %740 = vmatpush1.msra.mxu0 0.0
  %741 = vmatprep.subr.mxu0 0.0
  %742 = vmatpush1.msra.mxu0 0.0
  %743 = vmatprep.subr.mxu0 0.0
  %744 = vmatpush1.msra.mxu0 0.0
  %745 = vmatprep.subr.mxu0 0.0
  %746 = vmatpush1.msra.mxu0 0.0
  %747 = vmatprep.subr.mxu0 0.0
  %748 = vmatpush1.msra.mxu0 0.0
  %749 = vmatprep.subr.mxu0 0.0
  %750 = vmatpush1.msra.mxu0 0.0
  %751 = vmatprep.subr.mxu0 0.0
  %752 = vmatpush1.msra.mxu0 0.0
  %753 = vmatprep.subr.mxu0 0.0
  %754 = vmatpush1.msra.mxu0 0.0
  %755 = vmatprep.subr.mxu0 0.0
  %756 = vmatpush1.msra.mxu0 0.0
  %757 = vmatprep.subr.mxu0 0.0
  %758 = vmatpush1.msra.mxu0 0.0
  %759 = vmatprep.subr.mxu0 0.0
  %760 = vmatpush1.msra.mxu0 0.0
  %761 = vmatprep.subr.mxu0 0.0
  %762 = vmatpush1.msra.mxu0 0.0
  %763 = vmatprep.subr.mxu0 0.0
  %764 = vmatpush1.msra.mxu0 0.0
  %765 = vmatprep.subr.mxu0 0.0
  %766 = vmatpush1.msra.mxu0 0.0
  %767 = vmatprep.subr.mxu0 0.0
  %768 = vmatpush1.msra.mxu0 0.0
  %769 = vmatprep.subr.mxu0 0.0
  %770 = vmatpush1.msra.mxu0 0.0
  %771 = vmatprep.subr.mxu0 0.0
  %772 = vmatpush1.msra.mxu0 0.0
  %773 = vmatprep.subr.mxu0 0.0
  %774 = vmatpush1.msra.mxu0 0.0
  %775 = vmatprep.subr.mxu0 0.0
  %776 = vmatpush1.msra.mxu0 0.0
  %777 = vmatprep.subr.mxu0 0.0
  %778 = vmatpush1.msra.mxu0 0.0
  %779 = vmatprep.subr.mxu0 0.0
  %780 = vmatpush1.msra.mxu0 0.0
  %781 = vmatprep.subr.mxu0 0.0
  %782 = vmatpush1.msra.mxu0 0.0
  %783 = vmatprep.mubr.f32.mxu0 0.0
  %784 = vmatmul.mubr.f32.gmra.mrb[0].mxu0 %v717
  %v785 = vpop.f32.mrb[0].mxu0
  %v786 = vadd.f32 0.0, %v785
  %v787 = vpop.f32.mrb[0].mxu0
  %788 = vdwg.mxu0
  %v789 = vadd.f32 %v713, %v786
  %v790 = vxor.u32 %v789, 2147483648
  %v791 = vmul.f32 %v790, 1.442695
  %v792 = vpow.pop %v791
  %v793 = vadd.f32 %v792, 1.0
  %v794 = vrcp.pop %v793
  %v795 = vmul.f32 1.0, %v794
  %v796 = vtanh.pop %v789
  %v797 = vmul.f32 %v795, %v549
  %799 = vrot.lane.b32.xlu0 %v796, 32
  %v800 = vpop.permute.xlu0 %799
  %v802 = vmul.f32 %v795, %v800
  %804 = vrot.lane.b32.xlu0 %v802, 32
  %v805 = vpop.permute.xlu0 %804
  %v807 = vadd.f32 %v797, %v805
  %v808 = vtanh.pop %v807
  %809 = vrot.lane.b32.xlu0 %v567, 32
  %v810 = vpop.permute.xlu0 %809
  %v812 = vadd.f32 %v808, %v810
  %814 = vrot.lane.b32.xlu0 %v812, 32
  %v815 = vpop.permute.xlu0 %814
  %v817 = vmul.f32 %v795, %v815
  %819 = vrot.lane.b32.xlu0 %v817, 64
  %v820 = vpop.permute.xlu0 %819
  %s822 = scalar_lea.vmem %s5, 8
  %823 = vst.msk [vmem:[%s822] sm:$0xf] %vm306, %v820
  %s824 = scalar_lea.vmem %s0, 12
  %v825 = vld [vmem:[%s824] sm:$0xf]
  %v827 = vsel %vm49, %v825, 0
  %829 = vmatprep.subr.mxu0 0.0
  %830 = vmatpush1.msra.mxu0 %v27
  %831 = vmatprep.subr.mxu0 0.0
  %832 = vmatpush1.msra.mxu0 %v28
  %833 = vmatprep.subr.mxu0 0.0
  %834 = vmatpush1.msra.mxu0 %v29
  %835 = vmatprep.subr.mxu0 0.0
  %836 = vmatpush1.msra.mxu0 %v30
  %837 = vmatprep.subr.mxu0 0.0
  %838 = vmatpush1.msra.mxu0 0.0
  %839 = vmatprep.subr.mxu0 0.0
  %840 = vmatpush1.msra.mxu0 0.0
  %841 = vmatprep.subr.mxu0 0.0
  %842 = vmatpush1.msra.mxu0 0.0
  %843 = vmatprep.subr.mxu0 0.0
  %844 = vmatpush1.msra.mxu0 0.0
  %845 = vmatprep.subr.mxu0 0.0
  %846 = vmatpush1.msra.mxu0 0.0
  %847 = vmatprep.subr.mxu0 0.0
  %848 = vmatpush1.msra.mxu0 0.0
  %849 = vmatprep.subr.mxu0 0.0
  %850 = vmatpush1.msra.mxu0 0.0
  %851 = vmatprep.subr.mxu0 0.0
  %852 = vmatpush1.msra.mxu0 0.0
  %853 = vmatprep.subr.mxu0 0.0
  %854 = vmatpush1.msra.mxu0 0.0
  %855 = vmatprep.subr.mxu0 0.0
  %856 = vmatpush1.msra.mxu0 0.0
  %857 = vmatprep.subr.mxu0 0.0
  %858 = vmatpush1.msra.mxu0 0.0
  %859 = vmatprep.subr.mxu0 0.0
  %860 = vmatpush1.msra.mxu0 0.0
  %861 = vmatprep.subr.mxu0 0.0
  %862 = vmatpush1.msra.mxu0 0.0
  %863 = vmatprep.subr.mxu0 0.0
  %864 = vmatpush1.msra.mxu0 0.0
  %865 = vmatprep.subr.mxu0 0.0
  %866 = vmatpush1.msra.mxu0 0.0
  %867 = vmatprep.subr.mxu0 0.0
  %868 = vmatpush1.msra.mxu0 0.0
  %869 = vmatprep.subr.mxu0 0.0
  %870 = vmatpush1.msra.mxu0 0.0
  %871 = vmatprep.subr.mxu0 0.0
  %872 = vmatpush1.msra.mxu0 0.0
  %873 = vmatprep.subr.mxu0 0.0
  %874 = vmatpush1.msra.mxu0 0.0
  %875 = vmatprep.subr.mxu0 0.0
  %876 = vmatpush1.msra.mxu0 0.0
  %877 = vmatprep.subr.mxu0 0.0
  %878 = vmatpush1.msra.mxu0 0.0
  %879 = vmatprep.subr.mxu0 0.0
  %880 = vmatpush1.msra.mxu0 0.0
  %881 = vmatprep.subr.mxu0 0.0
  %882 = vmatpush1.msra.mxu0 0.0
  %883 = vmatprep.subr.mxu0 0.0
  %884 = vmatpush1.msra.mxu0 0.0
  %885 = vmatprep.subr.mxu0 0.0
  %886 = vmatpush1.msra.mxu0 0.0
  %887 = vmatprep.subr.mxu0 0.0
  %888 = vmatpush1.msra.mxu0 0.0
  %889 = vmatprep.subr.mxu0 0.0
  %890 = vmatpush1.msra.mxu0 0.0
  %891 = vmatprep.subr.mxu0 0.0
  %892 = vmatpush1.msra.mxu0 0.0
  %893 = vmatprep.mubr.f32.mxu0 0.0
  %894 = vmatmul.mubr.f32.gmra.mrb[0].mxu0 %v827
  %v895 = vpop.f32.mrb[0].mxu0
  %v896 = vadd.f32 %v47, %v895
  %v897 = vpop.f32.mrb[0].mxu0
  %898 = vdwg.mxu0
  %v899 = vsel %vm49, %v820, 0
  %901 = vmatprep.subr.mxu0 0.0
  %902 = vmatpush1.msra.mxu0 %v31
  %903 = vmatprep.subr.mxu0 0.0
  %904 = vmatpush1.msra.mxu0 %v32
  %905 = vmatprep.subr.mxu0 0.0
  %906 = vmatpush1.msra.mxu0 %v33
  %907 = vmatprep.subr.mxu0 0.0
  %908 = vmatpush1.msra.mxu0 %v34
  %909 = vmatprep.subr.mxu0 0.0
  %910 = vmatpush1.msra.mxu0 0.0
  %911 = vmatprep.subr.mxu0 0.0
  %912 = vmatpush1.msra.mxu0 0.0
  %913 = vmatprep.subr.mxu0 0.0
  %914 = vmatpush1.msra.mxu0 0.0
  %915 = vmatprep.subr.mxu0 0.0
  %916 = vmatpush1.msra.mxu0 0.0
  %917 = vmatprep.subr.mxu0 0.0
  %918 = vmatpush1.msra.mxu0 0.0
  %919 = vmatprep.subr.mxu0 0.0
  %920 = vmatpush1.msra.mxu0 0.0
  %921 = vmatprep.subr.mxu0 0.0
  %922 = vmatpush1.msra.mxu0 0.0
  %923 = vmatprep.subr.mxu0 0.0
  %924 = vmatpush1.msra.mxu0 0.0
  %925 = vmatprep.subr.mxu0 0.0
  %926 = vmatpush1.msra.mxu0 0.0
  %927 = vmatprep.subr.mxu0 0.0
  %928 = vmatpush1.msra.mxu0 0.0
  %929 = vmatprep.subr.mxu0 0.0
  %930 = vmatpush1.msra.mxu0 0.0
  %931 = vmatprep.subr.mxu0 0.0
  %932 = vmatpush1.msra.mxu0 0.0
  %933 = vmatprep.subr.mxu0 0.0
  %934 = vmatpush1.msra.mxu0 0.0
  %935 = vmatprep.subr.mxu0 0.0
  %936 = vmatpush1.msra.mxu0 0.0
  %937 = vmatprep.subr.mxu0 0.0
  %938 = vmatpush1.msra.mxu0 0.0
  %939 = vmatprep.subr.mxu0 0.0
  %940 = vmatpush1.msra.mxu0 0.0
  %941 = vmatprep.subr.mxu0 0.0
  %942 = vmatpush1.msra.mxu0 0.0
  %943 = vmatprep.subr.mxu0 0.0
  %944 = vmatpush1.msra.mxu0 0.0
  %945 = vmatprep.subr.mxu0 0.0
  %946 = vmatpush1.msra.mxu0 0.0
  %947 = vmatprep.subr.mxu0 0.0
  %948 = vmatpush1.msra.mxu0 0.0
  %949 = vmatprep.subr.mxu0 0.0
  %950 = vmatpush1.msra.mxu0 0.0
  %951 = vmatprep.subr.mxu0 0.0
  %952 = vmatpush1.msra.mxu0 0.0
  %953 = vmatprep.subr.mxu0 0.0
  %954 = vmatpush1.msra.mxu0 0.0
  %955 = vmatprep.subr.mxu0 0.0
  %956 = vmatpush1.msra.mxu0 0.0
  %957 = vmatprep.subr.mxu0 0.0
  %958 = vmatpush1.msra.mxu0 0.0
  %959 = vmatprep.subr.mxu0 0.0
  %960 = vmatpush1.msra.mxu0 0.0
  %961 = vmatprep.subr.mxu0 0.0
  %962 = vmatpush1.msra.mxu0 0.0
  %963 = vmatprep.subr.mxu0 0.0
  %964 = vmatpush1.msra.mxu0 0.0
  %965 = vmatprep.mubr.f32.mxu0 0.0
  %966 = vmatmul.mubr.f32.gmra.mrb[0].mxu0 %v899
  %v967 = vpop.f32.mrb[0].mxu0
  %v968 = vadd.f32 0.0, %v967
  %v969 = vpop.f32.mrb[0].mxu0
  %970 = vdwg.mxu0
  %v971 = vadd.f32 %v896, %v968
  %973 = vrot.lane.b32.xlu0 %v807, 96
  %v974 = vpop.permute.xlu0 %973
  %v975 = vsel %vm49, %v974, 0
  %977 = vmatprep.subr.mxu0 0.0
  %978 = vmatpush1.msra.mxu0 %v35
  %979 = vmatprep.subr.mxu0 0.0
  %980 = vmatpush1.msra.mxu0 %v36
  %981 = vmatprep.subr.mxu0 0.0
  %982 = vmatpush1.msra.mxu0 %v37
  %983 = vmatprep.subr.mxu0 0.0
  %984 = vmatpush1.msra.mxu0 %v38
  %985 = vmatprep.subr.mxu0 0.0
  %986 = vmatpush1.msra.mxu0 0.0
  %987 = vmatprep.subr.mxu0 0.0
  %988 = vmatpush1.msra.mxu0 0.0
  %989 = vmatprep.subr.mxu0 0.0
  %990 = vmatpush1.msra.mxu0 0.0
  %991 = vmatprep.subr.mxu0 0.0
  %992 = vmatpush1.msra.mxu0 0.0
  %993 = vmatprep.subr.mxu0 0.0
  %994 = vmatpush1.msra.mxu0 0.0
  %995 = vmatprep.subr.mxu0 0.0
  %996 = vmatpush1.msra.mxu0 0.0
  %997 = vmatprep.subr.mxu0 0.0
  %998 = vmatpush1.msra.mxu0 0.0
  %999 = vmatprep.subr.mxu0 0.0
  %1000 = vmatpush1.msra.mxu0 0.0
  %1001 = vmatprep.subr.mxu0 0.0
  %1002 = vmatpush1.msra.mxu0 0.0
  %1003 = vmatprep.subr.mxu0 0.0
  %1004 = vmatpush1.msra.mxu0 0.0
  %1005 = vmatprep.subr.mxu0 0.0
  %1006 = vmatpush1.msra.mxu0 0.0
  %1007 = vmatprep.subr.mxu0 0.0
  %1008 = vmatpush1.msra.mxu0 0.0
  %1009 = vmatprep.subr.mxu0 0.0
  %1010 = vmatpush1.msra.mxu0 0.0
  %1011 = vmatprep.subr.mxu0 0.0
  %1012 = vmatpush1.msra.mxu0 0.0
  %1013 = vmatprep.subr.mxu0 0.0
  %1014 = vmatpush1.msra.mxu0 0.0
  %1015 = vmatprep.subr.mxu0 0.0
  %1016 = vmatpush1.msra.mxu0 0.0
  %1017 = vmatprep.subr.mxu0 0.0
  %1018 = vmatpush1.msra.mxu0 0.0
  %1019 = vmatprep.subr.mxu0 0.0
  %1020 = vmatpush1.msra.mxu0 0.0
  %1021 = vmatprep.subr.mxu0 0.0
  %1022 = vmatpush1.msra.mxu0 0.0
  %1023 = vmatprep.subr.mxu0 0.0
  %1024 = vmatpush1.msra.mxu0 0.0
  %1025 = vmatprep.subr.mxu0 0.0
  %1026 = vmatpush1.msra.mxu0 0.0
  %1027 = vmatprep.subr.mxu0 0.0
  %1028 = vmatpush1.msra.mxu0 0.0
  %1029 = vmatprep.subr.mxu0 0.0
  %1030 = vmatpush1.msra.mxu0 0.0
  %1031 = vmatprep.subr.mxu0 0.0
  %1032 = vmatpush1.msra.mxu0 0.0
  %1033 = vmatprep.subr.mxu0 0.0
  %1034 = vmatpush1.msra.mxu0 0.0
  %1035 = vmatprep.subr.mxu0 0.0
  %1036 = vmatpush1.msra.mxu0 0.0
  %1037 = vmatprep.subr.mxu0 0.0
  %1038 = vmatpush1.msra.mxu0 0.0
  %1039 = vmatprep.subr.mxu0 0.0
  %1040 = vmatpush1.msra.mxu0 0.0
  %1041 = vmatprep.mubr.f32.mxu0 0.0
  %1042 = vmatmul.mubr.f32.gmra.mrb[0].mxu0 %v975
  %v1043 = vpop.f32.mrb[0].mxu0
  %v1044 = vadd.f32 0.0, %v1043
  %v1045 = vpop.f32.mrb[0].mxu0
  %1046 = vdwg.mxu0
  %v1047 = vadd.f32 %v971, %v1044
  %v1048 = vxor.u32 %v1047, 2147483648
  %v1049 = vmul.f32 %v1048, 1.442695
  %v1050 = vpow.pop %v1049
  %v1051 = vadd.f32 %v1050, 1.0
  %v1052 = vrcp.pop %v1051
  %v1053 = vmul.f32 1.0, %v1052
  %v1054 = vtanh.pop %v1047
  %v1055 = vmul.f32 %v1053, %v807
  %1057 = vrot.lane.b32.xlu0 %v1054, 32
  %v1058 = vpop.permute.xlu0 %1057
  %v1060 = vmul.f32 %v1053, %v1058
  %1062 = vrot.lane.b32.xlu0 %v1060, 32
  %v1063 = vpop.permute.xlu0 %1062
  %v1065 = vadd.f32 %v1055, %v1063
  %v1066 = vtanh.pop %v1065
  %1067 = vrot.lane.b32.xlu0 %v825, 32
  %v1068 = vpop.permute.xlu0 %1067
  %v1070 = vadd.f32 %v1066, %v1068
  %1072 = vrot.lane.b32.xlu0 %v1070, 32
  %v1073 = vpop.permute.xlu0 %1072
  %v1075 = vmul.f32 %v1053, %v1073
  %1077 = vrot.lane.b32.xlu0 %v1075, 64
  %v1078 = vpop.permute.xlu0 %1077
  %s1080 = scalar_lea.vmem %s5, 12
  %1081 = vst.msk [vmem:[%s1080] sm:$0xf] %vm306, %v1078
  %1082 = vst.msk [vmem:[#allocation2] sm:$0xf] %vm306, %v1078
  %1084 = vrot.lane.b32.xlu0 %v1065, 96
  %v1085 = vpop.permute.xlu0 %1084
  %1087 = vst.msk [vmem:[#allocation3] sm:$0xf] %vm306, %v1085
  // Predicated region
  $region26: #{rnn_forward.4} parent=0 // pred_check
    _
  $region27: #{rnn_forward.4} parent=0 // pred_check_branch
    %1089 = sbr.rel (0) target = $region29
  $region28: #{rnn_forward.4} parent=0 // pred_region
    _
  $region29: #{rnn_forward.4} parent=0 // pred_fallthru
    _
  // Predicated region
  $region30: #{rnn_forward.4} parent=0 // pred_check
    _
  $region31: #{rnn_forward.4} parent=0 // pred_check_branch
    %1091 = sbr.rel (0) target = $region33
  $region32: #{rnn_forward.4} parent=0 // pred_region
    _
  $region33: #{rnn_forward.4} parent=0 // pred_fallthru
    _

// kernel: rnn_forward.3
$region0: #{rnn_forward.3}
  #allocation0 [shape = 'u32[]', space=smem, size = 0x4, offset = 0x4, fixed_abs, tag = 'smem constant byte address 0x4 - core index']
  #allocation1 [shape = 'u32[144,128]{1,0:T(1,128)}', space=vmem, size = 0x12000, scoped, tag = 'internal scratch']
  #allocation2 [shape = 'f32[2,32]{1,0:T(2,128)}', space=vmem, size = 0x400, scoped, tag = 'scratch operand']
  #allocation3 [shape = 'f32[2,32]{1,0:T(2,128)}', space=vmem, size = 0x400, scoped, tag = 'scratch operand']
  %s0 = inlined_call_operand.vmem [shape: f32[8,2,8], index: 0, kind: input, shape index: {}]
  %s1 = inlined_call_operand.vmem [shape: f32[8,160], index: 1, kind: input, shape index: {}]
  %s2 = inlined_call_operand.vmem [shape: f32[32,160], index: 2, kind: input, shape index: {}]
  %s3 = inlined_call_operand.vmem [shape: f32[32,160], index: 3, kind: input, shape index: {}]
  %s4 = inlined_call_operand.vmem [shape: f32[1,160], index: 4, kind: input, shape index: {}]
  %s5 = inlined_call_operand.vmem [shape: f32[8,2,32], index: 5, kind: output, shape index: {}]
  %s6 = sld [smem:[#allocation0]]
  $region34: #{rnn_forward.3} parent=0
    _
  %s8 = ssub.s32 1, %s6
  %s9 = scalar_select 0, %s8, %s6
  // Predicated region
  $region2: #{rnn_forward.3} parent=0 // pred_check
    _
  $region3: #{rnn_forward.3} parent=0 // pred_check_branch
    %11 = sbr.rel (0) target = $region5
  $region4: #{rnn_forward.3} parent=0 // pred_region
    _
  $region5: #{rnn_forward.3} parent=0 // pred_fallthru
    _
  // Predicated region
  $region6: #{rnn_forward.3} parent=0 // pred_check
    _
  $region7: #{rnn_forward.3} parent=0 // pred_check_branch
    %13 = sbr.rel (0) target = $region9
  $region8: #{rnn_forward.3} parent=0 // pred_region
    _
  $region9: #{rnn_forward.3} parent=0 // pred_fallthru
    _
  // Predicated region
  $region10: #{rnn_forward.3} parent=0 // pred_check
    _
  $region11: #{rnn_forward.3} parent=0 // pred_check_branch
    %15 = sbr.rel (0) target = $region13
  $region12: #{rnn_forward.3} parent=0 // pred_region
    _
  $region13: #{rnn_forward.3} parent=0 // pred_fallthru
    _
  // Predicated region
  $region14: #{rnn_forward.3} parent=0 // pred_check
    _
  $region15: #{rnn_forward.3} parent=0 // pred_check_branch
    %17 = sbr.rel (0) target = $region17
  $region16: #{rnn_forward.3} parent=0 // pred_region
    _
  $region17: #{rnn_forward.3} parent=0 // pred_fallthru
    _
  // Predicated region
  $region18: #{rnn_forward.3} parent=0 // pred_check
    _
  $region19: #{rnn_forward.3} parent=0 // pred_check_branch
    %19 = sbr.rel (0) target = $region21
  $region20: #{rnn_forward.3} parent=0 // pred_region
    _
  $region21: #{rnn_forward.3} parent=0 // pred_fallthru
    _
  %p20 = scmp.eq.s32.totalorder 0, 0
  // Predicated region
  $region22: #{rnn_forward.3} parent=0 // pred_check
    %p21 = pneg %p20
  $region23: #{rnn_forward.3} parent=0 // pred_check_branch
    %23 = sbr.rel (%p21) target = $region25
  $region24: #{rnn_forward.3} parent=0 // pred_region
    %vm24 = vcmask 254976
    %25 = vst.msk [vmem:[#allocation2] sm:$0x3] %vm24, 0.0
    %26 = vst.msk [vmem:[#allocation3] sm:$0x3] %vm24, 0.0
  $region25: #{rnn_forward.3} parent=0 // pred_fallthru
    _
  %v27 = vld [vmem:[%s1] sm:$0xff]
  %v28 = vld [vmem:[%s1 + $0x8] sm:$0xff]
  %v29 = vld [vmem:[%s2] sm:$0xff]
  %v30 = vld [vmem:[%s2 + $0x8] sm:$0xff]
  %v31 = vld [vmem:[%s2 + $0x10] sm:$0xff]
  %v32 = vld [vmem:[%s2 + $0x18] sm:$0xff]
  %v33 = vld [vmem:[%s2 + $0x20] sm:$0xff]
  %v34 = vld [vmem:[%s2 + $0x28] sm:$0xff]
  %v35 = vld [vmem:[%s2 + $0x30] sm:$0xff]
  %v36 = vld [vmem:[%s2 + $0x38] sm:$0xff]
  %v37 = vld [vmem:[%s3] sm:$0xff]
  %v38 = vld [vmem:[%s3 + $0x8] sm:$0xff]
  %v39 = vld [vmem:[%s3 + $0x10] sm:$0xff]
  %v40 = vld [vmem:[%s3 + $0x18] sm:$0xff]
  %v41 = vld [vmem:[%s3 + $0x20] sm:$0xff]
  %v42 = vld [vmem:[%s3 + $0x28] sm:$0xff]
  %v43 = vld [vmem:[%s3 + $0x30] sm:$0xff]
  %v44 = vld [vmem:[%s3 + $0x38] sm:$0xff]
  %v45 = vld [vmem:[%s4] sm:$0x3]
  %v46 = vld [vmem:[#allocation2] sm:$0x3]
  %v47 = vld [vmem:[#allocation3] sm:$0x3]
  %v48 = vld [vmem:[%s0] sm:$0x3]
  %v50 = vlaneseq
  %v51 = vshrl.u32 %v50, 7
  %v52 = vsub.s32 0, %v51
  %v53 = vrot.slane %v45, %v52
  %v54 = vlaneseq
  %v55 = vshrl.u32 %v54, 7
  %v56 = vsub.s32 1, %v55
  %v57 = vrot.slane %v45, %v56
  %vm60 = vcmask 64512
  %v62 = vsel %vm60, %v48, 0
  %64 = vmatprep.subr.mxu0 %v28
  %65 = vmatpush1.msra.mxu0 %v27
  %66 = vmatprep.subr.mxu0 0.0
  %67 = vmatpush1.msra.mxu0 0.0
  %68 = vmatprep.subr.mxu0 0.0
  %69 = vmatpush1.msra.mxu0 0.0
  %70 = vmatprep.subr.mxu0 0.0
  %71 = vmatpush1.msra.mxu0 0.0
  %72 = vmatprep.subr.mxu0 0.0
  %73 = vmatpush1.msra.mxu0 0.0
  %74 = vmatprep.subr.mxu0 0.0
  %75 = vmatpush1.msra.mxu0 0.0
  %76 = vmatprep.subr.mxu0 0.0
  %77 = vmatpush1.msra.mxu0 0.0
  %78 = vmatprep.subr.mxu0 0.0
  %79 = vmatpush1.msra.mxu0 0.0
  %80 = vmatprep.subr.mxu0 0.0
  %81 = vmatpush1.msra.mxu0 0.0
  %82 = vmatprep.subr.mxu0 0.0
  %83 = vmatpush1.msra.mxu0 0.0
  %84 = vmatprep.subr.mxu0 0.0
  %85 = vmatpush1.msra.mxu0 0.0
  %86 = vmatprep.subr.mxu0 0.0
  %87 = vmatpush1.msra.mxu0 0.0
  %88 = vmatprep.subr.mxu0 0.0
  %89 = vmatpush1.msra.mxu0 0.0
  %90 = vmatprep.subr.mxu0 0.0
  %91 = vmatpush1.msra.mxu0 0.0
  %92 = vmatprep.subr.mxu0 0.0
  %93 = vmatpush1.msra.mxu0 0.0
  %94 = vmatprep.subr.mxu0 0.0
  %95 = vmatpush1.msra.mxu0 0.0
  %96 = vmatprep.subr.mxu0 0.0
  %97 = vmatpush1.msra.mxu0 0.0
  %98 = vmatprep.subr.mxu0 0.0
  %99 = vmatpush1.msra.mxu0 0.0
  %100 = vmatprep.subr.mxu0 0.0
  %101 = vmatpush1.msra.mxu0 0.0
  %102 = vmatprep.subr.mxu0 0.0
  %103 = vmatpush1.msra.mxu0 0.0
  %104 = vmatprep.subr.mxu0 0.0
  %105 = vmatpush1.msra.mxu0 0.0
  %106 = vmatprep.subr.mxu0 0.0
  %107 = vmatpush1.msra.mxu0 0.0
  %108 = vmatprep.subr.mxu0 0.0
  %109 = vmatpush1.msra.mxu0 0.0
  %110 = vmatprep.subr.mxu0 0.0
  %111 = vmatpush1.msra.mxu0 0.0
  %112 = vmatprep.subr.mxu0 0.0
  %113 = vmatpush1.msra.mxu0 0.0
  %114 = vmatprep.subr.mxu0 0.0
  %115 = vmatpush1.msra.mxu0 0.0
  %116 = vmatprep.subr.mxu0 0.0
  %117 = vmatpush1.msra.mxu0 0.0
  %118 = vmatprep.subr.mxu0 0.0
  %119 = vmatpush1.msra.mxu0 0.0
  %120 = vmatprep.subr.mxu0 0.0
  %121 = vmatpush1.msra.mxu0 0.0
  %122 = vmatprep.subr.mxu0 0.0
  %123 = vmatpush1.msra.mxu0 0.0
  %124 = vmatprep.subr.mxu0 0.0
  %125 = vmatpush1.msra.mxu0 0.0
  %126 = vmatprep.subr.mxu0 0.0
  %127 = vmatpush1.msra.mxu0 0.0
  %128 = vmatprep.mubr.f32.mxu0 0.0
  %129 = vmatmul.mubr.f32.gmra.mrb[0].mxu0 %v62
  %v130 = vpop.f32.mrb[0].mxu0
  %v131 = vadd.f32 %v53, %v130
  %v132 = vpop.f32.mrb[0].mxu0
  %v133 = vadd.f32 %v57, %v132
  %134 = vdwg.mxu0
  %vm135 = vcmask 261120
  %v137 = vsel %vm135, %v46, 0
  %139 = vmatprep.subr.mxu0 %v30
  %140 = vmatpush1.msra.mxu0 %v29
  %141 = vmatprep.subr.mxu0 %v32
  %142 = vmatpush1.msra.mxu0 %v31
  %143 = vmatprep.subr.mxu0 %v34
  %144 = vmatpush1.msra.mxu0 %v33
  %145 = vmatprep.subr.mxu0 %v36
  %146 = vmatpush1.msra.mxu0 %v35
  %147 = vmatprep.subr.mxu0 0.0
  %148 = vmatpush1.msra.mxu0 0.0
  %149 = vmatprep.subr.mxu0 0.0
  %150 = vmatpush1.msra.mxu0 0.0
  %151 = vmatprep.subr.mxu0 0.0
  %152 = vmatpush1.msra.mxu0 0.0
  %153 = vmatprep.subr.mxu0 0.0
  %154 = vmatpush1.msra.mxu0 0.0
  %155 = vmatprep.subr.mxu0 0.0
  %156 = vmatpush1.msra.mxu0 0.0
  %157 = vmatprep.subr.mxu0 0.0
  %158 = vmatpush1.msra.mxu0 0.0
  %159 = vmatprep.subr.mxu0 0.0
  %160 = vmatpush1.msra.mxu0 0.0
  %161 = vmatprep.subr.mxu0 0.0
  %162 = vmatpush1.msra.mxu0 0.0
  %163 = vmatprep.subr.mxu0 0.0
  %164 = vmatpush1.msra.mxu0 0.0
  %165 = vmatprep.subr.mxu0 0.0
  %166 = vmatpush1.msra.mxu0 0.0
  %167 = vmatprep.subr.mxu0 0.0
  %168 = vmatpush1.msra.mxu0 0.0
  %169 = vmatprep.subr.mxu0 0.0
  %170 = vmatpush1.msra.mxu0 0.0
  %171 = vmatprep.subr.mxu0 0.0
  %172 = vmatpush1.msra.mxu0 0.0
  %173 = vmatprep.subr.mxu0 0.0
  %174 = vmatpush1.msra.mxu0 0.0
  %175 = vmatprep.subr.mxu0 0.0
  %176 = vmatpush1.msra.mxu0 0.0
  %177 = vmatprep.subr.mxu0 0.0
  %178 = vmatpush1.msra.mxu0 0.0
  %179 = vmatprep.subr.mxu0 0.0
  %180 = vmatpush1.msra.mxu0 0.0
  %181 = vmatprep.subr.mxu0 0.0
  %182 = vmatpush1.msra.mxu0 0.0
  %183 = vmatprep.subr.mxu0 0.0
  %184 = vmatpush1.msra.mxu0 0.0
  %185 = vmatprep.subr.mxu0 0.0
  %186 = vmatpush1.msra.mxu0 0.0
  %187 = vmatprep.subr.mxu0 0.0
  %188 = vmatpush1.msra.mxu0 0.0
  %189 = vmatprep.subr.mxu0 0.0
  %190 = vmatpush1.msra.mxu0 0.0
  %191 = vmatprep.subr.mxu0 0.0
  %192 = vmatpush1.msra.mxu0 0.0
  %193 = vmatprep.subr.mxu0 0.0
  %194 = vmatpush1.msra.mxu0 0.0
  %195 = vmatprep.subr.mxu0 0.0
  %196 = vmatpush1.msra.mxu0 0.0
  %197 = vmatprep.subr.mxu0 0.0
  %198 = vmatpush1.msra.mxu0 0.0
  %199 = vmatprep.subr.mxu0 0.0
  %200 = vmatpush1.msra.mxu0 0.0
  %201 = vmatprep.subr.mxu0 0.0
  %202 = vmatpush1.msra.mxu0 0.0
  %203 = vmatprep.mubr.f32.mxu0 0.0
  %204 = vmatmul.mubr.f32.gmra.mrb[0].mxu0 %v137
  %v205 = vpop.f32.mrb[0].mxu0
  %v206 = vadd.f32 0.0, %v205
  %v207 = vpop.f32.mrb[0].mxu0
  %v208 = vadd.f32 0.0, %v207
  %209 = vdwg.mxu0
  %v210 = vadd.f32 %v131, %v206
  %v211 = vadd.f32 %v133, %v208
  %v213 = vsel %vm135, %v47, 0
  %215 = vmatprep.subr.mxu0 %v38
  %216 = vmatpush1.msra.mxu0 %v37
  %217 = vmatprep.subr.mxu0 %v40
  %218 = vmatpush1.msra.mxu0 %v39
  %219 = vmatprep.subr.mxu0 %v42
  %220 = vmatpush1.msra.mxu0 %v41
  %221 = vmatprep.subr.mxu0 %v44
  %222 = vmatpush1.msra.mxu0 %v43
  %223 = vmatprep.subr.mxu0 0.0
  %224 = vmatpush1.msra.mxu0 0.0
  %225 = vmatprep.subr.mxu0 0.0
  %226 = vmatpush1.msra.mxu0 0.0
  %227 = vmatprep.subr.mxu0 0.0
  %228 = vmatpush1.msra.mxu0 0.0
  %229 = vmatprep.subr.mxu0 0.0
  %230 = vmatpush1.msra.mxu0 0.0
  %231 = vmatprep.subr.mxu0 0.0
  %232 = vmatpush1.msra.mxu0 0.0
  %233 = vmatprep.subr.mxu0 0.0
  %234 = vmatpush1.msra.mxu0 0.0
  %235 = vmatprep.subr.mxu0 0.0
  %236 = vmatpush1.msra.mxu0 0.0
  %237 = vmatprep.subr.mxu0 0.0
  %238 = vmatpush1.msra.mxu0 0.0
  %239 = vmatprep.subr.mxu0 0.0
  %240 = vmatpush1.msra.mxu0 0.0
  %241 = vmatprep.subr.mxu0 0.0
  %242 = vmatpush1.msra.mxu0 0.0
  %243 = vmatprep.subr.mxu0 0.0
  %244 = vmatpush1.msra.mxu0 0.0
  %245 = vmatprep.subr.mxu0 0.0
  %246 = vmatpush1.msra.mxu0 0.0
  %247 = vmatprep.subr.mxu0 0.0
  %248 = vmatpush1.msra.mxu0 0.0
  %249 = vmatprep.subr.mxu0 0.0
  %250 = vmatpush1.msra.mxu0 0.0
  %251 = vmatprep.subr.mxu0 0.0
  %252 = vmatpush1.msra.mxu0 0.0
  %253 = vmatprep.subr.mxu0 0.0
  %254 = vmatpush1.msra.mxu0 0.0
  %255 = vmatprep.subr.mxu0 0.0
  %256 = vmatpush1.msra.mxu0 0.0
  %257 = vmatprep.subr.mxu0 0.0
  %258 = vmatpush1.msra.mxu0 0.0
  %259 = vmatprep.subr.mxu0 0.0
  %260 = vmatpush1.msra.mxu0 0.0
  %261 = vmatprep.subr.mxu0 0.0
  %262 = vmatpush1.msra.mxu0 0.0
  %263 = vmatprep.subr.mxu0 0.0
  %264 = vmatpush1.msra.mxu0 0.0
  %265 = vmatprep.subr.mxu0 0.0
  %266 = vmatpush1.msra.mxu0 0.0
  %267 = vmatprep.subr.mxu0 0.0
  %268 = vmatpush1.msra.mxu0 0.0
  %269 = vmatprep.subr.mxu0 0.0
  %270 = vmatpush1.msra.mxu0 0.0
  %271 = vmatprep.subr.mxu0 0.0
  %272 = vmatpush1.msra.mxu0 0.0
  %273 = vmatprep.subr.mxu0 0.0
  %274 = vmatpush1.msra.mxu0 0.0
  %275 = vmatprep.subr.mxu0 0.0
  %276 = vmatpush1.msra.mxu0 0.0
  %277 = vmatprep.subr.mxu0 0.0
  %278 = vmatpush1.msra.mxu0 0.0
  %279 = vmatprep.mubr.f32.mxu0 0.0
  %280 = vmatmul.mubr.f32.gmra.mrb[0].mxu0 %v213
  %v281 = vpop.f32.mrb[0].mxu0
  %v282 = vadd.f32 0.0, %v281
  %v283 = vpop.f32.mrb[0].mxu0
  %v284 = vadd.f32 0.0, %v283
  %285 = vdwg.mxu0
  %v286 = vadd.f32 %v210, %v282
  %v287 = vadd.f32 %v211, %v284
  %v288 = vxor.u32 %v286, 2147483648
  %v289 = vmul.f32 %v288, 1.442695
  %v290 = vpow.pop %v289
  %v291 = vadd.f32 %v290, 1.0
  %v292 = vrcp.pop %v291
  %v293 = vmul.f32 1.0, %v292
  %v294 = vtanh.pop %v286
  %295 = vrot.lane.b32.xlu0 %v47, 32
  %v296 = vpop.permute.xlu0 %295
  %v298 = vmul.f32 %v293, %v296
  %300 = vrot.lane.b32.xlu0 %v294, 32
  %v301 = vpop.permute.xlu0 %300
  %v303 = vmul.f32 %v293, %v301
  %305 = vrot.lane.b32.xlu0 %v303, 32
  %v306 = vpop.permute.xlu0 %305
  %v308 = vadd.f32 %v298, %v306
  %v309 = vtanh.pop %v308
  %311 = vrot.lane.b32.xlu0 %v287, 32
  %v312 = vpop.permute.xlu0 %311
  %v314 = vadd.f32 %v309, %v312
  %316 = vrot.lane.b32.xlu0 %v314, 32
  %v317 = vpop.permute.xlu0 %316
  %v319 = vmul.f32 %v293, %v317
  %321 = vrot.lane.b32.xlu0 %v319, 64
  %v322 = vpop.permute.xlu0 %321
  %vm324 = vcmask 254976
  %325 = vst.msk [vmem:[%s5] sm:$0x3] %vm324, %v322
  %s326 = scalar_lea.vmem %s0, 2
  %v327 = vld [vmem:[%s326] sm:$0x3]
  %v329 = vsel %vm60, %v327, 0
  %331 = vmatprep.subr.mxu0 %v28
  %332 = vmatpush1.msra.mxu0 %v27
  %333 = vmatprep.subr.mxu0 0.0
  %334 = vmatpush1.msra.mxu0 0.0
  %335 = vmatprep.subr.mxu0 0.0
  %336 = vmatpush1.msra.mxu0 0.0
  %337 = vmatprep.subr.mxu0 0.0
  %338 = vmatpush1.msra.mxu0 0.0
  %339 = vmatprep.subr.mxu0 0.0
  %340 = vmatpush1.msra.mxu0 0.0
  %341 = vmatprep.subr.mxu0 0.0
  %342 = vmatpush1.msra.mxu0 0.0
  %343 = vmatprep.subr.mxu0 0.0
  %344 = vmatpush1.msra.mxu0 0.0
  %345 = vmatprep.subr.mxu0 0.0
  %346 = vmatpush1.msra.mxu0 0.0
  %347 = vmatprep.subr.mxu0 0.0
  %348 = vmatpush1.msra.mxu0 0.0
  %349 = vmatprep.subr.mxu0 0.0
  %350 = vmatpush1.msra.mxu0 0.0
  %351 = vmatprep.subr.mxu0 0.0
  %352 = vmatpush1.msra.mxu0 0.0
  %353 = vmatprep.subr.mxu0 0.0
  %354 = vmatpush1.msra.mxu0 0.0
  %355 = vmatprep.subr.mxu0 0.0
  %356 = vmatpush1.msra.mxu0 0.0
  %357 = vmatprep.subr.mxu0 0.0
  %358 = vmatpush1.msra.mxu0 0.0
  %359 = vmatprep.subr.mxu0 0.0
  %360 = vmatpush1.msra.mxu0 0.0
  %361 = vmatprep.subr.mxu0 0.0
  %362 = vmatpush1.msra.mxu0 0.0
  %363 = vmatprep.subr.mxu0 0.0
  %364 = vmatpush1.msra.mxu0 0.0
  %365 = vmatprep.subr.mxu0 0.0
  %366 = vmatpush1.msra.mxu0 0.0
  %367 = vmatprep.subr.mxu0 0.0
  %368 = vmatpush1.msra.mxu0 0.0
  %369 = vmatprep.subr.mxu0 0.0
  %370 = vmatpush1.msra.mxu0 0.0
  %371 = vmatprep.subr.mxu0 0.0
  %372 = vmatpush1.msra.mxu0 0.0
  %373 = vmatprep.subr.mxu0 0.0
  %374 = vmatpush1.msra.mxu0 0.0
  %375 = vmatprep.subr.mxu0 0.0
  %376 = vmatpush1.msra.mxu0 0.0
  %377 = vmatprep.subr.mxu0 0.0
  %378 = vmatpush1.msra.mxu0 0.0
  %379 = vmatprep.subr.mxu0 0.0
  %380 = vmatpush1.msra.mxu0 0.0
  %381 = vmatprep.subr.mxu0 0.0
  %382 = vmatpush1.msra.mxu0 0.0
  %383 = vmatprep.subr.mxu0 0.0
  %384 = vmatpush1.msra.mxu0 0.0
  %385 = vmatprep.subr.mxu0 0.0
  %386 = vmatpush1.msra.mxu0 0.0
  %387 = vmatprep.subr.mxu0 0.0
  %388 = vmatpush1.msra.mxu0 0.0
  %389 = vmatprep.subr.mxu0 0.0
  %390 = vmatpush1.msra.mxu0 0.0
  %391 = vmatprep.subr.mxu0 0.0
  %392 = vmatpush1.msra.mxu0 0.0
  %393 = vmatprep.subr.mxu0 0.0
  %394 = vmatpush1.msra.mxu0 0.0
  %395 = vmatprep.mubr.f32.mxu0 0.0
  %396 = vmatmul.mubr.f32.gmra.mrb[0].mxu0 %v329
  %v397 = vpop.f32.mrb[0].mxu0
  %v398 = vadd.f32 %v53, %v397
  %v399 = vpop.f32.mrb[0].mxu0
  %v400 = vadd.f32 %v57, %v399
  %401 = vdwg.mxu0
  %v402 = vsel %vm135, %v322, 0
  %404 = vmatprep.subr.mxu0 %v30
  %405 = vmatpush1.msra.mxu0 %v29
  %406 = vmatprep.subr.mxu0 %v32
  %407 = vmatpush1.msra.mxu0 %v31
  %408 = vmatprep.subr.mxu0 %v34
  %409 = vmatpush1.msra.mxu0 %v33
  %410 = vmatprep.subr.mxu0 %v36
  %411 = vmatpush1.msra.mxu0 %v35
  %412 = vmatprep.subr.mxu0 0.0
  %413 = vmatpush1.msra.mxu0 0.0
  %414 = vmatprep.subr.mxu0 0.0
  %415 = vmatpush1.msra.mxu0 0.0
  %416 = vmatprep.subr.mxu0 0.0
  %417 = vmatpush1.msra.mxu0 0.0
  %418 = vmatprep.subr.mxu0 0.0
  %419 = vmatpush1.msra.mxu0 0.0
  %420 = vmatprep.subr.mxu0 0.0
  %421 = vmatpush1.msra.mxu0 0.0
  %422 = vmatprep.subr.mxu0 0.0
  %423 = vmatpush1.msra.mxu0 0.0
  %424 = vmatprep.subr.mxu0 0.0
  %425 = vmatpush1.msra.mxu0 0.0
  %426 = vmatprep.subr.mxu0 0.0
  %427 = vmatpush1.msra.mxu0 0.0
  %428 = vmatprep.subr.mxu0 0.0
  %429 = vmatpush1.msra.mxu0 0.0
  %430 = vmatprep.subr.mxu0 0.0
  %431 = vmatpush1.msra.mxu0 0.0
  %432 = vmatprep.subr.mxu0 0.0
  %433 = vmatpush1.msra.mxu0 0.0
  %434 = vmatprep.subr.mxu0 0.0
  %435 = vmatpush1.msra.mxu0 0.0
  %436 = vmatprep.subr.mxu0 0.0
  %437 = vmatpush1.msra.mxu0 0.0
  %438 = vmatprep.subr.mxu0 0.0
  %439 = vmatpush1.msra.mxu0 0.0
  %440 = vmatprep.subr.mxu0 0.0
  %441 = vmatpush1.msra.mxu0 0.0
  %442 = vmatprep.subr.mxu0 0.0
  %443 = vmatpush1.msra.mxu0 0.0
  %444 = vmatprep.subr.mxu0 0.0
  %445 = vmatpush1.msra.mxu0 0.0
  %446 = vmatprep.subr.mxu0 0.0
  %447 = vmatpush1.msra.mxu0 0.0
  %448 = vmatprep.subr.mxu0 0.0
  %449 = vmatpush1.msra.mxu0 0.0
  %450 = vmatprep.subr.mxu0 0.0
  %451 = vmatpush1.msra.mxu0 0.0
  %452 = vmatprep.subr.mxu0 0.0
  %453 = vmatpush1.msra.mxu0 0.0
  %454 = vmatprep.subr.mxu0 0.0
  %455 = vmatpush1.msra.mxu0 0.0
  %456 = vmatprep.subr.mxu0 0.0
  %457 = vmatpush1.msra.mxu0 0.0
  %458 = vmatprep.subr.mxu0 0.0
  %459 = vmatpush1.msra.mxu0 0.0
  %460 = vmatprep.subr.mxu0 0.0
  %461 = vmatpush1.msra.mxu0 0.0
  %462 = vmatprep.subr.mxu0 0.0
  %463 = vmatpush1.msra.mxu0 0.0
  %464 = vmatprep.subr.mxu0 0.0
  %465 = vmatpush1.msra.mxu0 0.0
  %466 = vmatprep.subr.mxu0 0.0
  %467 = vmatpush1.msra.mxu0 0.0
  %468 = vmatprep.mubr.f32.mxu0 0.0
  %469 = vmatmul.mubr.f32.gmra.mrb[0].mxu0 %v402
  %v470 = vpop.f32.mrb[0].mxu0
  %v471 = vadd.f32 0.0, %v470
  %v472 = vpop.f32.mrb[0].mxu0
  %v473 = vadd.f32 0.0, %v472
  %474 = vdwg.mxu0
  %v475 = vadd.f32 %v398, %v471
  %v476 = vadd.f32 %v400, %v473
  %478 = vrot.lane.b32.xlu0 %v308, 96
  %v479 = vpop.permute.xlu0 %478
  %v480 = vsel %vm135, %v479, 0
  %482 = vmatprep.subr.mxu0 %v38
  %483 = vmatpush1.msra.mxu0 %v37
  %484 = vmatprep.subr.mxu0 %v40
  %485 = vmatpush1.msra.mxu0 %v39
  %486 = vmatprep.subr.mxu0 %v42
  %487 = vmatpush1.msra.mxu0 %v41
  %488 = vmatprep.subr.mxu0 %v44
  %489 = vmatpush1.msra.mxu0 %v43
  %490 = vmatprep.subr.mxu0 0.0
  %491 = vmatpush1.msra.mxu0 0.0
  %492 = vmatprep.subr.mxu0 0.0
  %493 = vmatpush1.msra.mxu0 0.0
  %494 = vmatprep.subr.mxu0 0.0
  %495 = vmatpush1.msra.mxu0 0.0
  %496 = vmatprep.subr.mxu0 0.0
  %497 = vmatpush1.msra.mxu0 0.0
  %498 = vmatprep.subr.mxu0 0.0
  %499 = vmatpush1.msra.mxu0 0.0
  %500 = vmatprep.subr.mxu0 0.0
  %501 = vmatpush1.msra.mxu0 0.0
  %502 = vmatprep.subr.mxu0 0.0
  %503 = vmatpush1.msra.mxu0 0.0
  %504 = vmatprep.subr.mxu0 0.0
  %505 = vmatpush1.msra.mxu0 0.0
  %506 = vmatprep.subr.mxu0 0.0
  %507 = vmatpush1.msra.mxu0 0.0
  %508 = vmatprep.subr.mxu0 0.0
  %509 = vmatpush1.msra.mxu0 0.0
  %510 = vmatprep.subr.mxu0 0.0
  %511 = vmatpush1.msra.mxu0 0.0
  %512 = vmatprep.subr.mxu0 0.0
  %513 = vmatpush1.msra.mxu0 0.0
  %514 = vmatprep.subr.mxu0 0.0
  %515 = vmatpush1.msra.mxu0 0.0
  %516 = vmatprep.subr.mxu0 0.0
  %517 = vmatpush1.msra.mxu0 0.0
  %518 = vmatprep.subr.mxu0 0.0
  %519 = vmatpush1.msra.mxu0 0.0
  %520 = vmatprep.subr.mxu0 0.0
  %521 = vmatpush1.msra.mxu0 0.0
  %522 = vmatprep.subr.mxu0 0.0
  %523 = vmatpush1.msra.mxu0 0.0
  %524 = vmatprep.subr.mxu0 0.0
  %525 = vmatpush1.msra.mxu0 0.0
  %526 = vmatprep.subr.mxu0 0.0
  %527 = vmatpush1.msra.mxu0 0.0
  %528 = vmatprep.subr.mxu0 0.0
  %529 = vmatpush1.msra.mxu0 0.0
  %530 = vmatprep.subr.mxu0 0.0
  %531 = vmatpush1.msra.mxu0 0.0
  %532 = vmatprep.subr.mxu0 0.0
  %533 = vmatpush1.msra.mxu0 0.0
  %534 = vmatprep.subr.mxu0 0.0
  %535 = vmatpush1.msra.mxu0 0.0
  %536 = vmatprep.subr.mxu0 0.0
  %537 = vmatpush1.msra.mxu0 0.0
  %538 = vmatprep.subr.mxu0 0.0
  %539 = vmatpush1.msra.mxu0 0.0
  %540 = vmatprep.subr.mxu0 0.0
  %541 = vmatpush1.msra.mxu0 0.0
  %542 = vmatprep.subr.mxu0 0.0
  %543 = vmatpush1.msra.mxu0 0.0
  %544 = vmatprep.subr.mxu0 0.0
  %545 = vmatpush1.msra.mxu0 0.0
  %546 = vmatprep.mubr.f32.mxu0 0.0
  %547 = vmatmul.mubr.f32.gmra.mrb[0].mxu0 %v480
  %v548 = vpop.f32.mrb[0].mxu0
  %v549 = vadd.f32 0.0, %v548
  %v550 = vpop.f32.mrb[0].mxu0
  %v551 = vadd.f32 0.0, %v550
  %552 = vdwg.mxu0
  %v553 = vadd.f32 %v475, %v549
  %v554 = vadd.f32 %v476, %v551
  %v555 = vxor.u32 %v553, 2147483648
  %v556 = vmul.f32 %v555, 1.442695
  %v557 = vpow.pop %v556
  %v558 = vadd.f32 %v557, 1.0
  %v559 = vrcp.pop %v558
  %v560 = vmul.f32 1.0, %v559
  %v561 = vtanh.pop %v553
  %v562 = vmul.f32 %v560, %v308
  %564 = vrot.lane.b32.xlu0 %v561, 32
  %v565 = vpop.permute.xlu0 %564
  %v567 = vmul.f32 %v560, %v565
  %569 = vrot.lane.b32.xlu0 %v567, 32
  %v570 = vpop.permute.xlu0 %569
  %v572 = vadd.f32 %v562, %v570
  %v573 = vtanh.pop %v572
  %575 = vrot.lane.b32.xlu0 %v554, 32
  %v576 = vpop.permute.xlu0 %575
  %v578 = vadd.f32 %v573, %v576
  %580 = vrot.lane.b32.xlu0 %v578, 32
  %v581 = vpop.permute.xlu0 %580
  %v583 = vmul.f32 %v560, %v581
  %585 = vrot.lane.b32.xlu0 %v583, 64
  %v586 = vpop.permute.xlu0 %585
  %s588 = scalar_lea.vmem %s5, 2
  %589 = vst.msk [vmem:[%s588] sm:$0x3] %vm324, %v586
  %s590 = scalar_lea.vmem %s0, 4
  %v591 = vld [vmem:[%s590] sm:$0x3]
  %v593 = vsel %vm60, %v591, 0
  %595 = vmatprep.subr.mxu0 %v28
  %596 = vmatpush1.msra.mxu0 %v27
  %597 = vmatprep.subr.mxu0 0.0
  %598 = vmatpush1.msra.mxu0 0.0
  %599 = vmatprep.subr.mxu0 0.0
  %600 = vmatpush1.msra.mxu0 0.0
  %601 = vmatprep.subr.mxu0 0.0
  %602 = vmatpush1.msra.mxu0 0.0
  %603 = vmatprep.subr.mxu0 0.0
  %604 = vmatpush1.msra.mxu0 0.0
  %605 = vmatprep.subr.mxu0 0.0
  %606 = vmatpush1.msra.mxu0 0.0
  %607 = vmatprep.subr.mxu0 0.0
  %608 = vmatpush1.msra.mxu0 0.0
  %609 = vmatprep.subr.mxu0 0.0
  %610 = vmatpush1.msra.mxu0 0.0
  %611 = vmatprep.subr.mxu0 0.0
  %612 = vmatpush1.msra.mxu0 0.0
  %613 = vmatprep.subr.mxu0 0.0
  %614 = vmatpush1.msra.mxu0 0.0
  %615 = vmatprep.subr.mxu0 0.0
  %616 = vmatpush1.msra.mxu0 0.0
  %617 = vmatprep.subr.mxu0 0.0
  %618 = vmatpush1.msra.mxu0 0.0
  %619 = vmatprep.subr.mxu0 0.0
  %620 = vmatpush1.msra.mxu0 0.0
  %621 = vmatprep.subr.mxu0 0.0
  %622 = vmatpush1.msra.mxu0 0.0
  %623 = vmatprep.subr.mxu0 0.0
  %624 = vmatpush1.msra.mxu0 0.0
  %625 = vmatprep.subr.mxu0 0.0
  %626 = vmatpush1.msra.mxu0 0.0
  %627 = vmatprep.subr.mxu0 0.0
  %628 = vmatpush1.msra.mxu0 0.0
  %629 = vmatprep.subr.mxu0 0.0
  %630 = vmatpush1.msra.mxu0 0.0
  %631 = vmatprep.subr.mxu0 0.0
  %632 = vmatpush1.msra.mxu0 0.0
  %633 = vmatprep.subr.mxu0 0.0
  %634 = vmatpush1.msra.mxu0 0.0
  %635 = vmatprep.subr.mxu0 0.0
  %636 = vmatpush1.msra.mxu0 0.0
  %637 = vmatprep.subr.mxu0 0.0
  %638 = vmatpush1.msra.mxu0 0.0
  %639 = vmatprep.subr.mxu0 0.0
  %640 = vmatpush1.msra.mxu0 0.0
  %641 = vmatprep.subr.mxu0 0.0
  %642 = vmatpush1.msra.mxu0 0.0
  %643 = vmatprep.subr.mxu0 0.0
  %644 = vmatpush1.msra.mxu0 0.0
  %645 = vmatprep.subr.mxu0 0.0
  %646 = vmatpush1.msra.mxu0 0.0
  %647 = vmatprep.subr.mxu0 0.0
  %648 = vmatpush1.msra.mxu0 0.0
  %649 = vmatprep.subr.mxu0 0.0
  %650 = vmatpush1.msra.mxu0 0.0
  %651 = vmatprep.subr.mxu0 0.0
  %652 = vmatpush1.msra.mxu0 0.0
  %653 = vmatprep.subr.mxu0 0.0
  %654 = vmatpush1.msra.mxu0 0.0
  %655 = vmatprep.subr.mxu0 0.0
  %656 = vmatpush1.msra.mxu0 0.0
  %657 = vmatprep.subr.mxu0 0.0
  %658 = vmatpush1.msra.mxu0 0.0
  %659 = vmatprep.mubr.f32.mxu0 0.0
  %660 = vmatmul.mubr.f32.gmra.mrb[0].mxu0 %v593
  %v661 = vpop.f32.mrb[0].mxu0
  %v662 = vadd.f32 %v53, %v661
  %v663 = vpop.f32.mrb[0].mxu0
  %v664 = vadd.f32 %v57, %v663
  %665 = vdwg.mxu0
  %v666 = vsel %vm135, %v586, 0
  %668 = vmatprep.subr.mxu0 %v30
  %669 = vmatpush1.msra.mxu0 %v29
  %670 = vmatprep.subr.mxu0 %v32
  %671 = vmatpush1.msra.mxu0 %v31
  %672 = vmatprep.subr.mxu0 %v34
  %673 = vmatpush1.msra.mxu0 %v33
  %674 = vmatprep.subr.mxu0 %v36
  %675 = vmatpush1.msra.mxu0 %v35
  %676 = vmatprep.subr.mxu0 0.0
  %677 = vmatpush1.msra.mxu0 0.0
  %678 = vmatprep.subr.mxu0 0.0
  %679 = vmatpush1.msra.mxu0 0.0
  %680 = vmatprep.subr.mxu0 0.0
  %681 = vmatpush1.msra.mxu0 0.0
  %682 = vmatprep.subr.mxu0 0.0
  %683 = vmatpush1.msra.mxu0 0.0
  %684 = vmatprep.subr.mxu0 0.0
  %685 = vmatpush1.msra.mxu0 0.0
  %686 = vmatprep.subr.mxu0 0.0
  %687 = vmatpush1.msra.mxu0 0.0
  %688 = vmatprep.subr.mxu0 0.0
  %689 = vmatpush1.msra.mxu0 0.0
  %690 = vmatprep.subr.mxu0 0.0
  %691 = vmatpush1.msra.mxu0 0.0
  %692 = vmatprep.subr.mxu0 0.0
  %693 = vmatpush1.msra.mxu0 0.0
  %694 = vmatprep.subr.mxu0 0.0
  %695 = vmatpush1.msra.mxu0 0.0
  %696 = vmatprep.subr.mxu0 0.0
  %697 = vmatpush1.msra.mxu0 0.0
  %698 = vmatprep.subr.mxu0 0.0
  %699 = vmatpush1.msra.mxu0 0.0
  %700 = vmatprep.subr.mxu0 0.0
  %701 = vmatpush1.msra.mxu0 0.0
  %702 = vmatprep.subr.mxu0 0.0
  %703 = vmatpush1.msra.mxu0 0.0
  %704 = vmatprep.subr.mxu0 0.0
  %705 = vmatpush1.msra.mxu0 0.0
  %706 = vmatprep.subr.mxu0 0.0
  %707 = vmatpush1.msra.mxu0 0.0
  %708 = vmatprep.subr.mxu0 0.0
  %709 = vmatpush1.msra.mxu0 0.0
  %710 = vmatprep.subr.mxu0 0.0
  %711 = vmatpush1.msra.mxu0 0.0
  %712 = vmatprep.subr.mxu0 0.0
  %713 = vmatpush1.msra.mxu0 0.0
  %714 = vmatprep.subr.mxu0 0.0
  %715 = vmatpush1.msra.mxu0 0.0
  %716 = vmatprep.subr.mxu0 0.0
  %717 = vmatpush1.msra.mxu0 0.0
  %718 = vmatprep.subr.mxu0 0.0
  %719 = vmatpush1.msra.mxu0 0.0
  %720 = vmatprep.subr.mxu0 0.0
  %721 = vmatpush1.msra.mxu0 0.0
  %722 = vmatprep.subr.mxu0 0.0
  %723 = vmatpush1.msra.mxu0 0.0
  %724 = vmatprep.subr.mxu0 0.0
  %725 = vmatpush1.msra.mxu0 0.0
  %726 = vmatprep.subr.mxu0 0.0
  %727 = vmatpush1.msra.mxu0 0.0
  %728 = vmatprep.subr.mxu0 0.0
  %729 = vmatpush1.msra.mxu0 0.0
  %730 = vmatprep.subr.mxu0 0.0
  %731 = vmatpush1.msra.mxu0 0.0
  %732 = vmatprep.mubr.f32.mxu0 0.0
  %733 = vmatmul.mubr.f32.gmra.mrb[0].mxu0 %v666
  %v734 = vpop.f32.mrb[0].mxu0
  %v735 = vadd.f32 0.0, %v734
  %v736 = vpop.f32.mrb[0].mxu0
  %v737 = vadd.f32 0.0, %v736
  %738 = vdwg.mxu0
  %v739 = vadd.f32 %v662, %v735
  %v740 = vadd.f32 %v664, %v737
  %742 = vrot.lane.b32.xlu0 %v572, 96
  %v743 = vpop.permute.xlu0 %742
  %v744 = vsel %vm135, %v743, 0
  %746 = vmatprep.subr.mxu0 %v38
  %747 = vmatpush1.msra.mxu0 %v37
  %748 = vmatprep.subr.mxu0 %v40
  %749 = vmatpush1.msra.mxu0 %v39
  %750 = vmatprep.subr.mxu0 %v42
  %751 = vmatpush1.msra.mxu0 %v41
  %752 = vmatprep.subr.mxu0 %v44
  %753 = vmatpush1.msra.mxu0 %v43
  %754 = vmatprep.subr.mxu0 0.0
  %755 = vmatpush1.msra.mxu0 0.0
  %756 = vmatprep.subr.mxu0 0.0
  %757 = vmatpush1.msra.mxu0 0.0
  %758 = vmatprep.subr.mxu0 0.0
  %759 = vmatpush1.msra.mxu0 0.0
  %760 = vmatprep.subr.mxu0 0.0
  %761 = vmatpush1.msra.mxu0 0.0
  %762 = vmatprep.subr.mxu0 0.0
  %763 = vmatpush1.msra.mxu0 0.0
  %764 = vmatprep.subr.mxu0 0.0
  %765 = vmatpush1.msra.mxu0 0.0
  %766 = vmatprep.subr.mxu0 0.0
  %767 = vmatpush1.msra.mxu0 0.0
  %768 = vmatprep.subr.mxu0 0.0
  %769 = vmatpush1.msra.mxu0 0.0
  %770 = vmatprep.subr.mxu0 0.0
  %771 = vmatpush1.msra.mxu0 0.0
  %772 = vmatprep.subr.mxu0 0.0
  %773 = vmatpush1.msra.mxu0 0.0
  %774 = vmatprep.subr.mxu0 0.0
  %775 = vmatpush1.msra.mxu0 0.0
  %776 = vmatprep.subr.mxu0 0.0
  %777 = vmatpush1.msra.mxu0 0.0
  %778 = vmatprep.subr.mxu0 0.0
  %779 = vmatpush1.msra.mxu0 0.0
  %780 = vmatprep.subr.mxu0 0.0
  %781 = vmatpush1.msra.mxu0 0.0
  %782 = vmatprep.subr.mxu0 0.0
  %783 = vmatpush1.msra.mxu0 0.0
  %784 = vmatprep.subr.mxu0 0.0
  %785 = vmatpush1.msra.mxu0 0.0
  %786 = vmatprep.subr.mxu0 0.0
  %787 = vmatpush1.msra.mxu0 0.0
  %788 = vmatprep.subr.mxu0 0.0
  %789 = vmatpush1.msra.mxu0 0.0
  %790 = vmatprep.subr.mxu0 0.0
  %791 = vmatpush1.msra.mxu0 0.0
  %792 = vmatprep.subr.mxu0 0.0
  %793 = vmatpush1.msra.mxu0 0.0
  %794 = vmatprep.subr.mxu0 0.0
  %795 = vmatpush1.msra.mxu0 0.0
  %796 = vmatprep.subr.mxu0 0.0
  %797 = vmatpush1.msra.mxu0 0.0
  %798 = vmatprep.subr.mxu0 0.0
  %799 = vmatpush1.msra.mxu0 0.0
  %800 = vmatprep.subr.mxu0 0.0
  %801 = vmatpush1.msra.mxu0 0.0
  %802 = vmatprep.subr.mxu0 0.0
  %803 = vmatpush1.msra.mxu0 0.0
  %804 = vmatprep.subr.mxu0 0.0
  %805 = vmatpush1.msra.mxu0 0.0
  %806 = vmatprep.subr.mxu0 0.0
  %807 = vmatpush1.msra.mxu0 0.0
  %808 = vmatprep.subr.mxu0 0.0
  %809 = vmatpush1.msra.mxu0 0.0
  %810 = vmatprep.mubr.f32.mxu0 0.0
  %811 = vmatmul.mubr.f32.gmra.mrb[0].mxu0 %v744
  %v812 = vpop.f32.mrb[0].mxu0
  %v813 = vadd.f32 0.0, %v812
  %v814 = vpop.f32.mrb[0].mxu0
  %v815 = vadd.f32 0.0, %v814
  %816 = vdwg.mxu0
  %v817 = vadd.f32 %v739, %v813
  %v818 = vadd.f32 %v740, %v815
  %v819 = vxor.u32 %v817, 2147483648
  %v820 = vmul.f32 %v819, 1.442695
  %v821 = vpow.pop %v820
  %v822 = vadd.f32 %v821, 1.0
  %v823 = vrcp.pop %v822
  %v824 = vmul.f32 1.0, %v823
  %v825 = vtanh.pop %v817
  %v826 = vmul.f32 %v824, %v572
  %828 = vrot.lane.b32.xlu0 %v825, 32
  %v829 = vpop.permute.xlu0 %828
  %v831 = vmul.f32 %v824, %v829
  %833 = vrot.lane.b32.xlu0 %v831, 32
  %v834 = vpop.permute.xlu0 %833
  %v836 = vadd.f32 %v826, %v834
  %v837 = vtanh.pop %v836
  %839 = vrot.lane.b32.xlu0 %v818, 32
  %v840 = vpop.permute.xlu0 %839
  %v842 = vadd.f32 %v837, %v840
  %844 = vrot.lane.b32.xlu0 %v842, 32
  %v845 = vpop.permute.xlu0 %844
  %v847 = vmul.f32 %v824, %v845
  %849 = vrot.lane.b32.xlu0 %v847, 64
  %v850 = vpop.permute.xlu0 %849
  %s852 = scalar_lea.vmem %s5, 4
  %853 = vst.msk [vmem:[%s852] sm:$0x3] %vm324, %v850
  %s854 = scalar_lea.vmem %s0, 6
  %v855 = vld [vmem:[%s854] sm:$0x3]
  %v857 = vsel %vm60, %v855, 0
  %859 = vmatprep.subr.mxu0 %v28
  %860 = vmatpush1.msra.mxu0 %v27
  %861 = vmatprep.subr.mxu0 0.0
  %862 = vmatpush1.msra.mxu0 0.0
  %863 = vmatprep.subr.mxu0 0.0
  %864 = vmatpush1.msra.mxu0 0.0
  %865 = vmatprep.subr.mxu0 0.0
  %866 = vmatpush1.msra.mxu0 0.0
  %867 = vmatprep.subr.mxu0 0.0
  %868 = vmatpush1.msra.mxu0 0.0
  %869 = vmatprep.subr.mxu0 0.0
  %870 = vmatpush1.msra.mxu0 0.0
  %871 = vmatprep.subr.mxu0 0.0
  %872 = vmatpush1.msra.mxu0 0.0
  %873 = vmatprep.subr.mxu0 0.0
  %874 = vmatpush1.msra.mxu0 0.0
  %875 = vmatprep.subr.mxu0 0.0
  %876 = vmatpush1.msra.mxu0 0.0
  %877 = vmatprep.subr.mxu0 0.0
  %878 = vmatpush1.msra.mxu0 0.0
  %879 = vmatprep.subr.mxu0 0.0
  %880 = vmatpush1.msra.mxu0 0.0
  %881 = vmatprep.subr.mxu0 0.0
  %882 = vmatpush1.msra.mxu0 0.0
  %883 = vmatprep.subr.mxu0 0.0
  %884 = vmatpush1.msra.mxu0 0.0
  %885 = vmatprep.subr.mxu0 0.0
  %886 = vmatpush1.msra.mxu0 0.0
  %887 = vmatprep.subr.mxu0 0.0
  %888 = vmatpush1.msra.mxu0 0.0
  %889 = vmatprep.subr.mxu0 0.0
  %890 = vmatpush1.msra.mxu0 0.0
  %891 = vmatprep.subr.mxu0 0.0
  %892 = vmatpush1.msra.mxu0 0.0
  %893 = vmatprep.subr.mxu0 0.0
  %894 = vmatpush1.msra.mxu0 0.0
  %895 = vmatprep.subr.mxu0 0.0
  %896 = vmatpush1.msra.mxu0 0.0
  %897 = vmatprep.subr.mxu0 0.0
  %898 = vmatpush1.msra.mxu0 0.0
  %899 = vmatprep.subr.mxu0 0.0
  %900 = vmatpush1.msra.mxu0 0.0
  %901 = vmatprep.subr.mxu0 0.0
  %902 = vmatpush1.msra.mxu0 0.0
  %903 = vmatprep.subr.mxu0 0.0
  %904 = vmatpush1.msra.mxu0 0.0
  %905 = vmatprep.subr.mxu0 0.0
  %906 = vmatpush1.msra.mxu0 0.0
  %907 = vmatprep.subr.mxu0 0.0
  %908 = vmatpush1.msra.mxu0 0.0
  %909 = vmatprep.subr.mxu0 0.0
  %910 = vmatpush1.msra.mxu0 0.0
  %911 = vmatprep.subr.mxu0 0.0
  %912 = vmatpush1.msra.mxu0 0.0
  %913 = vmatprep.subr.mxu0 0.0
  %914 = vmatpush1.msra.mxu0 0.0
  %915 = vmatprep.subr.mxu0 0.0
  %916 = vmatpush1.msra.mxu0 0.0
  %917 = vmatprep.subr.mxu0 0.0
  %918 = vmatpush1.msra.mxu0 0.0
  %919 = vmatprep.subr.mxu0 0.0
  %920 = vmatpush1.msra.mxu0 0.0
  %921 = vmatprep.subr.mxu0 0.0
  %922 = vmatpush1.msra.mxu0 0.0
  %923 = vmatprep.mubr.f32.mxu0 0.0
  %924 = vmatmul.mubr.f32.gmra.mrb[0].mxu0 %v857
  %v925 = vpop.f32.mrb[0].mxu0
  %v926 = vadd.f32 %v53, %v925
  %v927 = vpop.f32.mrb[0].mxu0
  %v928 = vadd.f32 %v57, %v927
  %929 = vdwg.mxu0
  %v930 = vsel %vm135, %v850, 0
  %932 = vmatprep.subr.mxu0 %v30
  %933 = vmatpush1.msra.mxu0 %v29
  %934 = vmatprep.subr.mxu0 %v32
  %935 = vmatpush1.msra.mxu0 %v31
  %936 = vmatprep.subr.mxu0 %v34
  %937 = vmatpush1.msra.mxu0 %v33
  %938 = vmatprep.subr.mxu0 %v36
  %939 = vmatpush1.msra.mxu0 %v35
  %940 = vmatprep.subr.mxu0 0.0
  %941 = vmatpush1.msra.mxu0 0.0
  %942 = vmatprep.subr.mxu0 0.0
  %943 = vmatpush1.msra.mxu0 0.0
  %944 = vmatprep.subr.mxu0 0.0
  %945 = vmatpush1.msra.mxu0 0.0
  %946 = vmatprep.subr.mxu0 0.0
  %947 = vmatpush1.msra.mxu0 0.0
  %948 = vmatprep.subr.mxu0 0.0
  %949 = vmatpush1.msra.mxu0 0.0
  %950 = vmatprep.subr.mxu0 0.0
  %951 = vmatpush1.msra.mxu0 0.0
  %952 = vmatprep.subr.mxu0 0.0
  %953 = vmatpush1.msra.mxu0 0.0
  %954 = vmatprep.subr.mxu0 0.0
  %955 = vmatpush1.msra.mxu0 0.0
  %956 = vmatprep.subr.mxu0 0.0
  %957 = vmatpush1.msra.mxu0 0.0
  %958 = vmatprep.subr.mxu0 0.0
  %959 = vmatpush1.msra.mxu0 0.0
  %960 = vmatprep.subr.mxu0 0.0
  %961 = vmatpush1.msra.mxu0 0.0
  %962 = vmatprep.subr.mxu0 0.0
  %963 = vmatpush1.msra.mxu0 0.0
  %964 = vmatprep.subr.mxu0 0.0
  %965 = vmatpush1.msra.mxu0 0.0
  %966 = vmatprep.subr.mxu0 0.0
  %967 = vmatpush1.msra.mxu0 0.0
  %968 = vmatprep.subr.mxu0 0.0
  %969 = vmatpush1.msra.mxu0 0.0
  %970 = vmatprep.subr.mxu0 0.0
  %971 = vmatpush1.msra.mxu0 0.0
  %972 = vmatprep.subr.mxu0 0.0
  %973 = vmatpush1.msra.mxu0 0.0
  %974 = vmatprep.subr.mxu0 0.0
  %975 = vmatpush1.msra.mxu0 0.0
  %976 = vmatprep.subr.mxu0 0.0
  %977 = vmatpush1.msra.mxu0 0.0
  %978 = vmatprep.subr.mxu0 0.0
  %979 = vmatpush1.msra.mxu0 0.0
  %980 = vmatprep.subr.mxu0 0.0
  %981 = vmatpush1.msra.mxu0 0.0
  %982 = vmatprep.subr.mxu0 0.0
  %983 = vmatpush1.msra.mxu0 0.0
  %984 = vmatprep.subr.mxu0 0.0
  %985 = vmatpush1.msra.mxu0 0.0
  %986 = vmatprep.subr.mxu0 0.0
  %987 = vmatpush1.msra.mxu0 0.0
  %988 = vmatprep.subr.mxu0 0.0
  %989 = vmatpush1.msra.mxu0 0.0
  %990 = vmatprep.subr.mxu0 0.0
  %991 = vmatpush1.msra.mxu0 0.0
  %992 = vmatprep.subr.mxu0 0.0
  %993 = vmatpush1.msra.mxu0 0.0
  %994 = vmatprep.subr.mxu0 0.0
  %995 = vmatpush1.msra.mxu0 0.0
  %996 = vmatprep.mubr.f32.mxu0 0.0
  %997 = vmatmul.mubr.f32.gmra.mrb[0].mxu0 %v930
  %v998 = vpop.f32.mrb[0].mxu0
  %v999 = vadd.f32 0.0, %v998
  %v1000 = vpop.f32.mrb[0].mxu0
  %v1001 = vadd.f32 0.0, %v1000
  %1002 = vdwg.mxu0
  %v1003 = vadd.f32 %v926, %v999
  %v1004 = vadd.f32 %v928, %v1001
  %1006 = vrot.lane.b32.xlu0 %v836, 96
  %v1007 = vpop.permute.xlu0 %1006
  %v1008 = vsel %vm135, %v1007, 0
  %1010 = vmatprep.subr.mxu0 %v38
  %1011 = vmatpush1.msra.mxu0 %v37
  %1012 = vmatprep.subr.mxu0 %v40
  %1013 = vmatpush1.msra.mxu0 %v39
  %1014 = vmatprep.subr.mxu0 %v42
  %1015 = vmatpush1.msra.mxu0 %v41
  %1016 = vmatprep.subr.mxu0 %v44
  %1017 = vmatpush1.msra.mxu0 %v43
  %1018 = vmatprep.subr.mxu0 0.0
  %1019 = vmatpush1.msra.mxu0 0.0
  %1020 = vmatprep.subr.mxu0 0.0
  %1021 = vmatpush1.msra.mxu0 0.0
  %1022 = vmatprep.subr.mxu0 0.0
  %1023 = vmatpush1.msra.mxu0 0.0
  %1024 = vmatprep.subr.mxu0 0.0
  %1025 = vmatpush1.msra.mxu0 0.0
  %1026 = vmatprep.subr.mxu0 0.0
  %1027 = vmatpush1.msra.mxu0 0.0
  %1028 = vmatprep.subr.mxu0 0.0
  %1029 = vmatpush1.msra.mxu0 0.0
  %1030 = vmatprep.subr.mxu0 0.0
  %1031 = vmatpush1.msra.mxu0 0.0
  %1032 = vmatprep.subr.mxu0 0.0
  %1033 = vmatpush1.msra.mxu0 0.0
  %1034 = vmatprep.subr.mxu0 0.0
  %1035 = vmatpush1.msra.mxu0 0.0
  %1036 = vmatprep.subr.mxu0 0.0
  %1037 = vmatpush1.msra.mxu0 0.0
  %1038 = vmatprep.subr.mxu0 0.0
  %1039 = vmatpush1.msra.mxu0 0.0
  %1040 = vmatprep.subr.mxu0 0.0
  %1041 = vmatpush1.msra.mxu0 0.0
  %1042 = vmatprep.subr.mxu0 0.0
  %1043 = vmatpush1.msra.mxu0 0.0
  %1044 = vmatprep.subr.mxu0 0.0
  %1045 = vmatpush1.msra.mxu0 0.0
  %1046 = vmatprep.subr.mxu0 0.0
  %1047 = vmatpush1.msra.mxu0 0.0
  %1048 = vmatprep.subr.mxu0 0.0
  %1049 = vmatpush1.msra.mxu0 0.0
  %1050 = vmatprep.subr.mxu0 0.0
  %1051 = vmatpush1.msra.mxu0 0.0
  %1052 = vmatprep.subr.mxu0 0.0
  %1053 = vmatpush1.msra.mxu0 0.0
  %1054 = vmatprep.subr.mxu0 0.0
  %1055 = vmatpush1.msra.mxu0 0.0
  %1056 = vmatprep.subr.mxu0 0.0
  %1057 = vmatpush1.msra.mxu0 0.0
  %1058 = vmatprep.subr.mxu0 0.0
  %1059 = vmatpush1.msra.mxu0 0.0
  %1060 = vmatprep.subr.mxu0 0.0
  %1061 = vmatpush1.msra.mxu0 0.0
  %1062 = vmatprep.subr.mxu0 0.0
  %1063 = vmatpush1.msra.mxu0 0.0
  %1064 = vmatprep.subr.mxu0 0.0
  %1065 = vmatpush1.msra.mxu0 0.0
  %1066 = vmatprep.subr.mxu0 0.0
  %1067 = vmatpush1.msra.mxu0 0.0
  %1068 = vmatprep.subr.mxu0 0.0
  %1069 = vmatpush1.msra.mxu0 0.0
  %1070 = vmatprep.subr.mxu0 0.0
  %1071 = vmatpush1.msra.mxu0 0.0
  %1072 = vmatprep.subr.mxu0 0.0
  %1073 = vmatpush1.msra.mxu0 0.0
  %1074 = vmatprep.mubr.f32.mxu0 0.0
  %1075 = vmatmul.mubr.f32.gmra.mrb[0].mxu0 %v1008
  %v1076 = vpop.f32.mrb[0].mxu0
  %v1077 = vadd.f32 0.0, %v1076
  %v1078 = vpop.f32.mrb[0].mxu0
  %v1079 = vadd.f32 0.0, %v1078
  %1080 = vdwg.mxu0
  %v1081 = vadd.f32 %v1003, %v1077
  %v1082 = vadd.f32 %v1004, %v1079
  %v1083 = vxor.u32 %v1081, 2147483648
  %v1084 = vmul.f32 %v1083, 1.442695
  %v1085 = vpow.pop %v1084
  %v1086 = vadd.f32 %v1085, 1.0
  %v1087 = vrcp.pop %v1086
  %v1088 = vmul.f32 1.0, %v1087
  %v1089 = vtanh.pop %v1081
  %v1090 = vmul.f32 %v1088, %v836
  %1092 = vrot.lane.b32.xlu0 %v1089, 32
  %v1093 = vpop.permute.xlu0 %1092
  %v1095 = vmul.f32 %v1088, %v1093
  %1097 = vrot.lane.b32.xlu0 %v1095, 32
  %v1098 = vpop.permute.xlu0 %1097
  %v1100 = vadd.f32 %v1090, %v1098
  %v1101 = vtanh.pop %v1100
  %1103 = vrot.lane.b32.xlu0 %v1082, 32
  %v1104 = vpop.permute.xlu0 %1103
  %v1106 = vadd.f32 %v1101, %v1104
  %1108 = vrot.lane.b32.xlu0 %v1106, 32
  %v1109 = vpop.permute.xlu0 %1108
  %v1111 = vmul.f32 %v1088, %v1109
  %1113 = vrot.lane.b32.xlu0 %v1111, 64
  %v1114 = vpop.permute.xlu0 %1113
  %s1116 = scalar_lea.vmem %s5, 6
  %1117 = vst.msk [vmem:[%s1116] sm:$0x3] %vm324, %v1114
  %s1118 = scalar_lea.vmem %s0, 8
  %v1119 = vld [vmem:[%s1118] sm:$0x3]
  %v1121 = vsel %vm60, %v1119, 0
  %1123 = vmatprep.subr.mxu0 %v28
  %1124 = vmatpush1.msra.mxu0 %v27
  %1125 = vmatprep.subr.mxu0 0.0
  %1126 = vmatpush1.msra.mxu0 0.0
  %1127 = vmatprep.subr.mxu0 0.0
  %1128 = vmatpush1.msra.mxu0 0.0
  %1129 = vmatprep.subr.mxu0 0.0
  %1130 = vmatpush1.msra.mxu0 0.0
  %1131 = vmatprep.subr.mxu0 0.0
  %1132 = vmatpush1.msra.mxu0 0.0
  %1133 = vmatprep.subr.mxu0 0.0
  %1134 = vmatpush1.msra.mxu0 0.0
  %1135 = vmatprep.subr.mxu0 0.0
  %1136 = vmatpush1.msra.mxu0 0.0
  %1137 = vmatprep.subr.mxu0 0.0
  %1138 = vmatpush1.msra.mxu0 0.0
  %1139 = vmatprep.subr.mxu0 0.0
  %1140 = vmatpush1.msra.mxu0 0.0
  %1141 = vmatprep.subr.mxu0 0.0
  %1142 = vmatpush1.msra.mxu0 0.0
  %1143 = vmatprep.subr.mxu0 0.0
  %1144 = vmatpush1.msra.mxu0 0.0
  %1145 = vmatprep.subr.mxu0 0.0
  %1146 = vmatpush1.msra.mxu0 0.0
  %1147 = vmatprep.subr.mxu0 0.0
  %1148 = vmatpush1.msra.mxu0 0.0
  %1149 = vmatprep.subr.mxu0 0.0
  %1150 = vmatpush1.msra.mxu0 0.0
  %1151 = vmatprep.subr.mxu0 0.0
  %1152 = vmatpush1.msra.mxu0 0.0
  %1153 = vmatprep.subr.mxu0 0.0
  %1154 = vmatpush1.msra.mxu0 0.0
  %1155 = vmatprep.subr.mxu0 0.0
  %1156 = vmatpush1.msra.mxu0 0.0
  %1157 = vmatprep.subr.mxu0 0.0
  %1158 = vmatpush1.msra.mxu0 0.0
  %1159 = vmatprep.subr.mxu0 0.0
  %1160 = vmatpush1.msra.mxu0 0.0
  %1161 = vmatprep.subr.mxu0 0.0
  %1162 = vmatpush1.msra.mxu0 0.0
  %1163 = vmatprep.subr.mxu0 0.0
  %1164 = vmatpush1.msra.mxu0 0.0
  %1165 = vmatprep.subr.mxu0 0.0
  %1166 = vmatpush1.msra.mxu0 0.0
  %1167 = vmatprep.subr.mxu0 0.0
  %1168 = vmatpush1.msra.mxu0 0.0
  %1169 = vmatprep.subr.mxu0 0.0
  %1170 = vmatpush1.msra.mxu0 0.0
  %1171 = vmatprep.subr.mxu0 0.0
  %1172 = vmatpush1.msra.mxu0 0.0
  %1173 = vmatprep.subr.mxu0 0.0
  %1174 = vmatpush1.msra.mxu0 0.0
  %1175 = vmatprep.subr.mxu0 0.0
  %1176 = vmatpush1.msra.mxu0 0.0
  %1177 = vmatprep.subr.mxu0 0.0
  %1178 = vmatpush1.msra.mxu0 0.0
  %1179 = vmatprep.subr.mxu0 0.0
  %1180 = vmatpush1.msra.mxu0 0.0
  %1181 = vmatprep.subr.mxu0 0.0
  %1182 = vmatpush1.msra.mxu0 0.0
  %1183 = vmatprep.subr.mxu0 0.0
  %1184 = vmatpush1.msra.mxu0 0.0
  %1185 = vmatprep.subr.mxu0 0.0
  %1186 = vmatpush1.msra.mxu0 0.0
  %1187 = vmatprep.mubr.f32.mxu0 0.0
  %1188 = vmatmul.mubr.f32.gmra.mrb[0].mxu0 %v1121
  %v1189 = vpop.f32.mrb[0].mxu0
  %v1190 = vadd.f32 %v53, %v1189
  %v1191 = vpop.f32.mrb[0].mxu0
  %v1192 = vadd.f32 %v57, %v1191
  %1193 = vdwg.mxu0
  %v1194 = vsel %vm135, %v1114, 0
  %1196 = vmatprep.subr.mxu0 %v30
  %1197 = vmatpush1.msra.mxu0 %v29
  %1198 = vmatprep.subr.mxu0 %v32
  %1199 = vmatpush1.msra.mxu0 %v31
  %1200 = vmatprep.subr.mxu0 %v34
  %1201 = vmatpush1.msra.mxu0 %v33
  %1202 = vmatprep.subr.mxu0 %v36
  %1203 = vmatpush1.msra.mxu0 %v35
  %1204 = vmatprep.subr.mxu0 0.0
  %1205 = vmatpush1.msra.mxu0 0.0
  %1206 = vmatprep.subr.mxu0 0.0
  %1207 = vmatpush1.msra.mxu0 0.0
  %1208 = vmatprep.subr.mxu0 0.0
  %1209 = vmatpush1.msra.mxu0 0.0
  %1210 = vmatprep.subr.mxu0 0.0
  %1211 = vmatpush1.msra.mxu0 0.0
  %1212 = vmatprep.subr.mxu0 0.0
  %1213 = vmatpush1.msra.mxu0 0.0
  %1214 = vmatprep.subr.mxu0 0.0
  %1215 = vmatpush1.msra.mxu0 0.0
  %1216 = vmatprep.subr.mxu0 0.0
  %1217 = vmatpush1.msra.mxu0 0.0
  %1218 = vmatprep.subr.mxu0 0.0
  %1219 = vmatpush1.msra.mxu0 0.0
  %1220 = vmatprep.subr.mxu0 0.0
  %1221 = vmatpush1.msra.mxu0 0.0
  %1222 = vmatprep.subr.mxu0 0.0
  %1223 = vmatpush1.msra.mxu0 0.0
  %1224 = vmatprep.subr.mxu0 0.0
  %1225 = vmatpush1.msra.mxu0 0.0
  %1226 = vmatprep.subr.mxu0 0.0
  %1227 = vmatpush1.msra.mxu0 0.0
  %1228 = vmatprep.subr.mxu0 0.0
  %1229 = vmatpush1.msra.mxu0 0.0
  %1230 = vmatprep.subr.mxu0 0.0
  %1231 = vmatpush1.msra.mxu0 0.0
  %1232 = vmatprep.subr.mxu0 0.0
  %1233 = vmatpush1.msra.mxu0 0.0
  %1234 = vmatprep.subr.mxu0 0.0
  %1235 = vmatpush1.msra.mxu0 0.0
  %1236 = vmatprep.subr.mxu0 0.0
  %1237 = vmatpush1.msra.mxu0 0.0
  %1238 = vmatprep.subr.mxu0 0.0
  %1239 = vmatpush1.msra.mxu0 0.0
  %1240 = vmatprep.subr.mxu0 0.0
  %1241 = vmatpush1.msra.mxu0 0.0
  %1242 = vmatprep.subr.mxu0 0.0
  %1243 = vmatpush1.msra.mxu0 0.0
  %1244 = vmatprep.subr.mxu0 0.0
  %1245 = vmatpush1.msra.mxu0 0.0
  %1246 = vmatprep.subr.mxu0 0.0
  %1247 = vmatpush1.msra.mxu0 0.0
  %1248 = vmatprep.subr.mxu0 0.0
  %1249 = vmatpush1.msra.mxu0 0.0
  %1250 = vmatprep.subr.mxu0 0.0
  %1251 = vmatpush1.msra.mxu0 0.0
  %1252 = vmatprep.subr.mxu0 0.0
  %1253 = vmatpush1.msra.mxu0 0.0
  %1254 = vmatprep.subr.mxu0 0.0
  %1255 = vmatpush1.msra.mxu0 0.0
  %1256 = vmatprep.subr.mxu0 0.0
  %1257 = vmatpush1.msra.mxu0 0.0
  %1258 = vmatprep.subr.mxu0 0.0
  %1259 = vmatpush1.msra.mxu0 0.0
  %1260 = vmatprep.mubr.f32.mxu0 0.0
  %1261 = vmatmul.mubr.f32.gmra.mrb[0].mxu0 %v1194
  %v1262 = vpop.f32.mrb[0].mxu0
  %v1263 = vadd.f32 0.0, %v1262
  %v1264 = vpop.f32.mrb[0].mxu0
  %v1265 = vadd.f32 0.0, %v1264
  %1266 = vdwg.mxu0
  %v1267 = vadd.f32 %v1190, %v1263
  %v1268 = vadd.f32 %v1192, %v1265
  %1270 = vrot.lane.b32.xlu0 %v1100, 96
  %v1271 = vpop.permute.xlu0 %1270
  %v1272 = vsel %vm135, %v1271, 0
  %1274 = vmatprep.subr.mxu0 %v38
  %1275 = vmatpush1.msra.mxu0 %v37
  %1276 = vmatprep.subr.mxu0 %v40
  %1277 = vmatpush1.msra.mxu0 %v39
  %1278 = vmatprep.subr.mxu0 %v42
  %1279 = vmatpush1.msra.mxu0 %v41
  %1280 = vmatprep.subr.mxu0 %v44
  %1281 = vmatpush1.msra.mxu0 %v43
  %1282 = vmatprep.subr.mxu0 0.0
  %1283 = vmatpush1.msra.mxu0 0.0
  %1284 = vmatprep.subr.mxu0 0.0
  %1285 = vmatpush1.msra.mxu0 0.0
  %1286 = vmatprep.subr.mxu0 0.0
  %1287 = vmatpush1.msra.mxu0 0.0
  %1288 = vmatprep.subr.mxu0 0.0
  %1289 = vmatpush1.msra.mxu0 0.0
  %1290 = vmatprep.subr.mxu0 0.0
  %1291 = vmatpush1.msra.mxu0 0.0
  %1292 = vmatprep.subr.mxu0 0.0
  %1293 = vmatpush1.msra.mxu0 0.0
  %1294 = vmatprep.subr.mxu0 0.0
  %1295 = vmatpush1.msra.mxu0 0.0
  %1296 = vmatprep.subr.mxu0 0.0
  %1297 = vmatpush1.msra.mxu0 0.0
  %1298 = vmatprep.subr.mxu0 0.0
  %1299 = vmatpush1.msra.mxu0 0.0
  %1300 = vmatprep.subr.mxu0 0.0
  %1301 = vmatpush1.msra.mxu0 0.0
  %1302 = vmatprep.subr.mxu0 0.0
  %1303 = vmatpush1.msra.mxu0 0.0
  %1304 = vmatprep.subr.mxu0 0.0
  %1305 = vmatpush1.msra.mxu0 0.0
  %1306 = vmatprep.subr.mxu0 0.0
  %1307 = vmatpush1.msra.mxu0 0.0
  %1308 = vmatprep.subr.mxu0 0.0
  %1309 = vmatpush1.msra.mxu0 0.0
  %1310 = vmatprep.subr.mxu0 0.0
  %1311 = vmatpush1.msra.mxu0 0.0
  %1312 = vmatprep.subr.mxu0 0.0
  %1313 = vmatpush1.msra.mxu0 0.0
  %1314 = vmatprep.subr.mxu0 0.0
  %1315 = vmatpush1.msra.mxu0 0.0
  %1316 = vmatprep.subr.mxu0 0.0
  %1317 = vmatpush1.msra.mxu0 0.0
  %1318 = vmatprep.subr.mxu0 0.0
  %1319 = vmatpush1.msra.mxu0 0.0
  %1320 = vmatprep.subr.mxu0 0.0
  %1321 = vmatpush1.msra.mxu0 0.0
  %1322 = vmatprep.subr.mxu0 0.0
  %1323 = vmatpush1.msra.mxu0 0.0
  %1324 = vmatprep.subr.mxu0 0.0
  %1325 = vmatpush1.msra.mxu0 0.0
  %1326 = vmatprep.subr.mxu0 0.0
  %1327 = vmatpush1.msra.mxu0 0.0
  %1328 = vmatprep.subr.mxu0 0.0
  %1329 = vmatpush1.msra.mxu0 0.0
  %1330 = vmatprep.subr.mxu0 0.0
  %1331 = vmatpush1.msra.mxu0 0.0
  %1332 = vmatprep.subr.mxu0 0.0
  %1333 = vmatpush1.msra.mxu0 0.0
  %1334 = vmatprep.subr.mxu0 0.0
  %1335 = vmatpush1.msra.mxu0 0.0
  %1336 = vmatprep.subr.mxu0 0.0
  %1337 = vmatpush1.msra.mxu0 0.0
  %1338 = vmatprep.mubr.f32.mxu0 0.0
  %1339 = vmatmul.mubr.f32.gmra.mrb[0].mxu0 %v1272
  %v1340 = vpop.f32.mrb[0].mxu0
  %v1341 = vadd.f32 0.0, %v1340
  %v1342 = vpop.f32.mrb[0].mxu0
  %v1343 = vadd.f32 0.0, %v1342
  %1344 = vdwg.mxu0
  %v1345 = vadd.f32 %v1267, %v1341
  %v1346 = vadd.f32 %v1268, %v1343
  %v1347 = vxor.u32 %v1345, 2147483648
  %v1348 = vmul.f32 %v1347, 1.442695
  %v1349 = vpow.pop %v1348
  %v1350 = vadd.f32 %v1349, 1.0
  %v1351 = vrcp.pop %v1350
  %v1352 = vmul.f32 1.0, %v1351
  %v1353 = vtanh.pop %v1345
  %v1354 = vmul.f32 %v1352, %v1100
  %1356 = vrot.lane.b32.xlu0 %v1353, 32
  %v1357 = vpop.permute.xlu0 %1356
  %v1359 = vmul.f32 %v1352, %v1357
  %1361 = vrot.lane.b32.xlu0 %v1359, 32
  %v1362 = vpop.permute.xlu0 %1361
  %v1364 = vadd.f32 %v1354, %v1362
  %v1365 = vtanh.pop %v1364
  %1367 = vrot.lane.b32.xlu0 %v1346, 32
  %v1368 = vpop.permute.xlu0 %1367
  %v1370 = vadd.f32 %v1365, %v1368
  %1372 = vrot.lane.b32.xlu0 %v1370, 32
  %v1373 = vpop.permute.xlu0 %1372
  %v1375 = vmul.f32 %v1352, %v1373
  %1377 = vrot.lane.b32.xlu0 %v1375, 64
  %v1378 = vpop.permute.xlu0 %1377
  %s1380 = scalar_lea.vmem %s5, 8
  %1381 = vst.msk [vmem:[%s1380] sm:$0x3] %vm324, %v1378
  %s1382 = scalar_lea.vmem %s0, 10
  %v1383 = vld [vmem:[%s1382] sm:$0x3]
  %v1385 = vsel %vm60, %v1383, 0
  %1387 = vmatprep.subr.mxu0 %v28
  %1388 = vmatpush1.msra.mxu0 %v27
  %1389 = vmatprep.subr.mxu0 0.0
  %1390 = vmatpush1.msra.mxu0 0.0
  %1391 = vmatprep.subr.mxu0 0.0
  %1392 = vmatpush1.msra.mxu0 0.0
  %1393 = vmatprep.subr.mxu0 0.0
  %1394 = vmatpush1.msra.mxu0 0.0
  %1395 = vmatprep.subr.mxu0 0.0
  %1396 = vmatpush1.msra.mxu0 0.0
  %1397 = vmatprep.subr.mxu0 0.0
  %1398 = vmatpush1.msra.mxu0 0.0
  %1399 = vmatprep.subr.mxu0 0.0
  %1400 = vmatpush1.msra.mxu0 0.0
  %1401 = vmatprep.subr.mxu0 0.0
  %1402 = vmatpush1.msra.mxu0 0.0
  %1403 = vmatprep.subr.mxu0 0.0
  %1404 = vmatpush1.msra.mxu0 0.0
  %1405 = vmatprep.subr.mxu0 0.0
  %1406 = vmatpush1.msra.mxu0 0.0
  %1407 = vmatprep.subr.mxu0 0.0
  %1408 = vmatpush1.msra.mxu0 0.0
  %1409 = vmatprep.subr.mxu0 0.0
  %1410 = vmatpush1.msra.mxu0 0.0
  %1411 = vmatprep.subr.mxu0 0.0
  %1412 = vmatpush1.msra.mxu0 0.0
  %1413 = vmatprep.subr.mxu0 0.0
  %1414 = vmatpush1.msra.mxu0 0.0
  %1415 = vmatprep.subr.mxu0 0.0
  %1416 = vmatpush1.msra.mxu0 0.0
  %1417 = vmatprep.subr.mxu0 0.0
  %1418 = vmatpush1.msra.mxu0 0.0
  %1419 = vmatprep.subr.mxu0 0.0
  %1420 = vmatpush1.msra.mxu0 0.0
  %1421 = vmatprep.subr.mxu0 0.0
  %1422 = vmatpush1.msra.mxu0 0.0
  %1423 = vmatprep.subr.mxu0 0.0
  %1424 = vmatpush1.msra.mxu0 0.0
  %1425 = vmatprep.subr.mxu0 0.0
  %1426 = vmatpush1.msra.mxu0 0.0
  %1427 = vmatprep.subr.mxu0 0.0
  %1428 = vmatpush1.msra.mxu0 0.0
  %1429 = vmatprep.subr.mxu0 0.0
  %1430 = vmatpush1.msra.mxu0 0.0
  %1431 = vmatprep.subr.mxu0 0.0
  %1432 = vmatpush1.msra.mxu0 0.0
  %1433 = vmatprep.subr.mxu0 0.0
  %1434 = vmatpush1.msra.mxu0 0.0
  %1435 = vmatprep.subr.mxu0 0.0
  %1436 = vmatpush1.msra.mxu0 0.0
  %1437 = vmatprep.subr.mxu0 0.0
  %1438 = vmatpush1.msra.mxu0 0.0
  %1439 = vmatprep.subr.mxu0 0.0
  %1440 = vmatpush1.msra.mxu0 0.0
  %1441 = vmatprep.subr.mxu0 0.0
  %1442 = vmatpush1.msra.mxu0 0.0
  %1443 = vmatprep.subr.mxu0 0.0
  %1444 = vmatpush1.msra.mxu0 0.0
  %1445 = vmatprep.subr.mxu0 0.0
  %1446 = vmatpush1.msra.mxu0 0.0
  %1447 = vmatprep.subr.mxu0 0.0
  %1448 = vmatpush1.msra.mxu0 0.0
  %1449 = vmatprep.subr.mxu0 0.0
  %1450 = vmatpush1.msra.mxu0 0.0
  %1451 = vmatprep.mubr.f32.mxu0 0.0
  %1452 = vmatmul.mubr.f32.gmra.mrb[0].mxu0 %v1385
  %v1453 = vpop.f32.mrb[0].mxu0
  %v1454 = vadd.f32 %v53, %v1453
  %v1455 = vpop.f32.mrb[0].mxu0
  %v1456 = vadd.f32 %v57, %v1455
  %1457 = vdwg.mxu0
  %v1458 = vsel %vm135, %v1378, 0
  %1460 = vmatprep.subr.mxu0 %v30
  %1461 = vmatpush1.msra.mxu0 %v29
  %1462 = vmatprep.subr.mxu0 %v32
  %1463 = vmatpush1.msra.mxu0 %v31
  %1464 = vmatprep.subr.mxu0 %v34
  %1465 = vmatpush1.msra.mxu0 %v33
  %1466 = vmatprep.subr.mxu0 %v36
  %1467 = vmatpush1.msra.mxu0 %v35
  %1468 = vmatprep.subr.mxu0 0.0
  %1469 = vmatpush1.msra.mxu0 0.0
  %1470 = vmatprep.subr.mxu0 0.0
  %1471 = vmatpush1.msra.mxu0 0.0
  %1472 = vmatprep.subr.mxu0 0.0
  %1473 = vmatpush1.msra.mxu0 0.0
  %1474 = vmatprep.subr.mxu0 0.0
  %1475 = vmatpush1.msra.mxu0 0.0
  %1476 = vmatprep.subr.mxu0 0.0
  %1477 = vmatpush1.msra.mxu0 0.0
  %1478 = vmatprep.subr.mxu0 0.0
  %1479 = vmatpush1.msra.mxu0 0.0
  %1480 = vmatprep.subr.mxu0 0.0
  %1481 = vmatpush1.msra.mxu0 0.0
  %1482 = vmatprep.subr.mxu0 0.0
  %1483 = vmatpush1.msra.mxu0 0.0
  %1484 = vmatprep.subr.mxu0 0.0
  %1485 = vmatpush1.msra.mxu0 0.0
  %1486 = vmatprep.subr.mxu0 0.0
  %1487 = vmatpush1.msra.mxu0 0.0
  %1488 = vmatprep.subr.mxu0 0.0
  %1489 = vmatpush1.msra.mxu0 0.0
  %1490 = vmatprep.subr.mxu0 0.0
  %1491 = vmatpush1.msra.mxu0 0.0
  %1492 = vmatprep.subr.mxu0 0.0
  %1493 = vmatpush1.msra.mxu0 0.0
  %1494 = vmatprep.subr.mxu0 0.0
  %1495 = vmatpush1.msra.mxu0 0.0
  %1496 = vmatprep.subr.mxu0 0.0
  %1497 = vmatpush1.msra.mxu0 0.0
  %1498 = vmatprep.subr.mxu0 0.0
  %1499 = vmatpush1.msra.mxu0 0.0
  %1500 = vmatprep.subr.mxu0 0.0
  %1501 = vmatpush1.msra.mxu0 0.0
  %1502 = vmatprep.subr.mxu0 0.0
  %1503 = vmatpush1.msra.mxu0 0.0
  %1504 = vmatprep.subr.mxu0 0.0
  %1505 = vmatpush1.msra.mxu0 0.0
  %1506 = vmatprep.subr.mxu0 0.0
  %1507 = vmatpush1.msra.mxu0 0.0
  %1508 = vmatprep.subr.mxu0 0.0
  %1509 = vmatpush1.msra.mxu0 0.0
  %1510 = vmatprep.subr.mxu0 0.0
  %1511 = vmatpush1.msra.mxu0 0.0
  %1512 = vmatprep.subr.mxu0 0.0
  %1513 = vmatpush1.msra.mxu0 0.0
  %1514 = vmatprep.subr.mxu0 0.0
  %1515 = vmatpush1.msra.mxu0 0.0
  %1516 = vmatprep.subr.mxu0 0.0
  %1517 = vmatpush1.msra.mxu0 0.0
  %1518 = vmatprep.subr.mxu0 0.0
  %1519 = vmatpush1.msra.mxu0 0.0
  %1520 = vmatprep.subr.mxu0 0.0
  %1521 = vmatpush1.msra.mxu0 0.0
  %1522 = vmatprep.subr.mxu0 0.0
  %1523 = vmatpush1.msra.mxu0 0.0
  %1524 = vmatprep.mubr.f32.mxu0 0.0
  %1525 = vmatmul.mubr.f32.gmra.mrb[0].mxu0 %v1458
  %v1526 = vpop.f32.mrb[0].mxu0
  %v1527 = vadd.f32 0.0, %v1526
  %v1528 = vpop.f32.mrb[0].mxu0
  %v1529 = vadd.f32 0.0, %v1528
  %1530 = vdwg.mxu0
  %v1531 = vadd.f32 %v1454, %v1527
  %v1532 = vadd.f32 %v1456, %v1529
  %1534 = vrot.lane.b32.xlu0 %v1364, 96
  %v1535 = vpop.permute.xlu0 %1534
  %v1536 = vsel %vm135, %v1535, 0
  %1538 = vmatprep.subr.mxu0 %v38
  %1539 = vmatpush1.msra.mxu0 %v37
  %1540 = vmatprep.subr.mxu0 %v40
  %1541 = vmatpush1.msra.mxu0 %v39
  %1542 = vmatprep.subr.mxu0 %v42
  %1543 = vmatpush1.msra.mxu0 %v41
  %1544 = vmatprep.subr.mxu0 %v44
  %1545 = vmatpush1.msra.mxu0 %v43
  %1546 = vmatprep.subr.mxu0 0.0
  %1547 = vmatpush1.msra.mxu0 0.0
  %1548 = vmatprep.subr.mxu0 0.0
  %1549 = vmatpush1.msra.mxu0 0.0
  %1550 = vmatprep.subr.mxu0 0.0
  %1551 = vmatpush1.msra.mxu0 0.0
  %1552 = vmatprep.subr.mxu0 0.0
  %1553 = vmatpush1.msra.mxu0 0.0
  %1554 = vmatprep.subr.mxu0 0.0
  %1555 = vmatpush1.msra.mxu0 0.0
  %1556 = vmatprep.subr.mxu0 0.0
  %1557 = vmatpush1.msra.mxu0 0.0
  %1558 = vmatprep.subr.mxu0 0.0
  %1559 = vmatpush1.msra.mxu0 0.0
  %1560 = vmatprep.subr.mxu0 0.0
  %1561 = vmatpush1.msra.mxu0 0.0
  %1562 = vmatprep.subr.mxu0 0.0
  %1563 = vmatpush1.msra.mxu0 0.0
  %1564 = vmatprep.subr.mxu0 0.0
  %1565 = vmatpush1.msra.mxu0 0.0
  %1566 = vmatprep.subr.mxu0 0.0
  %1567 = vmatpush1.msra.mxu0 0.0
  %1568 = vmatprep.subr.mxu0 0.0
  %1569 = vmatpush1.msra.mxu0 0.0
  %1570 = vmatprep.subr.mxu0 0.0
  %1571 = vmatpush1.msra.mxu0 0.0
  %1572 = vmatprep.subr.mxu0 0.0
  %1573 = vmatpush1.msra.mxu0 0.0
  %1574 = vmatprep.subr.mxu0 0.0
  %1575 = vmatpush1.msra.mxu0 0.0
  %1576 = vmatprep.subr.mxu0 0.0
  %1577 = vmatpush1.msra.mxu0 0.0
  %1578 = vmatprep.subr.mxu0 0.0
  %1579 = vmatpush1.msra.mxu0 0.0
  %1580 = vmatprep.subr.mxu0 0.0
  %1581 = vmatpush1.msra.mxu0 0.0
  %1582 = vmatprep.subr.mxu0 0.0
  %1583 = vmatpush1.msra.mxu0 0.0
  %1584 = vmatprep.subr.mxu0 0.0
  %1585 = vmatpush1.msra.mxu0 0.0
  %1586 = vmatprep.subr.mxu0 0.0
  %1587 = vmatpush1.msra.mxu0 0.0
  %1588 = vmatprep.subr.mxu0 0.0
  %1589 = vmatpush1.msra.mxu0 0.0
  %1590 = vmatprep.subr.mxu0 0.0
  %1591 = vmatpush1.msra.mxu0 0.0
  %1592 = vmatprep.subr.mxu0 0.0
  %1593 = vmatpush1.msra.mxu0 0.0
  %1594 = vmatprep.subr.mxu0 0.0
  %1595 = vmatpush1.msra.mxu0 0.0
  %1596 = vmatprep.subr.mxu0 0.0
  %1597 = vmatpush1.msra.mxu0 0.0
  %1598 = vmatprep.subr.mxu0 0.0
  %1599 = vmatpush1.msra.mxu0 0.0
  %1600 = vmatprep.subr.mxu0 0.0
  %1601 = vmatpush1.msra.mxu0 0.0
  %1602 = vmatprep.mubr.f32.mxu0 0.0
  %1603 = vmatmul.mubr.f32.gmra.mrb[0].mxu0 %v1536
  %v1604 = vpop.f32.mrb[0].mxu0
  %v1605 = vadd.f32 0.0, %v1604
  %v1606 = vpop.f32.mrb[0].mxu0
  %v1607 = vadd.f32 0.0, %v1606
  %1608 = vdwg.mxu0
  %v1609 = vadd.f32 %v1531, %v1605
  %v1610 = vadd.f32 %v1532, %v1607
  %v1611 = vxor.u32 %v1609, 2147483648
  %v1612 = vmul.f32 %v1611, 1.442695
  %v1613 = vpow.pop %v1612
  %v1614 = vadd.f32 %v1613, 1.0
  %v1615 = vrcp.pop %v1614
  %v1616 = vmul.f32 1.0, %v1615
  %v1617 = vtanh.pop %v1609
  %v1618 = vmul.f32 %v1616, %v1364
  %1620 = vrot.lane.b32.xlu0 %v1617, 32
  %v1621 = vpop.permute.xlu0 %1620
  %v1623 = vmul.f32 %v1616, %v1621
  %1625 = vrot.lane.b32.xlu0 %v1623, 32
  %v1626 = vpop.permute.xlu0 %1625
  %v1628 = vadd.f32 %v1618, %v1626
  %v1629 = vtanh.pop %v1628
  %1631 = vrot.lane.b32.xlu0 %v1610, 32
  %v1632 = vpop.permute.xlu0 %1631
  %v1634 = vadd.f32 %v1629, %v1632
  %1636 = vrot.lane.b32.xlu0 %v1634, 32
  %v1637 = vpop.permute.xlu0 %1636
  %v1639 = vmul.f32 %v1616, %v1637
  %1641 = vrot.lane.b32.xlu0 %v1639, 64
  %v1642 = vpop.permute.xlu0 %1641
  %s1644 = scalar_lea.vmem %s5, 10
  %1645 = vst.msk [vmem:[%s1644] sm:$0x3] %vm324, %v1642
  %s1646 = scalar_lea.vmem %s0, 12
  %v1647 = vld [vmem:[%s1646] sm:$0x3]
  %v1649 = vsel %vm60, %v1647, 0
  %1651 = vmatprep.subr.mxu0 %v28
  %1652 = vmatpush1.msra.mxu0 %v27
  %1653 = vmatprep.subr.mxu0 0.0
  %1654 = vmatpush1.msra.mxu0 0.0
  %1655 = vmatprep.subr.mxu0 0.0
  %1656 = vmatpush1.msra.mxu0 0.0
  %1657 = vmatprep.subr.mxu0 0.0
  %1658 = vmatpush1.msra.mxu0 0.0
  %1659 = vmatprep.subr.mxu0 0.0
  %1660 = vmatpush1.msra.mxu0 0.0
  %1661 = vmatprep.subr.mxu0 0.0
  %1662 = vmatpush1.msra.mxu0 0.0
  %1663 = vmatprep.subr.mxu0 0.0
  %1664 = vmatpush1.msra.mxu0 0.0
  %1665 = vmatprep.subr.mxu0 0.0
  %1666 = vmatpush1.msra.mxu0 0.0
  %1667 = vmatprep.subr.mxu0 0.0
  %1668 = vmatpush1.msra.mxu0 0.0
  %1669 = vmatprep.subr.mxu0 0.0
  %1670 = vmatpush1.msra.mxu0 0.0
  %1671 = vmatprep.subr.mxu0 0.0
  %1672 = vmatpush1.msra.mxu0 0.0
  %1673 = vmatprep.subr.mxu0 0.0
  %1674 = vmatpush1.msra.mxu0 0.0
  %1675 = vmatprep.subr.mxu0 0.0
  %1676 = vmatpush1.msra.mxu0 0.0
  %1677 = vmatprep.subr.mxu0 0.0
  %1678 = vmatpush1.msra.mxu0 0.0
  %1679 = vmatprep.subr.mxu0 0.0
  %1680 = vmatpush1.msra.mxu0 0.0
  %1681 = vmatprep.subr.mxu0 0.0
  %1682 = vmatpush1.msra.mxu0 0.0
  %1683 = vmatprep.subr.mxu0 0.0
  %1684 = vmatpush1.msra.mxu0 0.0
  %1685 = vmatprep.subr.mxu0 0.0
  %1686 = vmatpush1.msra.mxu0 0.0
  %1687 = vmatprep.subr.mxu0 0.0
  %1688 = vmatpush1.msra.mxu0 0.0
  %1689 = vmatprep.subr.mxu0 0.0
  %1690 = vmatpush1.msra.mxu0 0.0
  %1691 = vmatprep.subr.mxu0 0.0
  %1692 = vmatpush1.msra.mxu0 0.0
  %1693 = vmatprep.subr.mxu0 0.0
  %1694 = vmatpush1.msra.mxu0 0.0
  %1695 = vmatprep.subr.mxu0 0.0
  %1696 = vmatpush1.msra.mxu0 0.0
  %1697 = vmatprep.subr.mxu0 0.0
  %1698 = vmatpush1.msra.mxu0 0.0
  %1699 = vmatprep.subr.mxu0 0.0
  %1700 = vmatpush1.msra.mxu0 0.0
  %1701 = vmatprep.subr.mxu0 0.0
  %1702 = vmatpush1.msra.mxu0 0.0
  %1703 = vmatprep.subr.mxu0 0.0
  %1704 = vmatpush1.msra.mxu0 0.0
  %1705 = vmatprep.subr.mxu0 0.0
  %1706 = vmatpush1.msra.mxu0 0.0
  %1707 = vmatprep.subr.mxu0 0.0
  %1708 = vmatpush1.msra.mxu0 0.0
  %1709 = vmatprep.subr.mxu0 0.0
  %1710 = vmatpush1.msra.mxu0 0.0
  %1711 = vmatprep.subr.mxu0 0.0
  %1712 = vmatpush1.msra.mxu0 0.0
  %1713 = vmatprep.subr.mxu0 0.0
  %1714 = vmatpush1.msra.mxu0 0.0
  %1715 = vmatprep.mubr.f32.mxu0 0.0
  %1716 = vmatmul.mubr.f32.gmra.mrb[0].mxu0 %v1649
  %v1717 = vpop.f32.mrb[0].mxu0
  %v1718 = vadd.f32 %v53, %v1717
  %v1719 = vpop.f32.mrb[0].mxu0
  %v1720 = vadd.f32 %v57, %v1719
  %1721 = vdwg.mxu0
  %v1722 = vsel %vm135, %v1642, 0
  %1724 = vmatprep.subr.mxu0 %v30
  %1725 = vmatpush1.msra.mxu0 %v29
  %1726 = vmatprep.subr.mxu0 %v32
  %1727 = vmatpush1.msra.mxu0 %v31
  %1728 = vmatprep.subr.mxu0 %v34
  %1729 = vmatpush1.msra.mxu0 %v33
  %1730 = vmatprep.subr.mxu0 %v36
  %1731 = vmatpush1.msra.mxu0 %v35
  %1732 = vmatprep.subr.mxu0 0.0
  %1733 = vmatpush1.msra.mxu0 0.0
  %1734 = vmatprep.subr.mxu0 0.0
  %1735 = vmatpush1.msra.mxu0 0.0
  %1736 = vmatprep.subr.mxu0 0.0
  %1737 = vmatpush1.msra.mxu0 0.0
  %1738 = vmatprep.subr.mxu0 0.0
  %1739 = vmatpush1.msra.mxu0 0.0
  %1740 = vmatprep.subr.mxu0 0.0
  %1741 = vmatpush1.msra.mxu0 0.0
  %1742 = vmatprep.subr.mxu0 0.0
  %1743 = vmatpush1.msra.mxu0 0.0
  %1744 = vmatprep.subr.mxu0 0.0
  %1745 = vmatpush1.msra.mxu0 0.0
  %1746 = vmatprep.subr.mxu0 0.0
  %1747 = vmatpush1.msra.mxu0 0.0
  %1748 = vmatprep.subr.mxu0 0.0
  %1749 = vmatpush1.msra.mxu0 0.0
  %1750 = vmatprep.subr.mxu0 0.0
  %1751 = vmatpush1.msra.mxu0 0.0
  %1752 = vmatprep.subr.mxu0 0.0
  %1753 = vmatpush1.msra.mxu0 0.0
  %1754 = vmatprep.subr.mxu0 0.0
  %1755 = vmatpush1.msra.mxu0 0.0
  %1756 = vmatprep.subr.mxu0 0.0
  %1757 = vmatpush1.msra.mxu0 0.0
  %1758 = vmatprep.subr.mxu0 0.0
  %1759 = vmatpush1.msra.mxu0 0.0
  %1760 = vmatprep.subr.mxu0 0.0
  %1761 = vmatpush1.msra.mxu0 0.0
  %1762 = vmatprep.subr.mxu0 0.0
  %1763 = vmatpush1.msra.mxu0 0.0
  %1764 = vmatprep.subr.mxu0 0.0
  %1765 = vmatpush1.msra.mxu0 0.0
  %1766 = vmatprep.subr.mxu0 0.0
  %1767 = vmatpush1.msra.mxu0 0.0
  %1768 = vmatprep.subr.mxu0 0.0
  %1769 = vmatpush1.msra.mxu0 0.0
  %1770 = vmatprep.subr.mxu0 0.0
  %1771 = vmatpush1.msra.mxu0 0.0
  %1772 = vmatprep.subr.mxu0 0.0
  %1773 = vmatpush1.msra.mxu0 0.0
  %1774 = vmatprep.subr.mxu0 0.0
  %1775 = vmatpush1.msra.mxu0 0.0
  %1776 = vmatprep.subr.mxu0 0.0
  %1777 = vmatpush1.msra.mxu0 0.0
  %1778 = vmatprep.subr.mxu0 0.0
  %1779 = vmatpush1.msra.mxu0 0.0
  %1780 = vmatprep.subr.mxu0 0.0
  %1781 = vmatpush1.msra.mxu0 0.0
  %1782 = vmatprep.subr.mxu0 0.0
  %1783 = vmatpush1.msra.mxu0 0.0
  %1784 = vmatprep.subr.mxu0 0.0
  %1785 = vmatpush1.msra.mxu0 0.0
  %1786 = vmatprep.subr.mxu0 0.0
  %1787 = vmatpush1.msra.mxu0 0.0
  %1788 = vmatprep.mubr.f32.mxu0 0.0
  %1789 = vmatmul.mubr.f32.gmra.mrb[0].mxu0 %v1722
  %v1790 = vpop.f32.mrb[0].mxu0
  %v1791 = vadd.f32 0.0, %v1790
  %v1792 = vpop.f32.mrb[0].mxu0
  %v1793 = vadd.f32 0.0, %v1792
  %1794 = vdwg.mxu0
  %v1795 = vadd.f32 %v1718, %v1791
  %v1796 = vadd.f32 %v1720, %v1793
  %1798 = vrot.lane.b32.xlu0 %v1628, 96
  %v1799 = vpop.permute.xlu0 %1798
  %v1800 = vsel %vm135, %v1799, 0
  %1802 = vmatprep.subr.mxu0 %v38
  %1803 = vmatpush1.msra.mxu0 %v37
  %1804 = vmatprep.subr.mxu0 %v40
  %1805 = vmatpush1.msra.mxu0 %v39
  %1806 = vmatprep.subr.mxu0 %v42
  %1807 = vmatpush1.msra.mxu0 %v41
  %1808 = vmatprep.subr.mxu0 %v44
  %1809 = vmatpush1.msra.mxu0 %v43
  %1810 = vmatprep.subr.mxu0 0.0
  %1811 = vmatpush1.msra.mxu0 0.0
  %1812 = vmatprep.subr.mxu0 0.0
  %1813 = vmatpush1.msra.mxu0 0.0
  %1814 = vmatprep.subr.mxu0 0.0
  %1815 = vmatpush1.msra.mxu0 0.0
  %1816 = vmatprep.subr.mxu0 0.0
  %1817 = vmatpush1.msra.mxu0 0.0
  %1818 = vmatprep.subr.mxu0 0.0
  %1819 = vmatpush1.msra.mxu0 0.0
  %1820 = vmatprep.subr.mxu0 0.0
  %1821 = vmatpush1.msra.mxu0 0.0
  %1822 = vmatprep.subr.mxu0 0.0
  %1823 = vmatpush1.msra.mxu0 0.0
  %1824 = vmatprep.subr.mxu0 0.0
  %1825 = vmatpush1.msra.mxu0 0.0
  %1826 = vmatprep.subr.mxu0 0.0
  %1827 = vmatpush1.msra.mxu0 0.0
  %1828 = vmatprep.subr.mxu0 0.0
  %1829 = vmatpush1.msra.mxu0 0.0
  %1830 = vmatprep.subr.mxu0 0.0
  %1831 = vmatpush1.msra.mxu0 0.0
  %1832 = vmatprep.subr.mxu0 0.0
  %1833 = vmatpush1.msra.mxu0 0.0
  %1834 = vmatprep.subr.mxu0 0.0
  %1835 = vmatpush1.msra.mxu0 0.0
  %1836 = vmatprep.subr.mxu0 0.0
  %1837 = vmatpush1.msra.mxu0 0.0
  %1838 = vmatprep.subr.mxu0 0.0
  %1839 = vmatpush1.msra.mxu0 0.0
  %1840 = vmatprep.subr.mxu0 0.0
  %1841 = vmatpush1.msra.mxu0 0.0
  %1842 = vmatprep.subr.mxu0 0.0
  %1843 = vmatpush1.msra.mxu0 0.0
  %1844 = vmatprep.subr.mxu0 0.0
  %1845 = vmatpush1.msra.mxu0 0.0
  %1846 = vmatprep.subr.mxu0 0.0
  %1847 = vmatpush1.msra.mxu0 0.0
  %1848 = vmatprep.subr.mxu0 0.0
  %1849 = vmatpush1.msra.mxu0 0.0
  %1850 = vmatprep.subr.mxu0 0.0
  %1851 = vmatpush1.msra.mxu0 0.0
  %1852 = vmatprep.subr.mxu0 0.0
  %1853 = vmatpush1.msra.mxu0 0.0
  %1854 = vmatprep.subr.mxu0 0.0
  %1855 = vmatpush1.msra.mxu0 0.0
  %1856 = vmatprep.subr.mxu0 0.0
  %1857 = vmatpush1.msra.mxu0 0.0
  %1858 = vmatprep.subr.mxu0 0.0
  %1859 = vmatpush1.msra.mxu0 0.0
  %1860 = vmatprep.subr.mxu0 0.0
  %1861 = vmatpush1.msra.mxu0 0.0
  %1862 = vmatprep.subr.mxu0 0.0
  %1863 = vmatpush1.msra.mxu0 0.0
  %1864 = vmatprep.subr.mxu0 0.0
  %1865 = vmatpush1.msra.mxu0 0.0
  %1866 = vmatprep.mubr.f32.mxu0 0.0
  %1867 = vmatmul.mubr.f32.gmra.mrb[0].mxu0 %v1800
  %v1868 = vpop.f32.mrb[0].mxu0
  %v1869 = vadd.f32 0.0, %v1868
  %v1870 = vpop.f32.mrb[0].mxu0
  %v1871 = vadd.f32 0.0, %v1870
  %1872 = vdwg.mxu0
  %v1873 = vadd.f32 %v1795, %v1869
  %v1874 = vadd.f32 %v1796, %v1871
  %v1875 = vxor.u32 %v1873, 2147483648
  %v1876 = vmul.f32 %v1875, 1.442695
  %v1877 = vpow.pop %v1876
  %v1878 = vadd.f32 %v1877, 1.0
  %v1879 = vrcp.pop %v1878
  %v1880 = vmul.f32 1.0, %v1879
  %v1881 = vtanh.pop %v1873
  %v1882 = vmul.f32 %v1880, %v1628
  %1884 = vrot.lane.b32.xlu0 %v1881, 32
  %v1885 = vpop.permute.xlu0 %1884
  %v1887 = vmul.f32 %v1880, %v1885
  %1889 = vrot.lane.b32.xlu0 %v1887, 32
  %v1890 = vpop.permute.xlu0 %1889
  %v1892 = vadd.f32 %v1882, %v1890
  %v1893 = vtanh.pop %v1892
  %1895 = vrot.lane.b32.xlu0 %v1874, 32
  %v1896 = vpop.permute.xlu0 %1895
  %v1898 = vadd.f32 %v1893, %v1896
  %1900 = vrot.lane.b32.xlu0 %v1898, 32
  %v1901 = vpop.permute.xlu0 %1900
  %v1903 = vmul.f32 %v1880, %v1901
  %1905 = vrot.lane.b32.xlu0 %v1903, 64
  %v1906 = vpop.permute.xlu0 %1905
  %s1908 = scalar_lea.vmem %s5, 12
  %1909 = vst.msk [vmem:[%s1908] sm:$0x3] %vm324, %v1906
  %s1910 = scalar_lea.vmem %s0, 14
  %v1911 = vld [vmem:[%s1910] sm:$0x3]
  %v1913 = vsel %vm60, %v1911, 0
  %1915 = vmatprep.subr.mxu0 %v28
  %1916 = vmatpush1.msra.mxu0 %v27
  %1917 = vmatprep.subr.mxu0 0.0
  %1918 = vmatpush1.msra.mxu0 0.0
  %1919 = vmatprep.subr.mxu0 0.0
  %1920 = vmatpush1.msra.mxu0 0.0
  %1921 = vmatprep.subr.mxu0 0.0
  %1922 = vmatpush1.msra.mxu0 0.0
  %1923 = vmatprep.subr.mxu0 0.0
  %1924 = vmatpush1.msra.mxu0 0.0
  %1925 = vmatprep.subr.mxu0 0.0
  %1926 = vmatpush1.msra.mxu0 0.0
  %1927 = vmatprep.subr.mxu0 0.0
  %1928 = vmatpush1.msra.mxu0 0.0
  %1929 = vmatprep.subr.mxu0 0.0
  %1930 = vmatpush1.msra.mxu0 0.0
  %1931 = vmatprep.subr.mxu0 0.0
  %1932 = vmatpush1.msra.mxu0 0.0
  %1933 = vmatprep.subr.mxu0 0.0
  %1934 = vmatpush1.msra.mxu0 0.0
  %1935 = vmatprep.subr.mxu0 0.0
  %1936 = vmatpush1.msra.mxu0 0.0
  %1937 = vmatprep.subr.mxu0 0.0
  %1938 = vmatpush1.msra.mxu0 0.0
  %1939 = vmatprep.subr.mxu0 0.0
  %1940 = vmatpush1.msra.mxu0 0.0
  %1941 = vmatprep.subr.mxu0 0.0
  %1942 = vmatpush1.msra.mxu0 0.0
  %1943 = vmatprep.subr.mxu0 0.0
  %1944 = vmatpush1.msra.mxu0 0.0
  %1945 = vmatprep.subr.mxu0 0.0
  %1946 = vmatpush1.msra.mxu0 0.0
  %1947 = vmatprep.subr.mxu0 0.0
  %1948 = vmatpush1.msra.mxu0 0.0
  %1949 = vmatprep.subr.mxu0 0.0
  %1950 = vmatpush1.msra.mxu0 0.0
  %1951 = vmatprep.subr.mxu0 0.0
  %1952 = vmatpush1.msra.mxu0 0.0
  %1953 = vmatprep.subr.mxu0 0.0
  %1954 = vmatpush1.msra.mxu0 0.0
  %1955 = vmatprep.subr.mxu0 0.0
  %1956 = vmatpush1.msra.mxu0 0.0
  %1957 = vmatprep.subr.mxu0 0.0
  %1958 = vmatpush1.msra.mxu0 0.0
  %1959 = vmatprep.subr.mxu0 0.0
  %1960 = vmatpush1.msra.mxu0 0.0
  %1961 = vmatprep.subr.mxu0 0.0
  %1962 = vmatpush1.msra.mxu0 0.0
  %1963 = vmatprep.subr.mxu0 0.0
  %1964 = vmatpush1.msra.mxu0 0.0
  %1965 = vmatprep.subr.mxu0 0.0
  %1966 = vmatpush1.msra.mxu0 0.0
  %1967 = vmatprep.subr.mxu0 0.0
  %1968 = vmatpush1.msra.mxu0 0.0
  %1969 = vmatprep.subr.mxu0 0.0
  %1970 = vmatpush1.msra.mxu0 0.0
  %1971 = vmatprep.subr.mxu0 0.0
  %1972 = vmatpush1.msra.mxu0 0.0
  %1973 = vmatprep.subr.mxu0 0.0
  %1974 = vmatpush1.msra.mxu0 0.0
  %1975 = vmatprep.subr.mxu0 0.0
  %1976 = vmatpush1.msra.mxu0 0.0
  %1977 = vmatprep.subr.mxu0 0.0
  %1978 = vmatpush1.msra.mxu0 0.0
  %1979 = vmatprep.mubr.f32.mxu0 0.0
  %1980 = vmatmul.mubr.f32.gmra.mrb[0].mxu0 %v1913
  %v1981 = vpop.f32.mrb[0].mxu0
  %v1982 = vadd.f32 %v53, %v1981
  %v1983 = vpop.f32.mrb[0].mxu0
  %v1984 = vadd.f32 %v57, %v1983
  %1985 = vdwg.mxu0
  %v1986 = vsel %vm135, %v1906, 0
  %1988 = vmatprep.subr.mxu0 %v30
  %1989 = vmatpush1.msra.mxu0 %v29
  %1990 = vmatprep.subr.mxu0 %v32
  %1991 = vmatpush1.msra.mxu0 %v31
  %1992 = vmatprep.subr.mxu0 %v34
  %1993 = vmatpush1.msra.mxu0 %v33
  %1994 = vmatprep.subr.mxu0 %v36
  %1995 = vmatpush1.msra.mxu0 %v35
  %1996 = vmatprep.subr.mxu0 0.0
  %1997 = vmatpush1.msra.mxu0 0.0
  %1998 = vmatprep.subr.mxu0 0.0
  %1999 = vmatpush1.msra.mxu0 0.0
  %2000 = vmatprep.subr.mxu0 0.0
  %2001 = vmatpush1.msra.mxu0 0.0
  %2002 = vmatprep.subr.mxu0 0.0
  %2003 = vmatpush1.msra.mxu0 0.0
  %2004 = vmatprep.subr.mxu0 0.0
  %2005 = vmatpush1.msra.mxu0 0.0
  %2006 = vmatprep.subr.mxu0 0.0
  %2007 = vmatpush1.msra.mxu0 0.0
  %2008 = vmatprep.subr.mxu0 0.0
  %2009 = vmatpush1.msra.mxu0 0.0
  %2010 = vmatprep.subr.mxu0 0.0
  %2011 = vmatpush1.msra.mxu0 0.0
  %2012 = vmatprep.subr.mxu0 0.0
  %2013 = vmatpush1.msra.mxu0 0.0
  %2014 = vmatprep.subr.mxu0 0.0
  %2015 = vmatpush1.msra.mxu0 0.0
  %2016 = vmatprep.subr.mxu0 0.0
  %2017 = vmatpush1.msra.mxu0 0.0
  %2018 = vmatprep.subr.mxu0 0.0
  %2019 = vmatpush1.msra.mxu0 0.0
  %2020 = vmatprep.subr.mxu0 0.0
  %2021 = vmatpush1.msra.mxu0 0.0
  %2022 = vmatprep.subr.mxu0 0.0
  %2023 = vmatpush1.msra.mxu0 0.0
  %2024 = vmatprep.subr.mxu0 0.0
  %2025 = vmatpush1.msra.mxu0 0.0
  %2026 = vmatprep.subr.mxu0 0.0
  %2027 = vmatpush1.msra.mxu0 0.0
  %2028 = vmatprep.subr.mxu0 0.0
  %2029 = vmatpush1.msra.mxu0 0.0
  %2030 = vmatprep.subr.mxu0 0.0
  %2031 = vmatpush1.msra.mxu0 0.0
  %2032 = vmatprep.subr.mxu0 0.0
  %2033 = vmatpush1.msra.mxu0 0.0
  %2034 = vmatprep.subr.mxu0 0.0
  %2035 = vmatpush1.msra.mxu0 0.0
  %2036 = vmatprep.subr.mxu0 0.0
  %2037 = vmatpush1.msra.mxu0 0.0
  %2038 = vmatprep.subr.mxu0 0.0
  %2039 = vmatpush1.msra.mxu0 0.0
  %2040 = vmatprep.subr.mxu0 0.0
  %2041 = vmatpush1.msra.mxu0 0.0
  %2042 = vmatprep.subr.mxu0 0.0
  %2043 = vmatpush1.msra.mxu0 0.0
  %2044 = vmatprep.subr.mxu0 0.0
  %2045 = vmatpush1.msra.mxu0 0.0
  %2046 = vmatprep.subr.mxu0 0.0
  %2047 = vmatpush1.msra.mxu0 0.0
  %2048 = vmatprep.subr.mxu0 0.0
  %2049 = vmatpush1.msra.mxu0 0.0
  %2050 = vmatprep.subr.mxu0 0.0
  %2051 = vmatpush1.msra.mxu0 0.0
  %2052 = vmatprep.mubr.f32.mxu0 0.0
  %2053 = vmatmul.mubr.f32.gmra.mrb[0].mxu0 %v1986
  %v2054 = vpop.f32.mrb[0].mxu0
  %v2055 = vadd.f32 0.0, %v2054
  %v2056 = vpop.f32.mrb[0].mxu0
  %v2057 = vadd.f32 0.0, %v2056
  %2058 = vdwg.mxu0
  %v2059 = vadd.f32 %v1982, %v2055
  %v2060 = vadd.f32 %v1984, %v2057
  %2062 = vrot.lane.b32.xlu0 %v1892, 96
  %v2063 = vpop.permute.xlu0 %2062
  %v2064 = vsel %vm135, %v2063, 0
  %2066 = vmatprep.subr.mxu0 %v38
  %2067 = vmatpush1.msra.mxu0 %v37
  %2068 = vmatprep.subr.mxu0 %v40
  %2069 = vmatpush1.msra.mxu0 %v39
  %2070 = vmatprep.subr.mxu0 %v42
  %2071 = vmatpush1.msra.mxu0 %v41
  %2072 = vmatprep.subr.mxu0 %v44
  %2073 = vmatpush1.msra.mxu0 %v43
  %2074 = vmatprep.subr.mxu0 0.0
  %2075 = vmatpush1.msra.mxu0 0.0
  %2076 = vmatprep.subr.mxu0 0.0
  %2077 = vmatpush1.msra.mxu0 0.0
  %2078 = vmatprep.subr.mxu0 0.0
  %2079 = vmatpush1.msra.mxu0 0.0
  %2080 = vmatprep.subr.mxu0 0.0
  %2081 = vmatpush1.msra.mxu0 0.0
  %2082 = vmatprep.subr.mxu0 0.0
  %2083 = vmatpush1.msra.mxu0 0.0
  %2084 = vmatprep.subr.mxu0 0.0
  %2085 = vmatpush1.msra.mxu0 0.0
  %2086 = vmatprep.subr.mxu0 0.0
  %2087 = vmatpush1.msra.mxu0 0.0
  %2088 = vmatprep.subr.mxu0 0.0
  %2089 = vmatpush1.msra.mxu0 0.0
  %2090 = vmatprep.subr.mxu0 0.0
  %2091 = vmatpush1.msra.mxu0 0.0
  %2092 = vmatprep.subr.mxu0 0.0
  %2093 = vmatpush1.msra.mxu0 0.0
  %2094 = vmatprep.subr.mxu0 0.0
  %2095 = vmatpush1.msra.mxu0 0.0
  %2096 = vmatprep.subr.mxu0 0.0
  %2097 = vmatpush1.msra.mxu0 0.0
  %2098 = vmatprep.subr.mxu0 0.0
  %2099 = vmatpush1.msra.mxu0 0.0
  %2100 = vmatprep.subr.mxu0 0.0
  %2101 = vmatpush1.msra.mxu0 0.0
  %2102 = vmatprep.subr.mxu0 0.0
  %2103 = vmatpush1.msra.mxu0 0.0
  %2104 = vmatprep.subr.mxu0 0.0
  %2105 = vmatpush1.msra.mxu0 0.0
  %2106 = vmatprep.subr.mxu0 0.0
  %2107 = vmatpush1.msra.mxu0 0.0
  %2108 = vmatprep.subr.mxu0 0.0
  %2109 = vmatpush1.msra.mxu0 0.0
  %2110 = vmatprep.subr.mxu0 0.0
  %2111 = vmatpush1.msra.mxu0 0.0
  %2112 = vmatprep.subr.mxu0 0.0
  %2113 = vmatpush1.msra.mxu0 0.0
  %2114 = vmatprep.subr.mxu0 0.0
  %2115 = vmatpush1.msra.mxu0 0.0
  %2116 = vmatprep.subr.mxu0 0.0
  %2117 = vmatpush1.msra.mxu0 0.0
  %2118 = vmatprep.subr.mxu0 0.0
  %2119 = vmatpush1.msra.mxu0 0.0
  %2120 = vmatprep.subr.mxu0 0.0
  %2121 = vmatpush1.msra.mxu0 0.0
  %2122 = vmatprep.subr.mxu0 0.0
  %2123 = vmatpush1.msra.mxu0 0.0
  %2124 = vmatprep.subr.mxu0 0.0
  %2125 = vmatpush1.msra.mxu0 0.0
  %2126 = vmatprep.subr.mxu0 0.0
  %2127 = vmatpush1.msra.mxu0 0.0
  %2128 = vmatprep.subr.mxu0 0.0
  %2129 = vmatpush1.msra.mxu0 0.0
  %2130 = vmatprep.mubr.f32.mxu0 0.0
  %2131 = vmatmul.mubr.f32.gmra.mrb[0].mxu0 %v2064
  %v2132 = vpop.f32.mrb[0].mxu0
  %v2133 = vadd.f32 0.0, %v2132
  %v2134 = vpop.f32.mrb[0].mxu0
  %v2135 = vadd.f32 0.0, %v2134
  %2136 = vdwg.mxu0
  %v2137 = vadd.f32 %v2059, %v2133
  %v2138 = vadd.f32 %v2060, %v2135
  %v2139 = vxor.u32 %v2137, 2147483648
  %v2140 = vmul.f32 %v2139, 1.442695
  %v2141 = vpow.pop %v2140
  %v2142 = vadd.f32 %v2141, 1.0
  %v2143 = vrcp.pop %v2142
  %v2144 = vmul.f32 1.0, %v2143
  %v2145 = vtanh.pop %v2137
  %v2146 = vmul.f32 %v2144, %v1892
  %2148 = vrot.lane.b32.xlu0 %v2145, 32
  %v2149 = vpop.permute.xlu0 %2148
  %v2151 = vmul.f32 %v2144, %v2149
  %2153 = vrot.lane.b32.xlu0 %v2151, 32
  %v2154 = vpop.permute.xlu0 %2153
  %v2156 = vadd.f32 %v2146, %v2154
  %v2157 = vtanh.pop %v2156
  %2159 = vrot.lane.b32.xlu0 %v2138, 32
  %v2160 = vpop.permute.xlu0 %2159
  %v2162 = vadd.f32 %v2157, %v2160
  %2164 = vrot.lane.b32.xlu0 %v2162, 32
  %v2165 = vpop.permute.xlu0 %2164
  %v2167 = vmul.f32 %v2144, %v2165
  %2169 = vrot.lane.b32.xlu0 %v2167, 64
  %v2170 = vpop.permute.xlu0 %2169
  %s2172 = scalar_lea.vmem %s5, 14
  %2173 = vst.msk [vmem:[%s2172] sm:$0x3] %vm324, %v2170
  %2174 = vst.msk [vmem:[#allocation2] sm:$0x3] %vm324, %v2170
  %2176 = vrot.lane.b32.xlu0 %v2156, 96
  %v2177 = vpop.permute.xlu0 %2176
  %2179 = vst.msk [vmem:[#allocation3] sm:$0x3] %vm324, %v2177
  // Predicated region
  $region26: #{rnn_forward.3} parent=0 // pred_check
    _
  $region27: #{rnn_forward.3} parent=0 // pred_check_branch
    %2181 = sbr.rel (0) target = $region29
  $region28: #{rnn_forward.3} parent=0 // pred_region
    _
  $region29: #{rnn_forward.3} parent=0 // pred_fallthru
    _
  // Predicated region
  $region30: #{rnn_forward.3} parent=0 // pred_check
    _
  $region31: #{rnn_forward.3} parent=0 // pred_check_branch
    %2183 = sbr.rel (0) target = $region33
  $region32: #{rnn_forward.3} parent=0 // pred_region
    _
  $region33: #{rnn_forward.3} parent=0 // pred_fallthru
    _

</llo_original>
